<compile_context>
chip_gen: v6e
topology: v6e:2x2x1
jax: 0.10.0
libtpu: 0.0.40
codegen_flags: <defaults>
</compile_context>

<pallas_src>
import functools

import jax
import jax.numpy as jnp
from jax.experimental import pallas as pl
from jax.experimental.pallas import tpu as pltpu


# ----------------------------------------------------------------------------
# The single fused Pallas kernel: conv stack + linear stack + head.
# ----------------------------------------------------------------------------
def _convnet_fused_kernel(*refs, n_conv, n_linear):
    """refs = [x,
               (w0, w1, w2, w3, b) * n_conv,   # conv layers (k = stride = 2)
               (w, b) * n_linear,              # hidden Linear + ReLU layers
               (w, b),                         # final Linear head
               out]

    x rows are in phase-major order: for every conv layer the 4 contiguous
    quarters of the row dimension are the 4 patch offsets (kh, kw) of that
    layer, so a conv layer is   relu(sum_t x_quarter[t] @ W_t + b).
    """
    it = iter(refs)
    x_ref = next(it)
    x = None  # becomes a VMEM-resident value after the first layer

    for li in range(n_conv):
        w_t = [next(it) for _ in range(4)]            # 4 x (Cin, Cout)
        b_ref = next(it)                              # (1, Cout)
        rows = x_ref.shape[0] if li == 0 else x.shape[0]
        r4 = rows // 4                                # multiple of 8 by construction
        acc = None
        for t in range(4):
            if li == 0:
                xt = x_ref[t * r4:(t + 1) * r4, :]    # aligned ref slice load
            else:
                xt = x[t * r4:(t + 1) * r4, :]        # aligned value slice
            part = jnp.dot(xt, w_t[t][...], preferred_element_type=jnp.float32)
            acc = part if acc is None else acc + part
        x = jnp.maximum(acc + b_ref[...], 0.0)        # (rows/4, Cout)

    for _ in range(n_linear):
        w_ref = next(it)
        b_ref = next(it)
        x = jnp.maximum(
            jnp.dot(x, w_ref[...], preferred_element_type=jnp.float32)
            + b_ref[...], 0.0)

    w_ref = next(it)
    b_ref = next(it)
    x = jnp.dot(x, w_ref[...], preferred_element_type=jnp.float32) + b_ref[...]

    out_ref = next(it)
    out_ref[...] = x.astype(out_ref.dtype)            # single store of the tiny result


# ----------------------------------------------------------------------------
# Host-side layout glue (pure layout, done once on the input).
# ----------------------------------------------------------------------------
def _phase_major_rows(x_nchw, n_levels):
    """(N, C, H, W) -> (H*W*N, C).  Rows are ordered so that, for every 2x2 /
    stride-2 conv level, the 4 patch offsets of that level are the 4 contiguous
    quarters of the row dimension (finest level first); the batch index varies
    fastest so the final conv output rows are exactly the images."""
    n, c, h, w = x_nchw.shape
    assert h == w == 2 ** n_levels
    xb = x_nchw.reshape((n, c) + (2,) * n_levels + (2,) * n_levels)
    perm = []
    for lev in range(n_levels - 1, -1, -1):           # finest spatial bits first
        perm += [2 + lev, 2 + n_levels + lev]
    perm += [0, 1]                                    # batch fastest, channels last
    return jnp.transpose(xb, tuple(perm)).reshape(h * w * n, c)


def convnet_forward(x_nchw, params, *, k, stride):
    """Forward pass of Convnet; returns (batch + num_classes, d)."""
    # TODO(synk): only kernel_size == stride == 2, padding == 0 and
    # final_conv_out_size == 1 (the configuration below) is lowered; other
    # configs need a different in-kernel patch-extraction scheme.
    assert k == 2 and stride == 2
    n_conv = len(params["convs"])
    batch, cin, h, w = x_nchw.shape
    assert h == w == 2 ** n_conv

    # Pad the batch to a multiple of 8 so every in-kernel row block is
    # 8-sublane aligned; padded rows are discarded after the kernel.
    n_pad = max(8, -(-batch // 8) * 8)
    xp = jnp.zeros((n_pad, cin, h, w), jnp.float32).at[:batch].set(
        x_nchw.astype(jnp.float32))
    x_rows = _phase_major_rows(xp, n_conv)            # (H*W*n_pad, Cin)

    # Kernel inputs: conv weights pre-split per patch offset (host-side slicing
    # of the (k*k*Cin, Cout) matrix into 4 aligned (Cin, Cout) blocks).
    inputs = [x_rows]
    for (wconv, bconv) in params["convs"]:
        c_in = wconv.shape[0] // 4
        for t in range(4):
            inputs.append(wconv[t * c_in:(t + 1) * c_in, :])
        inputs.append(bconv.reshape(1, -1))
    for (wl, bl) in params["linears"]:
        inputs += [wl, bl.reshape(1, -1)]
    w_head, b_head = params["head"]
    inputs += [w_head, b_head.reshape(1, -1)]
    d = w_head.shape[1]

    # Advisory cost estimate: GEMM flops + one HBM pass over inputs/output.
    rows = x_rows.shape[0]
    flops = 0
    for (wconv, _) in params["convs"]:
        rows //= 4
        flops += 2 * rows * wconv.shape[0] * wconv.shape[1]
    for (wl, _) in params["linears"]:
        flops += 2 * n_pad * wl.shape[0] * wl.shape[1]
    flops += 2 * n_pad * w_head.shape[0] * w_head.shape[1]
    bytes_accessed = sum(int(a.size) * 4 for a in inputs) + n_pad * d * 4

    def full_spec(a):
        assert a.ndim == 2
        return pl.BlockSpec(a.shape, lambda i: (0, 0))

    kernel = functools.partial(_convnet_fused_kernel,
                               n_conv=n_conv,
                               n_linear=len(params["linears"]))
    y = pl.pallas_call(
        kernel,
        out_shape=jax.ShapeDtypeStruct((n_pad, d), jnp.float32),
        grid=(1,),
        in_specs=[full_spec(a) for a in inputs],
        out_specs=pl.BlockSpec((n_pad, d), lambda i: (0, 0)),
        compiler_params=pltpu.CompilerParams(
            dimension_semantics=("arbitrary",)),
        cost_estimate=pl.CostEstimate(flops=int(flops), transcendentals=0,
                                      bytes_accessed=int(bytes_accessed)),
    )(*inputs)

    emb_x = y[:batch]                                 # drop the batch padding
    # self.embeddings(range(num_classes)) == full embedding table; final
    # torch.cat is a pure copy, done on the host.
    return jnp.concatenate([emb_x, params["embeddings"]], axis=0)


# ----------------------------------------------------------------------------
# Plain-JAX reference (original NCHW / im2col lowering) for a sanity check.
# ----------------------------------------------------------------------------
def convnet_reference(x_nchw, params, *, k, stride):
    x = jnp.transpose(x_nchw, (0, 2, 3, 1)).astype(jnp.float32)
    for (wconv, bconv) in params["convs"]:
        n, h, w, c = x.shape
        oh = (h - k) // stride + 1
        ow = (w - k) // stride + 1
        cols = []
        for i in range(k):
            for j in range(k):
                cols.append(x[:, i:i + stride * oh:stride,
                              j:j + stride * ow:stride, :])
        p = jnp.stack(cols, axis=3).reshape(n * oh * ow, k * k * c)
        x = jnp.maximum(jnp.dot(p, wconv) + bconv, 0.0)
        x = x.reshape(n, oh, ow, wconv.shape[1])
    n, h, w, c = x.shape
    x = jnp.transpose(x, (0, 3, 1, 2)).reshape(n, c * h * w)   # nn.Flatten (NCHW)
    for (wl, bl) in params["linears"]:
        x = jnp.maximum(jnp.dot(x, wl) + bl, 0.0)
    w_head, b_head = params["head"]
    x = jnp.dot(x, w_head) + b_head
    return jnp.concatenate([x, params["embeddings"]], axis=0)


# ----------------------------------------------------------------------------
# Deterministic parameter construction.
# ----------------------------------------------------------------------------
def make_params(key, *, in_channels, channels, k, linear_first_in,
                num_linear, linear_size, d, num_classes):
    keys = jax.random.split(key, 32)
    ki = iter(range(32))
    params = {"convs": [], "linears": []}

    cin = in_channels
    for cout in channels:
        w = jax.random.normal(keys[next(ki)], (k * k * cin, cout), jnp.float32) * 0.3
        b = jax.random.normal(keys[next(ki)], (cout,), jnp.float32) * 0.05
        params["convs"].append((w, b))
        cin = cout

    lin_in = linear_first_in
    for _ in range(num_linear):
        w = jax.random.normal(keys[next(ki)], (lin_in, linear_size), jnp.float32) * 0.3
        b = jax.random.normal(keys[next(ki)], (linear_size,), jnp.float32) * 0.05
        params["linears"].append((w, b))
        lin_in = linear_size

    w = jax.random.normal(keys[next(ki)], (lin_in, d), jnp.float32) * 0.3
    b = jax.random.normal(keys[next(ki)], (d,), jnp.float32) * 0.05
    params["head"] = (w, b)

    params["embeddings"] = jax.random.normal(keys[next(ki)], (num_classes, d),
                                             jnp.float32)
    return params


if __name__ == "__main__":
    batch = 2
    in_dimensions = 4          # input channels
    img_size = 16
    out_channels = [8, 8, 8, 8]
    kernel_size = 2
    stride = 2
    padding = 0
    linear_layers = 2
    linear_layers_size = 32
    embedding_out_size = 16    # d
    num_of_classes = 5

    # conv_final_out_size: floor((s - k)/stride)+1 applied 4x: 16->8->4->2->1
    s = img_size
    for _ in out_channels:
        s = (s - kernel_size) // stride + 1
    final_conv_out_size = s
    assert final_conv_out_size == 1        # AdaptiveAvgPool2d is an identity here
    linear_first_in = final_conv_out_size * final_conv_out_size * out_channels[-1]

    key = jax.random.PRNGKey(0)
    kx, kp = jax.random.split(key)
    x = jax.random.normal(kx, (batch, in_dimensions, img_size, img_size),
                          jnp.float32)

    params = make_params(
        kp,
        in_channels=in_dimensions,
        channels=out_channels,
        k=kernel_size,
        linear_first_in=linear_first_in,
        num_linear=linear_layers,
        linear_size=linear_layers_size,
        d=embedding_out_size,
        num_classes=num_of_classes,
    )

    fwd = jax.jit(functools.partial(convnet_forward, k=kernel_size, stride=stride))
    out = jax.block_until_ready(fwd(x, params))

    assert out.shape == (batch + num_of_classes, embedding_out_size), out.shape
    assert out.dtype == jnp.float32

    ref = jax.block_until_ready(
        convnet_reference(x, params, k=kernel_size, stride=stride))
    max_err = float(jnp.max(jnp.abs(out - ref)))
    assert max_err < 1e-1, f"kernel/reference mismatch, max abs err = {max_err}"

    print("KERNEL_OK")
</pallas_src>

<mosaic_0001>
module attributes {stable_mosaic.version = 11 : i64} {
  func.func @_convnet_fused_kernel(%arg0: i32, %arg1: memref<2048x4xf32, #tpu.memory_space<vmem>>, %arg2: memref<4x8xf32, #tpu.memory_space<vmem>>, %arg3: memref<4x8xf32, #tpu.memory_space<vmem>>, %arg4: memref<4x8xf32, #tpu.memory_space<vmem>>, %arg5: memref<4x8xf32, #tpu.memory_space<vmem>>, %arg6: memref<1x8xf32, #tpu.memory_space<vmem>>, %arg7: memref<8x8xf32, #tpu.memory_space<vmem>>, %arg8: memref<8x8xf32, #tpu.memory_space<vmem>>, %arg9: memref<8x8xf32, #tpu.memory_space<vmem>>, %arg10: memref<8x8xf32, #tpu.memory_space<vmem>>, %arg11: memref<1x8xf32, #tpu.memory_space<vmem>>, %arg12: memref<8x8xf32, #tpu.memory_space<vmem>>, %arg13: memref<8x8xf32, #tpu.memory_space<vmem>>, %arg14: memref<8x8xf32, #tpu.memory_space<vmem>>, %arg15: memref<8x8xf32, #tpu.memory_space<vmem>>, %arg16: memref<1x8xf32, #tpu.memory_space<vmem>>, %arg17: memref<8x8xf32, #tpu.memory_space<vmem>>, %arg18: memref<8x8xf32, #tpu.memory_space<vmem>>, %arg19: memref<8x8xf32, #tpu.memory_space<vmem>>, %arg20: memref<8x8xf32, #tpu.memory_space<vmem>>, %arg21: memref<1x8xf32, #tpu.memory_space<vmem>>, %arg22: memref<8x32xf32, #tpu.memory_space<vmem>>, %arg23: memref<1x32xf32, #tpu.memory_space<vmem>>, %arg24: memref<32x32xf32, #tpu.memory_space<vmem>>, %arg25: memref<1x32xf32, #tpu.memory_space<vmem>>, %arg26: memref<32x16xf32, #tpu.memory_space<vmem>>, %arg27: memref<1x16xf32, #tpu.memory_space<vmem>>, %arg28: memref<8x16xf32, #tpu.memory_space<vmem>>) attributes {dimension_semantics = [#tpu.dimension_semantics<arbitrary>], iteration_bounds = array<i64: 1>, scalar_prefetch = 0 : i64, scratch_operands = 0 : i64, tpu.core_type = #tpu.core_type<tc>, window_params = [{pipeline_mode = #tpu.pipeline_mode<synchronous>, transform_indices = @transform_0, window_bounds = array<i64: 2048, 4>}, {pipeline_mode = #tpu.pipeline_mode<synchronous>, transform_indices = @transform_1, window_bounds = array<i64: 4, 8>}, {pipeline_mode = #tpu.pipeline_mode<synchronous>, transform_indices = @transform_2, window_bounds = array<i64: 4, 8>}, {pipeline_mode = #tpu.pipeline_mode<synchronous>, transform_indices = @transform_3, window_bounds = array<i64: 4, 8>}, {pipeline_mode = #tpu.pipeline_mode<synchronous>, transform_indices = @transform_4, window_bounds = array<i64: 4, 8>}, {pipeline_mode = #tpu.pipeline_mode<synchronous>, transform_indices = @transform_5, window_bounds = array<i64: 1, 8>}, {pipeline_mode = #tpu.pipeline_mode<synchronous>, transform_indices = @transform_6, window_bounds = array<i64: 8, 8>}, {pipeline_mode = #tpu.pipeline_mode<synchronous>, transform_indices = @transform_7, window_bounds = array<i64: 8, 8>}, {pipeline_mode = #tpu.pipeline_mode<synchronous>, transform_indices = @transform_8, window_bounds = array<i64: 8, 8>}, {pipeline_mode = #tpu.pipeline_mode<synchronous>, transform_indices = @transform_9, window_bounds = array<i64: 8, 8>}, {pipeline_mode = #tpu.pipeline_mode<synchronous>, transform_indices = @transform_10, window_bounds = array<i64: 1, 8>}, {pipeline_mode = #tpu.pipeline_mode<synchronous>, transform_indices = @transform_11, window_bounds = array<i64: 8, 8>}, {pipeline_mode = #tpu.pipeline_mode<synchronous>, transform_indices = @transform_12, window_bounds = array<i64: 8, 8>}, {pipeline_mode = #tpu.pipeline_mode<synchronous>, transform_indices = @transform_13, window_bounds = array<i64: 8, 8>}, {pipeline_mode = #tpu.pipeline_mode<synchronous>, transform_indices = @transform_14, window_bounds = array<i64: 8, 8>}, {pipeline_mode = #tpu.pipeline_mode<synchronous>, transform_indices = @transform_15, window_bounds = array<i64: 1, 8>}, {pipeline_mode = #tpu.pipeline_mode<synchronous>, transform_indices = @transform_16, window_bounds = array<i64: 8, 8>}, {pipeline_mode = #tpu.pipeline_mode<synchronous>, transform_indices = @transform_17, window_bounds = array<i64: 8, 8>}, {pipeline_mode = #tpu.pipeline_mode<synchronous>, transform_indices = @transform_18, window_bounds = array<i64: 8, 8>}, {pipeline_mode = #tpu.pipeline_mode<synchronous>, transform_indices = @transform_19, window_bounds = array<i64: 8, 8>}, {pipeline_mode = #tpu.pipeline_mode<synchronous>, transform_indices = @transform_20, window_bounds = array<i64: 1, 8>}, {pipeline_mode = #tpu.pipeline_mode<synchronous>, transform_indices = @transform_21, window_bounds = array<i64: 8, 32>}, {pipeline_mode = #tpu.pipeline_mode<synchronous>, transform_indices = @transform_22, window_bounds = array<i64: 1, 32>}, {pipeline_mode = #tpu.pipeline_mode<synchronous>, transform_indices = @transform_23, window_bounds = array<i64: 32, 32>}, {pipeline_mode = #tpu.pipeline_mode<synchronous>, transform_indices = @transform_24, window_bounds = array<i64: 1, 32>}, {pipeline_mode = #tpu.pipeline_mode<synchronous>, transform_indices = @transform_25, window_bounds = array<i64: 32, 16>}, {pipeline_mode = #tpu.pipeline_mode<synchronous>, transform_indices = @transform_26, window_bounds = array<i64: 1, 16>}, {pipeline_mode = #tpu.pipeline_mode<synchronous>, transform_indices = @transform_27, window_bounds = array<i64: 8, 16>}]} {
    %c0 = arith.constant 0 : index
    %c0_0 = arith.constant 0 : index
    %0 = vector.load %arg1[%c0, %c0_0] : memref<2048x4xf32, #tpu.memory_space<vmem>>, vector<512x4xf32>
    %c0_1 = arith.constant 0 : index
    %c0_2 = arith.constant 0 : index
    %1 = vector.load %arg2[%c0_1, %c0_2] : memref<4x8xf32, #tpu.memory_space<vmem>>, vector<4x8xf32>
    %cst = arith.constant dense<0.000000e+00> : vector<512x8xf32>
    %2 = tpu.matmul %0, %1, %cst {dimension_numbers = #tpu.dot_dimension_numbers<[1], [0], [0], [1], [0, 0, 1, 1], [], []>} : vector<512x4xf32>, vector<4x8xf32>, vector<512x8xf32> -> vector<512x8xf32>
    %c512 = arith.constant 512 : index
    %c0_3 = arith.constant 0 : index
    %3 = vector.load %arg1[%c512, %c0_3] : memref<2048x4xf32, #tpu.memory_space<vmem>>, vector<512x4xf32>
    %c0_4 = arith.constant 0 : index
    %c0_5 = arith.constant 0 : index
    %4 = vector.load %arg3[%c0_4, %c0_5] : memref<4x8xf32, #tpu.memory_space<vmem>>, vector<4x8xf32>
    %cst_6 = arith.constant dense<0.000000e+00> : vector<512x8xf32>
    %5 = tpu.matmul %3, %4, %cst_6 {dimension_numbers = #tpu.dot_dimension_numbers<[1], [0], [0], [1], [0, 0, 1, 1], [], []>} : vector<512x4xf32>, vector<4x8xf32>, vector<512x8xf32> -> vector<512x8xf32>
    %6 = arith.addf %2, %5 : vector<512x8xf32>
    %c1024 = arith.constant 1024 : index
    %c0_7 = arith.constant 0 : index
    %7 = vector.load %arg1[%c1024, %c0_7] : memref<2048x4xf32, #tpu.memory_space<vmem>>, vector<512x4xf32>
    %c0_8 = arith.constant 0 : index
    %c0_9 = arith.constant 0 : index
    %8 = vector.load %arg4[%c0_8, %c0_9] : memref<4x8xf32, #tpu.memory_space<vmem>>, vector<4x8xf32>
    %cst_10 = arith.constant dense<0.000000e+00> : vector<512x8xf32>
    %9 = tpu.matmul %7, %8, %cst_10 {dimension_numbers = #tpu.dot_dimension_numbers<[1], [0], [0], [1], [0, 0, 1, 1], [], []>} : vector<512x4xf32>, vector<4x8xf32>, vector<512x8xf32> -> vector<512x8xf32>
    %10 = arith.addf %6, %9 : vector<512x8xf32>
    %c1536 = arith.constant 1536 : index
    %c0_11 = arith.constant 0 : index
    %11 = vector.load %arg1[%c1536, %c0_11] : memref<2048x4xf32, #tpu.memory_space<vmem>>, vector<512x4xf32>
    %c0_12 = arith.constant 0 : index
    %c0_13 = arith.constant 0 : index
    %12 = vector.load %arg5[%c0_12, %c0_13] : memref<4x8xf32, #tpu.memory_space<vmem>>, vector<4x8xf32>
    %cst_14 = arith.constant dense<0.000000e+00> : vector<512x8xf32>
    %13 = tpu.matmul %11, %12, %cst_14 {dimension_numbers = #tpu.dot_dimension_numbers<[1], [0], [0], [1], [0, 0, 1, 1], [], []>} : vector<512x4xf32>, vector<4x8xf32>, vector<512x8xf32> -> vector<512x8xf32>
    %14 = arith.addf %10, %13 : vector<512x8xf32>
    %c0_15 = arith.constant 0 : index
    %c0_16 = arith.constant 0 : index
    %15 = vector.load %arg6[%c0_15, %c0_16] : memref<1x8xf32, #tpu.memory_space<vmem>>, vector<1x8xf32>
    %16 = vector.broadcast %15 : vector<1x8xf32> to vector<512x8xf32>
    %17 = arith.addf %14, %16 : vector<512x8xf32>
    %cst_17 = arith.constant 0.000000e+00 : f32
    %18 = vector.broadcast %cst_17 : f32 to vector<512x8xf32>
    %19 = arith.maximumf %17, %18 : vector<512x8xf32>
    %20 = vector.extract_strided_slice %19 {offsets = [0, 0], sizes = [128, 8], strides = [1, 1]} : vector<512x8xf32> to vector<128x8xf32>
    %c0_18 = arith.constant 0 : index
    %c0_19 = arith.constant 0 : index
    %21 = vector.load %arg7[%c0_18, %c0_19] : memref<8x8xf32, #tpu.memory_space<vmem>>, vector<8x8xf32>
    %cst_20 = arith.constant dense<0.000000e+00> : vector<128x8xf32>
    %22 = tpu.matmul %20, %21, %cst_20 {dimension_numbers = #tpu.dot_dimension_numbers<[1], [0], [0], [1], [0, 0, 1, 1], [], []>} : vector<128x8xf32>, vector<8x8xf32>, vector<128x8xf32> -> vector<128x8xf32>
    %23 = vector.extract_strided_slice %19 {offsets = [128, 0], sizes = [128, 8], strides = [1, 1]} : vector<512x8xf32> to vector<128x8xf32>
    %c0_21 = arith.constant 0 : index
    %c0_22 = arith.constant 0 : index
    %24 = vector.load %arg8[%c0_21, %c0_22] : memref<8x8xf32, #tpu.memory_space<vmem>>, vector<8x8xf32>
    %cst_23 = arith.constant dense<0.000000e+00> : vector<128x8xf32>
    %25 = tpu.matmul %23, %24, %cst_23 {dimension_numbers = #tpu.dot_dimension_numbers<[1], [0], [0], [1], [0, 0, 1, 1], [], []>} : vector<128x8xf32>, vector<8x8xf32>, vector<128x8xf32> -> vector<128x8xf32>
    %26 = arith.addf %22, %25 : vector<128x8xf32>
    %27 = vector.extract_strided_slice %19 {offsets = [256, 0], sizes = [128, 8], strides = [1, 1]} : vector<512x8xf32> to vector<128x8xf32>
    %c0_24 = arith.constant 0 : index
    %c0_25 = arith.constant 0 : index
    %28 = vector.load %arg9[%c0_24, %c0_25] : memref<8x8xf32, #tpu.memory_space<vmem>>, vector<8x8xf32>
    %cst_26 = arith.constant dense<0.000000e+00> : vector<128x8xf32>
    %29 = tpu.matmul %27, %28, %cst_26 {dimension_numbers = #tpu.dot_dimension_numbers<[1], [0], [0], [1], [0, 0, 1, 1], [], []>} : vector<128x8xf32>, vector<8x8xf32>, vector<128x8xf32> -> vector<128x8xf32>
    %30 = arith.addf %26, %29 : vector<128x8xf32>
    %31 = vector.extract_strided_slice %19 {offsets = [384, 0], sizes = [128, 8], strides = [1, 1]} : vector<512x8xf32> to vector<128x8xf32>
    %c0_27 = arith.constant 0 : index
    %c0_28 = arith.constant 0 : index
    %32 = vector.load %arg10[%c0_27, %c0_28] : memref<8x8xf32, #tpu.memory_space<vmem>>, vector<8x8xf32>
    %cst_29 = arith.constant dense<0.000000e+00> : vector<128x8xf32>
    %33 = tpu.matmul %31, %32, %cst_29 {dimension_numbers = #tpu.dot_dimension_numbers<[1], [0], [0], [1], [0, 0, 1, 1], [], []>} : vector<128x8xf32>, vector<8x8xf32>, vector<128x8xf32> -> vector<128x8xf32>
    %34 = arith.addf %30, %33 : vector<128x8xf32>
    %c0_30 = arith.constant 0 : index
    %c0_31 = arith.constant 0 : index
    %35 = vector.load %arg11[%c0_30, %c0_31] : memref<1x8xf32, #tpu.memory_space<vmem>>, vector<1x8xf32>
    %36 = vector.broadcast %35 : vector<1x8xf32> to vector<128x8xf32>
    %37 = arith.addf %34, %36 : vector<128x8xf32>
    %cst_32 = arith.constant 0.000000e+00 : f32
    %38 = vector.broadcast %cst_32 : f32 to vector<128x8xf32>
    %39 = arith.maximumf %37, %38 : vector<128x8xf32>
    %40 = vector.extract_strided_slice %39 {offsets = [0, 0], sizes = [32, 8], strides = [1, 1]} : vector<128x8xf32> to vector<32x8xf32>
    %c0_33 = arith.constant 0 : index
    %c0_34 = arith.constant 0 : index
    %41 = vector.load %arg12[%c0_33, %c0_34] : memref<8x8xf32, #tpu.memory_space<vmem>>, vector<8x8xf32>
    %cst_35 = arith.constant dense<0.000000e+00> : vector<32x8xf32>
    %42 = tpu.matmul %40, %41, %cst_35 {dimension_numbers = #tpu.dot_dimension_numbers<[1], [0], [0], [1], [0, 0, 1, 1], [], []>} : vector<32x8xf32>, vector<8x8xf32>, vector<32x8xf32> -> vector<32x8xf32>
    %43 = vector.extract_strided_slice %39 {offsets = [32, 0], sizes = [32, 8], strides = [1, 1]} : vector<128x8xf32> to vector<32x8xf32>
    %c0_36 = arith.constant 0 : index
    %c0_37 = arith.constant 0 : index
    %44 = vector.load %arg13[%c0_36, %c0_37] : memref<8x8xf32, #tpu.memory_space<vmem>>, vector<8x8xf32>
    %cst_38 = arith.constant dense<0.000000e+00> : vector<32x8xf32>
    %45 = tpu.matmul %43, %44, %cst_38 {dimension_numbers = #tpu.dot_dimension_numbers<[1], [0], [0], [1], [0, 0, 1, 1], [], []>} : vector<32x8xf32>, vector<8x8xf32>, vector<32x8xf32> -> vector<32x8xf32>
    %46 = arith.addf %42, %45 : vector<32x8xf32>
    %47 = vector.extract_strided_slice %39 {offsets = [64, 0], sizes = [32, 8], strides = [1, 1]} : vector<128x8xf32> to vector<32x8xf32>
    %c0_39 = arith.constant 0 : index
    %c0_40 = arith.constant 0 : index
    %48 = vector.load %arg14[%c0_39, %c0_40] : memref<8x8xf32, #tpu.memory_space<vmem>>, vector<8x8xf32>
    %cst_41 = arith.constant dense<0.000000e+00> : vector<32x8xf32>
    %49 = tpu.matmul %47, %48, %cst_41 {dimension_numbers = #tpu.dot_dimension_numbers<[1], [0], [0], [1], [0, 0, 1, 1], [], []>} : vector<32x8xf32>, vector<8x8xf32>, vector<32x8xf32> -> vector<32x8xf32>
    %50 = arith.addf %46, %49 : vector<32x8xf32>
    %51 = vector.extract_strided_slice %39 {offsets = [96, 0], sizes = [32, 8], strides = [1, 1]} : vector<128x8xf32> to vector<32x8xf32>
    %c0_42 = arith.constant 0 : index
    %c0_43 = arith.constant 0 : index
    %52 = vector.load %arg15[%c0_42, %c0_43] : memref<8x8xf32, #tpu.memory_space<vmem>>, vector<8x8xf32>
    %cst_44 = arith.constant dense<0.000000e+00> : vector<32x8xf32>
    %53 = tpu.matmul %51, %52, %cst_44 {dimension_numbers = #tpu.dot_dimension_numbers<[1], [0], [0], [1], [0, 0, 1, 1], [], []>} : vector<32x8xf32>, vector<8x8xf32>, vector<32x8xf32> -> vector<32x8xf32>
    %54 = arith.addf %50, %53 : vector<32x8xf32>
    %c0_45 = arith.constant 0 : index
    %c0_46 = arith.constant 0 : index
    %55 = vector.load %arg16[%c0_45, %c0_46] : memref<1x8xf32, #tpu.memory_space<vmem>>, vector<1x8xf32>
    %56 = vector.broadcast %55 : vector<1x8xf32> to vector<32x8xf32>
    %57 = arith.addf %54, %56 : vector<32x8xf32>
    %cst_47 = arith.constant 0.000000e+00 : f32
    %58 = vector.broadcast %cst_47 : f32 to vector<32x8xf32>
    %59 = arith.maximumf %57, %58 : vector<32x8xf32>
    %60 = vector.extract_strided_slice %59 {offsets = [0, 0], sizes = [8, 8], strides = [1, 1]} : vector<32x8xf32> to vector<8x8xf32>
    %c0_48 = arith.constant 0 : index
    %c0_49 = arith.constant 0 : index
    %61 = vector.load %arg17[%c0_48, %c0_49] : memref<8x8xf32, #tpu.memory_space<vmem>>, vector<8x8xf32>
    %cst_50 = arith.constant dense<0.000000e+00> : vector<8x8xf32>
    %62 = tpu.matmul %60, %61, %cst_50 {dimension_numbers = #tpu.dot_dimension_numbers<[1], [0], [0], [1], [0, 0, 1, 1], [], []>} : vector<8x8xf32>, vector<8x8xf32>, vector<8x8xf32> -> vector<8x8xf32>
    %63 = vector.extract_strided_slice %59 {offsets = [8, 0], sizes = [8, 8], strides = [1, 1]} : vector<32x8xf32> to vector<8x8xf32>
    %c0_51 = arith.constant 0 : index
    %c0_52 = arith.constant 0 : index
    %64 = vector.load %arg18[%c0_51, %c0_52] : memref<8x8xf32, #tpu.memory_space<vmem>>, vector<8x8xf32>
    %cst_53 = arith.constant dense<0.000000e+00> : vector<8x8xf32>
    %65 = tpu.matmul %63, %64, %cst_53 {dimension_numbers = #tpu.dot_dimension_numbers<[1], [0], [0], [1], [0, 0, 1, 1], [], []>} : vector<8x8xf32>, vector<8x8xf32>, vector<8x8xf32> -> vector<8x8xf32>
    %66 = arith.addf %62, %65 : vector<8x8xf32>
    %67 = vector.extract_strided_slice %59 {offsets = [16, 0], sizes = [8, 8], strides = [1, 1]} : vector<32x8xf32> to vector<8x8xf32>
    %c0_54 = arith.constant 0 : index
    %c0_55 = arith.constant 0 : index
    %68 = vector.load %arg19[%c0_54, %c0_55] : memref<8x8xf32, #tpu.memory_space<vmem>>, vector<8x8xf32>
    %cst_56 = arith.constant dense<0.000000e+00> : vector<8x8xf32>
    %69 = tpu.matmul %67, %68, %cst_56 {dimension_numbers = #tpu.dot_dimension_numbers<[1], [0], [0], [1], [0, 0, 1, 1], [], []>} : vector<8x8xf32>, vector<8x8xf32>, vector<8x8xf32> -> vector<8x8xf32>
    %70 = arith.addf %66, %69 : vector<8x8xf32>
    %71 = vector.extract_strided_slice %59 {offsets = [24, 0], sizes = [8, 8], strides = [1, 1]} : vector<32x8xf32> to vector<8x8xf32>
    %c0_57 = arith.constant 0 : index
    %c0_58 = arith.constant 0 : index
    %72 = vector.load %arg20[%c0_57, %c0_58] : memref<8x8xf32, #tpu.memory_space<vmem>>, vector<8x8xf32>
    %cst_59 = arith.constant dense<0.000000e+00> : vector<8x8xf32>
    %73 = tpu.matmul %71, %72, %cst_59 {dimension_numbers = #tpu.dot_dimension_numbers<[1], [0], [0], [1], [0, 0, 1, 1], [], []>} : vector<8x8xf32>, vector<8x8xf32>, vector<8x8xf32> -> vector<8x8xf32>
    %74 = arith.addf %70, %73 : vector<8x8xf32>
    %c0_60 = arith.constant 0 : index
    %c0_61 = arith.constant 0 : index
    %75 = vector.load %arg21[%c0_60, %c0_61] : memref<1x8xf32, #tpu.memory_space<vmem>>, vector<1x8xf32>
    %76 = vector.broadcast %75 : vector<1x8xf32> to vector<8x8xf32>
    %77 = arith.addf %74, %76 : vector<8x8xf32>
    %cst_62 = arith.constant 0.000000e+00 : f32
    %78 = vector.broadcast %cst_62 : f32 to vector<8x8xf32>
    %79 = arith.maximumf %77, %78 : vector<8x8xf32>
    %c0_63 = arith.constant 0 : index
    %c0_64 = arith.constant 0 : index
    %80 = vector.load %arg22[%c0_63, %c0_64] : memref<8x32xf32, #tpu.memory_space<vmem>>, vector<8x32xf32>
    %cst_65 = arith.constant dense<0.000000e+00> : vector<8x32xf32>
    %81 = tpu.matmul %79, %80, %cst_65 {dimension_numbers = #tpu.dot_dimension_numbers<[1], [0], [0], [1], [0, 0, 1, 1], [], []>} : vector<8x8xf32>, vector<8x32xf32>, vector<8x32xf32> -> vector<8x32xf32>
    %c0_66 = arith.constant 0 : index
    %c0_67 = arith.constant 0 : index
    %82 = vector.load %arg23[%c0_66, %c0_67] : memref<1x32xf32, #tpu.memory_space<vmem>>, vector<1x32xf32>
    %83 = vector.broadcast %82 : vector<1x32xf32> to vector<8x32xf32>
    %84 = arith.addf %81, %83 : vector<8x32xf32>
    %cst_68 = arith.constant 0.000000e+00 : f32
    %85 = vector.broadcast %cst_68 : f32 to vector<8x32xf32>
    %86 = arith.maximumf %84, %85 : vector<8x32xf32>
    %c0_69 = arith.constant 0 : index
    %c0_70 = arith.constant 0 : index
    %87 = vector.load %arg24[%c0_69, %c0_70] : memref<32x32xf32, #tpu.memory_space<vmem>>, vector<32x32xf32>
    %cst_71 = arith.constant dense<0.000000e+00> : vector<8x32xf32>
    %88 = tpu.matmul %86, %87, %cst_71 {dimension_numbers = #tpu.dot_dimension_numbers<[1], [0], [0], [1], [0, 0, 1, 1], [], []>} : vector<8x32xf32>, vector<32x32xf32>, vector<8x32xf32> -> vector<8x32xf32>
    %c0_72 = arith.constant 0 : index
    %c0_73 = arith.constant 0 : index
    %89 = vector.load %arg25[%c0_72, %c0_73] : memref<1x32xf32, #tpu.memory_space<vmem>>, vector<1x32xf32>
    %90 = vector.broadcast %89 : vector<1x32xf32> to vector<8x32xf32>
    %91 = arith.addf %88, %90 : vector<8x32xf32>
    %cst_74 = arith.constant 0.000000e+00 : f32
    %92 = vector.broadcast %cst_74 : f32 to vector<8x32xf32>
    %93 = arith.maximumf %91, %92 : vector<8x32xf32>
    %c0_75 = arith.constant 0 : index
    %c0_76 = arith.constant 0 : index
    %94 = vector.load %arg26[%c0_75, %c0_76] : memref<32x16xf32, #tpu.memory_space<vmem>>, vector<32x16xf32>
    %cst_77 = arith.constant dense<0.000000e+00> : vector<8x16xf32>
    %95 = tpu.matmul %93, %94, %cst_77 {dimension_numbers = #tpu.dot_dimension_numbers<[1], [0], [0], [1], [0, 0, 1, 1], [], []>} : vector<8x32xf32>, vector<32x16xf32>, vector<8x16xf32> -> vector<8x16xf32>
    %c0_78 = arith.constant 0 : index
    %c0_79 = arith.constant 0 : index
    %96 = vector.load %arg27[%c0_78, %c0_79] : memref<1x16xf32, #tpu.memory_space<vmem>>, vector<1x16xf32>
    %97 = vector.broadcast %96 : vector<1x16xf32> to vector<8x16xf32>
    %98 = arith.addf %95, %97 : vector<8x16xf32>
    %c0_80 = arith.constant 0 : index
    %c0_81 = arith.constant 0 : index
    %99 = vector.load %arg28[%c0_80, %c0_81] : memref<8x16xf32, #tpu.memory_space<vmem>>, vector<8x16xf32>
    tpu.vector_store %arg28[%c0_80, %c0_81], %98 {strides = array<i32>} : memref<8x16xf32, #tpu.memory_space<vmem>>, vector<8x16xf32>,
    return
  }
  func.func @transform_0(%arg0: i32) -> (i32, i32) {
    %c0_i32 = arith.constant 0 : i32
    %c0_i32_0 = arith.constant 0 : i32
    %c0_i32_1 = arith.constant 0 : i32
    return %c0_i32, %c0_i32_0 : i32, i32
  }
  func.func @transform_1(%arg0: i32) -> (i32, i32) {
    %c0_i32 = arith.constant 0 : i32
    %c0_i32_0 = arith.constant 0 : i32
    %c0_i32_1 = arith.constant 0 : i32
    return %c0_i32, %c0_i32_0 : i32, i32
  }
  func.func @transform_2(%arg0: i32) -> (i32, i32) {
    %c0_i32 = arith.constant 0 : i32
    %c0_i32_0 = arith.constant 0 : i32
    %c0_i32_1 = arith.constant 0 : i32
    return %c0_i32, %c0_i32_0 : i32, i32
  }
  func.func @transform_3(%arg0: i32) -> (i32, i32) {
    %c0_i32 = arith.constant 0 : i32
    %c0_i32_0 = arith.constant 0 : i32
    %c0_i32_1 = arith.constant 0 : i32
    return %c0_i32, %c0_i32_0 : i32, i32
  }
  func.func @transform_4(%arg0: i32) -> (i32, i32) {
    %c0_i32 = arith.constant 0 : i32
    %c0_i32_0 = arith.constant 0 : i32
    %c0_i32_1 = arith.constant 0 : i32
    return %c0_i32, %c0_i32_0 : i32, i32
  }
  func.func @transform_5(%arg0: i32) -> (i32, i32) {
    %c0_i32 = arith.constant 0 : i32
    %c0_i32_0 = arith.constant 0 : i32
    %c0_i32_1 = arith.constant 0 : i32
    return %c0_i32, %c0_i32_0 : i32, i32
  }
  func.func @transform_6(%arg0: i32) -> (i32, i32) {
    %c0_i32 = arith.constant 0 : i32
    %c0_i32_0 = arith.constant 0 : i32
    %c0_i32_1 = arith.constant 0 : i32
    return %c0_i32, %c0_i32_0 : i32, i32
  }
  func.func @transform_7(%arg0: i32) -> (i32, i32) {
    %c0_i32 = arith.constant 0 : i32
    %c0_i32_0 = arith.constant 0 : i32
    %c0_i32_1 = arith.constant 0 : i32
    return %c0_i32, %c0_i32_0 : i32, i32
  }
  func.func @transform_8(%arg0: i32) -> (i32, i32) {
    %c0_i32 = arith.constant 0 : i32
    %c0_i32_0 = arith.constant 0 : i32
    %c0_i32_1 = arith.constant 0 : i32
    return %c0_i32, %c0_i32_0 : i32, i32
  }
  func.func @transform_9(%arg0: i32) -> (i32, i32) {
    %c0_i32 = arith.constant 0 : i32
    %c0_i32_0 = arith.constant 0 : i32
    %c0_i32_1 = arith.constant 0 : i32
    return %c0_i32, %c0_i32_0 : i32, i32
  }
  func.func @transform_10(%arg0: i32) -> (i32, i32) {
    %c0_i32 = arith.constant 0 : i32
    %c0_i32_0 = arith.constant 0 : i32
    %c0_i32_1 = arith.constant 0 : i32
    return %c0_i32, %c0_i32_0 : i32, i32
  }
  func.func @transform_11(%arg0: i32) -> (i32, i32) {
    %c0_i32 = arith.constant 0 : i32
    %c0_i32_0 = arith.constant 0 : i32
    %c0_i32_1 = arith.constant 0 : i32
    return %c0_i32, %c0_i32_0 : i32, i32
  }
  func.func @transform_12(%arg0: i32) -> (i32, i32) {
    %c0_i32 = arith.constant 0 : i32
    %c0_i32_0 = arith.constant 0 : i32
    %c0_i32_1 = arith.constant 0 : i32
    return %c0_i32, %c0_i32_0 : i32, i32
  }
  func.func @transform_13(%arg0: i32) -> (i32, i32) {
    %c0_i32 = arith.constant 0 : i32
    %c0_i32_0 = arith.constant 0 : i32
    %c0_i32_1 = arith.constant 0 : i32
    return %c0_i32, %c0_i32_0 : i32, i32
  }
  func.func @transform_14(%arg0: i32) -> (i32, i32) {
    %c0_i32 = arith.constant 0 : i32
    %c0_i32_0 = arith.constant 0 : i32
    %c0_i32_1 = arith.constant 0 : i32
    return %c0_i32, %c0_i32_0 : i32, i32
  }
  func.func @transform_15(%arg0: i32) -> (i32, i32) {
    %c0_i32 = arith.constant 0 : i32
    %c0_i32_0 = arith.constant 0 : i32
    %c0_i32_1 = arith.constant 0 : i32
    return %c0_i32, %c0_i32_0 : i32, i32
  }
  func.func @transform_16(%arg0: i32) -> (i32, i32) {
    %c0_i32 = arith.constant 0 : i32
    %c0_i32_0 = arith.constant 0 : i32
    %c0_i32_1 = arith.constant 0 : i32
    return %c0_i32, %c0_i32_0 : i32, i32
  }
  func.func @transform_17(%arg0: i32) -> (i32, i32) {
    %c0_i32 = arith.constant 0 : i32
    %c0_i32_0 = arith.constant 0 : i32
    %c0_i32_1 = arith.constant 0 : i32
    return %c0_i32, %c0_i32_0 : i32, i32
  }
  func.func @transform_18(%arg0: i32) -> (i32, i32) {
    %c0_i32 = arith.constant 0 : i32
    %c0_i32_0 = arith.constant 0 : i32
    %c0_i32_1 = arith.constant 0 : i32
    return %c0_i32, %c0_i32_0 : i32, i32
  }
  func.func @transform_19(%arg0: i32) -> (i32, i32) {
    %c0_i32 = arith.constant 0 : i32
    %c0_i32_0 = arith.constant 0 : i32
    %c0_i32_1 = arith.constant 0 : i32
    return %c0_i32, %c0_i32_0 : i32, i32
  }
  func.func @transform_20(%arg0: i32) -> (i32, i32) {
    %c0_i32 = arith.constant 0 : i32
    %c0_i32_0 = arith.constant 0 : i32
    %c0_i32_1 = arith.constant 0 : i32
    return %c0_i32, %c0_i32_0 : i32, i32
  }
  func.func @transform_21(%arg0: i32) -> (i32, i32) {
    %c0_i32 = arith.constant 0 : i32
    %c0_i32_0 = arith.constant 0 : i32
    %c0_i32_1 = arith.constant 0 : i32
    return %c0_i32, %c0_i32_0 : i32, i32
  }
  func.func @transform_22(%arg0: i32) -> (i32, i32) {
    %c0_i32 = arith.constant 0 : i32
    %c0_i32_0 = arith.constant 0 : i32
    %c0_i32_1 = arith.constant 0 : i32
    return %c0_i32, %c0_i32_0 : i32, i32
  }
  func.func @transform_23(%arg0: i32) -> (i32, i32) {
    %c0_i32 = arith.constant 0 : i32
    %c0_i32_0 = arith.constant 0 : i32
    %c0_i32_1 = arith.constant 0 : i32
    return %c0_i32, %c0_i32_0 : i32, i32
  }
  func.func @transform_24(%arg0: i32) -> (i32, i32) {
    %c0_i32 = arith.constant 0 : i32
    %c0_i32_0 = arith.constant 0 : i32
    %c0_i32_1 = arith.constant 0 : i32
    return %c0_i32, %c0_i32_0 : i32, i32
  }
  func.func @transform_25(%arg0: i32) -> (i32, i32) {
    %c0_i32 = arith.constant 0 : i32
    %c0_i32_0 = arith.constant 0 : i32
    %c0_i32_1 = arith.constant 0 : i32
    return %c0_i32, %c0_i32_0 : i32, i32
  }
  func.func @transform_26(%arg0: i32) -> (i32, i32) {
    %c0_i32 = arith.constant 0 : i32
    %c0_i32_0 = arith.constant 0 : i32
    %c0_i32_1 = arith.constant 0 : i32
    return %c0_i32, %c0_i32_0 : i32, i32
  }
  func.func @transform_27(%arg0: i32) -> (i32, i32) {
    %c0_i32 = arith.constant 0 : i32
    %c0_i32_0 = arith.constant 0 : i32
    %c0_i32_1 = arith.constant 0 : i32
    return %c0_i32, %c0_i32_0 : i32, i32
  }
}

</mosaic_0001>

<llo_original>
// kernel: convnet_forward.1
$region0: #{convnet_forward.1}
  #allocation0 [shape = 'u32[]', space=smem, size = 0x4, offset = 0x4, fixed_abs, tag = 'smem constant byte address 0x4 - core index']
  #allocation1 [shape = 'u32[144,128]{1,0:T(1,128)}', space=vmem, size = 0x12000, scoped, tag = 'internal scratch']
  %s0 = inlined_call_operand.vmem [shape: f32[2048,4], index: 0, kind: input, shape index: {}]
  %s1 = inlined_call_operand.vmem [shape: f32[4,8], index: 1, kind: input, shape index: {}]
  %s2 = inlined_call_operand.vmem [shape: f32[4,8], index: 2, kind: input, shape index: {}]
  %s3 = inlined_call_operand.vmem [shape: f32[4,8], index: 3, kind: input, shape index: {}]
  %s4 = inlined_call_operand.vmem [shape: f32[4,8], index: 4, kind: input, shape index: {}]
  %s5 = inlined_call_operand.vmem [shape: f32[1,8], index: 5, kind: input, shape index: {}]
  %s6 = inlined_call_operand.vmem [shape: f32[8,8], index: 6, kind: input, shape index: {}]
  %s7 = inlined_call_operand.vmem [shape: f32[8,8], index: 7, kind: input, shape index: {}]
  %s8 = inlined_call_operand.vmem [shape: f32[8,8], index: 8, kind: input, shape index: {}]
  %s9 = inlined_call_operand.vmem [shape: f32[8,8], index: 9, kind: input, shape index: {}]
  %s10 = inlined_call_operand.vmem [shape: f32[1,8], index: 10, kind: input, shape index: {}]
  %s11 = inlined_call_operand.vmem [shape: f32[8,8], index: 11, kind: input, shape index: {}]
  %s12 = inlined_call_operand.vmem [shape: f32[8,8], index: 12, kind: input, shape index: {}]
  %s13 = inlined_call_operand.vmem [shape: f32[8,8], index: 13, kind: input, shape index: {}]
  %s14 = inlined_call_operand.vmem [shape: f32[8,8], index: 14, kind: input, shape index: {}]
  %s15 = inlined_call_operand.vmem [shape: f32[1,8], index: 15, kind: input, shape index: {}]
  %s16 = inlined_call_operand.vmem [shape: f32[8,8], index: 16, kind: input, shape index: {}]
  %s17 = inlined_call_operand.vmem [shape: f32[8,8], index: 17, kind: input, shape index: {}]
  %s18 = inlined_call_operand.vmem [shape: f32[8,8], index: 18, kind: input, shape index: {}]
  %s19 = inlined_call_operand.vmem [shape: f32[8,8], index: 19, kind: input, shape index: {}]
  %s20 = inlined_call_operand.vmem [shape: f32[1,8], index: 20, kind: input, shape index: {}]
  %s21 = inlined_call_operand.vmem [shape: f32[8,32], index: 21, kind: input, shape index: {}]
  %s22 = inlined_call_operand.vmem [shape: f32[1,32], index: 22, kind: input, shape index: {}]
  %s23 = inlined_call_operand.vmem [shape: f32[32,32], index: 23, kind: input, shape index: {}]
  %s24 = inlined_call_operand.vmem [shape: f32[1,32], index: 24, kind: input, shape index: {}]
  %s25 = inlined_call_operand.vmem [shape: f32[32,16], index: 25, kind: input, shape index: {}]
  %s26 = inlined_call_operand.vmem [shape: f32[1,16], index: 26, kind: input, shape index: {}]
  %s27 = inlined_call_operand.vmem [shape: f32[8,16], index: 27, kind: output, shape index: {}]
  %s28 = sld [smem:[#allocation0]]
  $region118: #{convnet_forward.1} parent=0
    _
  %s30 = ssub.s32 1, %s28
  %s31 = scalar_select 0, %s30, %s28
  // Predicated region
  $region2: #{convnet_forward.1} parent=0 // pred_check
    _
  $region3: #{convnet_forward.1} parent=0 // pred_check_branch
    %33 = sbr.rel (0) target = $region5
  $region4: #{convnet_forward.1} parent=0 // pred_region
    _
  $region5: #{convnet_forward.1} parent=0 // pred_fallthru
    _
  // Predicated region
  $region6: #{convnet_forward.1} parent=0 // pred_check
    _
  $region7: #{convnet_forward.1} parent=0 // pred_check_branch
    %35 = sbr.rel (0) target = $region9
  $region8: #{convnet_forward.1} parent=0 // pred_region
    _
  $region9: #{convnet_forward.1} parent=0 // pred_fallthru
    _
  // Predicated region
  $region10: #{convnet_forward.1} parent=0 // pred_check
    _
  $region11: #{convnet_forward.1} parent=0 // pred_check_branch
    %37 = sbr.rel (0) target = $region13
  $region12: #{convnet_forward.1} parent=0 // pred_region
    _
  $region13: #{convnet_forward.1} parent=0 // pred_fallthru
    _
  // Predicated region
  $region14: #{convnet_forward.1} parent=0 // pred_check
    _
  $region15: #{convnet_forward.1} parent=0 // pred_check_branch
    %39 = sbr.rel (0) target = $region17
  $region16: #{convnet_forward.1} parent=0 // pred_region
    _
  $region17: #{convnet_forward.1} parent=0 // pred_fallthru
    _
  // Predicated region
  $region18: #{convnet_forward.1} parent=0 // pred_check
    _
  $region19: #{convnet_forward.1} parent=0 // pred_check_branch
    %41 = sbr.rel (0) target = $region21
  $region20: #{convnet_forward.1} parent=0 // pred_region
    _
  $region21: #{convnet_forward.1} parent=0 // pred_fallthru
    _
  // Predicated region
  $region22: #{convnet_forward.1} parent=0 // pred_check
    _
  $region23: #{convnet_forward.1} parent=0 // pred_check_branch
    %43 = sbr.rel (0) target = $region25
  $region24: #{convnet_forward.1} parent=0 // pred_region
    _
  $region25: #{convnet_forward.1} parent=0 // pred_fallthru
    _
  // Predicated region
  $region26: #{convnet_forward.1} parent=0 // pred_check
    _
  $region27: #{convnet_forward.1} parent=0 // pred_check_branch
    %45 = sbr.rel (0) target = $region29
  $region28: #{convnet_forward.1} parent=0 // pred_region
    _
  $region29: #{convnet_forward.1} parent=0 // pred_fallthru
    _
  // Predicated region
  $region30: #{convnet_forward.1} parent=0 // pred_check
    _
  $region31: #{convnet_forward.1} parent=0 // pred_check_branch
    %47 = sbr.rel (0) target = $region33
  $region32: #{convnet_forward.1} parent=0 // pred_region
    _
  $region33: #{convnet_forward.1} parent=0 // pred_fallthru
    _
  // Predicated region
  $region34: #{convnet_forward.1} parent=0 // pred_check
    _
  $region35: #{convnet_forward.1} parent=0 // pred_check_branch
    %49 = sbr.rel (0) target = $region37
  $region36: #{convnet_forward.1} parent=0 // pred_region
    _
  $region37: #{convnet_forward.1} parent=0 // pred_fallthru
    _
  // Predicated region
  $region38: #{convnet_forward.1} parent=0 // pred_check
    _
  $region39: #{convnet_forward.1} parent=0 // pred_check_branch
    %51 = sbr.rel (0) target = $region41
  $region40: #{convnet_forward.1} parent=0 // pred_region
    _
  $region41: #{convnet_forward.1} parent=0 // pred_fallthru
    _
  // Predicated region
  $region42: #{convnet_forward.1} parent=0 // pred_check
    _
  $region43: #{convnet_forward.1} parent=0 // pred_check_branch
    %53 = sbr.rel (0) target = $region45
  $region44: #{convnet_forward.1} parent=0 // pred_region
    _
  $region45: #{convnet_forward.1} parent=0 // pred_fallthru
    _
  // Predicated region
  $region46: #{convnet_forward.1} parent=0 // pred_check
    _
  $region47: #{convnet_forward.1} parent=0 // pred_check_branch
    %55 = sbr.rel (0) target = $region49
  $region48: #{convnet_forward.1} parent=0 // pred_region
    _
  $region49: #{convnet_forward.1} parent=0 // pred_fallthru
    _
  // Predicated region
  $region50: #{convnet_forward.1} parent=0 // pred_check
    _
  $region51: #{convnet_forward.1} parent=0 // pred_check_branch
    %57 = sbr.rel (0) target = $region53
  $region52: #{convnet_forward.1} parent=0 // pred_region
    _
  $region53: #{convnet_forward.1} parent=0 // pred_fallthru
    _
  // Predicated region
  $region54: #{convnet_forward.1} parent=0 // pred_check
    _
  $region55: #{convnet_forward.1} parent=0 // pred_check_branch
    %59 = sbr.rel (0) target = $region57
  $region56: #{convnet_forward.1} parent=0 // pred_region
    _
  $region57: #{convnet_forward.1} parent=0 // pred_fallthru
    _
  // Predicated region
  $region58: #{convnet_forward.1} parent=0 // pred_check
    _
  $region59: #{convnet_forward.1} parent=0 // pred_check_branch
    %61 = sbr.rel (0) target = $region61
  $region60: #{convnet_forward.1} parent=0 // pred_region
    _
  $region61: #{convnet_forward.1} parent=0 // pred_fallthru
    _
  // Predicated region
  $region62: #{convnet_forward.1} parent=0 // pred_check
    _
  $region63: #{convnet_forward.1} parent=0 // pred_check_branch
    %63 = sbr.rel (0) target = $region65
  $region64: #{convnet_forward.1} parent=0 // pred_region
    _
  $region65: #{convnet_forward.1} parent=0 // pred_fallthru
    _
  // Predicated region
  $region66: #{convnet_forward.1} parent=0 // pred_check
    _
  $region67: #{convnet_forward.1} parent=0 // pred_check_branch
    %65 = sbr.rel (0) target = $region69
  $region68: #{convnet_forward.1} parent=0 // pred_region
    _
  $region69: #{convnet_forward.1} parent=0 // pred_fallthru
    _
  // Predicated region
  $region70: #{convnet_forward.1} parent=0 // pred_check
    _
  $region71: #{convnet_forward.1} parent=0 // pred_check_branch
    %67 = sbr.rel (0) target = $region73
  $region72: #{convnet_forward.1} parent=0 // pred_region
    _
  $region73: #{convnet_forward.1} parent=0 // pred_fallthru
    _
  // Predicated region
  $region74: #{convnet_forward.1} parent=0 // pred_check
    _
  $region75: #{convnet_forward.1} parent=0 // pred_check_branch
    %69 = sbr.rel (0) target = $region77
  $region76: #{convnet_forward.1} parent=0 // pred_region
    _
  $region77: #{convnet_forward.1} parent=0 // pred_fallthru
    _
  // Predicated region
  $region78: #{convnet_forward.1} parent=0 // pred_check
    _
  $region79: #{convnet_forward.1} parent=0 // pred_check_branch
    %71 = sbr.rel (0) target = $region81
  $region80: #{convnet_forward.1} parent=0 // pred_region
    _
  $region81: #{convnet_forward.1} parent=0 // pred_fallthru
    _
  // Predicated region
  $region82: #{convnet_forward.1} parent=0 // pred_check
    _
  $region83: #{convnet_forward.1} parent=0 // pred_check_branch
    %73 = sbr.rel (0) target = $region85
  $region84: #{convnet_forward.1} parent=0 // pred_region
    _
  $region85: #{convnet_forward.1} parent=0 // pred_fallthru
    _
  // Predicated region
  $region86: #{convnet_forward.1} parent=0 // pred_check
    _
  $region87: #{convnet_forward.1} parent=0 // pred_check_branch
    %75 = sbr.rel (0) target = $region89
  $region88: #{convnet_forward.1} parent=0 // pred_region
    _
  $region89: #{convnet_forward.1} parent=0 // pred_fallthru
    _
  // Predicated region
  $region90: #{convnet_forward.1} parent=0 // pred_check
    _
  $region91: #{convnet_forward.1} parent=0 // pred_check_branch
    %77 = sbr.rel (0) target = $region93
  $region92: #{convnet_forward.1} parent=0 // pred_region
    _
  $region93: #{convnet_forward.1} parent=0 // pred_fallthru
    _
  // Predicated region
  $region94: #{convnet_forward.1} parent=0 // pred_check
    _
  $region95: #{convnet_forward.1} parent=0 // pred_check_branch
    %79 = sbr.rel (0) target = $region97
  $region96: #{convnet_forward.1} parent=0 // pred_region
    _
  $region97: #{convnet_forward.1} parent=0 // pred_fallthru
    _
  // Predicated region
  $region98: #{convnet_forward.1} parent=0 // pred_check
    _
  $region99: #{convnet_forward.1} parent=0 // pred_check_branch
    %81 = sbr.rel (0) target = $region101
  $region100: #{convnet_forward.1} parent=0 // pred_region
    _
  $region101: #{convnet_forward.1} parent=0 // pred_fallthru
    _
  // Predicated region
  $region102: #{convnet_forward.1} parent=0 // pred_check
    _
  $region103: #{convnet_forward.1} parent=0 // pred_check_branch
    %83 = sbr.rel (0) target = $region105
  $region104: #{convnet_forward.1} parent=0 // pred_region
    _
  $region105: #{convnet_forward.1} parent=0 // pred_fallthru
    _
  // Predicated region
  $region106: #{convnet_forward.1} parent=0 // pred_check
    _
  $region107: #{convnet_forward.1} parent=0 // pred_check_branch
    %85 = sbr.rel (0) target = $region109
  $region108: #{convnet_forward.1} parent=0 // pred_region
    _
  $region109: #{convnet_forward.1} parent=0 // pred_fallthru
    _
  %v86 = vld [vmem:[%s0] sm:$0xff]
  %v87 = vld [vmem:[%s0 + $0x8] sm:$0xff]
  %v88 = vld [vmem:[%s0 + $0x10] sm:$0xff]
  %v89 = vld [vmem:[%s0 + $0x18] sm:$0xff]
  %v90 = vld [vmem:[%s0 + $0x20] sm:$0xff]
  %v91 = vld [vmem:[%s0 + $0x28] sm:$0xff]
  %v92 = vld [vmem:[%s0 + $0x30] sm:$0xff]
  %v93 = vld [vmem:[%s0 + $0x38] sm:$0xff]
  %v94 = vld [vmem:[%s0 + $0x40] sm:$0xff]
  %v95 = vld [vmem:[%s0 + $0x48] sm:$0xff]
  %v96 = vld [vmem:[%s0 + $0x50] sm:$0xff]
  %v97 = vld [vmem:[%s0 + $0x58] sm:$0xff]
  %v98 = vld [vmem:[%s0 + $0x60] sm:$0xff]
  %v99 = vld [vmem:[%s0 + $0x68] sm:$0xff]
  %v100 = vld [vmem:[%s0 + $0x70] sm:$0xff]
  %v101 = vld [vmem:[%s0 + $0x78] sm:$0xff]
  %v102 = vld [vmem:[%s0 + $0x80] sm:$0xff]
  %v103 = vld [vmem:[%s0 + $0x88] sm:$0xff]
  %v104 = vld [vmem:[%s0 + $0x90] sm:$0xff]
  %v105 = vld [vmem:[%s0 + $0x98] sm:$0xff]
  %v106 = vld [vmem:[%s0 + $0xa0] sm:$0xff]
  %v107 = vld [vmem:[%s0 + $0xa8] sm:$0xff]
  %v108 = vld [vmem:[%s0 + $0xb0] sm:$0xff]
  %v109 = vld [vmem:[%s0 + $0xb8] sm:$0xff]
  %v110 = vld [vmem:[%s0 + $0xc0] sm:$0xff]
  %v111 = vld [vmem:[%s0 + $0xc8] sm:$0xff]
  %v112 = vld [vmem:[%s0 + $0xd0] sm:$0xff]
  %v113 = vld [vmem:[%s0 + $0xd8] sm:$0xff]
  %v114 = vld [vmem:[%s0 + $0xe0] sm:$0xff]
  %v115 = vld [vmem:[%s0 + $0xe8] sm:$0xff]
  %v116 = vld [vmem:[%s0 + $0xf0] sm:$0xff]
  %v117 = vld [vmem:[%s0 + $0xf8] sm:$0xff]
  %v118 = vld [vmem:[%s0 + $0x100] sm:$0xff]
  %v119 = vld [vmem:[%s0 + $0x108] sm:$0xff]
  %v120 = vld [vmem:[%s0 + $0x110] sm:$0xff]
  %v121 = vld [vmem:[%s0 + $0x118] sm:$0xff]
  %v122 = vld [vmem:[%s0 + $0x120] sm:$0xff]
  %v123 = vld [vmem:[%s0 + $0x128] sm:$0xff]
  %v124 = vld [vmem:[%s0 + $0x130] sm:$0xff]
  %v125 = vld [vmem:[%s0 + $0x138] sm:$0xff]
  %v126 = vld [vmem:[%s0 + $0x140] sm:$0xff]
  %v127 = vld [vmem:[%s0 + $0x148] sm:$0xff]
  %v128 = vld [vmem:[%s0 + $0x150] sm:$0xff]
  %v129 = vld [vmem:[%s0 + $0x158] sm:$0xff]
  %v130 = vld [vmem:[%s0 + $0x160] sm:$0xff]
  %v131 = vld [vmem:[%s0 + $0x168] sm:$0xff]
  %v132 = vld [vmem:[%s0 + $0x170] sm:$0xff]
  %v133 = vld [vmem:[%s0 + $0x178] sm:$0xff]
  %v134 = vld [vmem:[%s0 + $0x180] sm:$0xff]
  %v135 = vld [vmem:[%s0 + $0x188] sm:$0xff]
  %v136 = vld [vmem:[%s0 + $0x190] sm:$0xff]
  %v137 = vld [vmem:[%s0 + $0x198] sm:$0xff]
  %v138 = vld [vmem:[%s0 + $0x1a0] sm:$0xff]
  %v139 = vld [vmem:[%s0 + $0x1a8] sm:$0xff]
  %v140 = vld [vmem:[%s0 + $0x1b0] sm:$0xff]
  %v141 = vld [vmem:[%s0 + $0x1b8] sm:$0xff]
  %v142 = vld [vmem:[%s0 + $0x1c0] sm:$0xff]
  %v143 = vld [vmem:[%s0 + $0x1c8] sm:$0xff]
  %v144 = vld [vmem:[%s0 + $0x1d0] sm:$0xff]
  %v145 = vld [vmem:[%s0 + $0x1d8] sm:$0xff]
  %v146 = vld [vmem:[%s0 + $0x1e0] sm:$0xff]
  %v147 = vld [vmem:[%s0 + $0x1e8] sm:$0xff]
  %v148 = vld [vmem:[%s0 + $0x1f0] sm:$0xff]
  %v149 = vld [vmem:[%s0 + $0x1f8] sm:$0xff]
  %v150 = vld [vmem:[%s1] sm:$0xf]
  %v151 = vld [vmem:[%s0 + $0x200] sm:$0xff]
  %v152 = vld [vmem:[%s0 + $0x208] sm:$0xff]
  %v153 = vld [vmem:[%s0 + $0x210] sm:$0xff]
  %v154 = vld [vmem:[%s0 + $0x218] sm:$0xff]
  %v155 = vld [vmem:[%s0 + $0x220] sm:$0xff]
  %v156 = vld [vmem:[%s0 + $0x228] sm:$0xff]
  %v157 = vld [vmem:[%s0 + $0x230] sm:$0xff]
  %v158 = vld [vmem:[%s0 + $0x238] sm:$0xff]
  %v159 = vld [vmem:[%s0 + $0x240] sm:$0xff]
  %v160 = vld [vmem:[%s0 + $0x248] sm:$0xff]
  %v161 = vld [vmem:[%s0 + $0x250] sm:$0xff]
  %v162 = vld [vmem:[%s0 + $0x258] sm:$0xff]
  %v163 = vld [vmem:[%s0 + $0x260] sm:$0xff]
  %v164 = vld [vmem:[%s0 + $0x268] sm:$0xff]
  %v165 = vld [vmem:[%s0 + $0x270] sm:$0xff]
  %v166 = vld [vmem:[%s0 + $0x278] sm:$0xff]
  %v167 = vld [vmem:[%s0 + $0x280] sm:$0xff]
  %v168 = vld [vmem:[%s0 + $0x288] sm:$0xff]
  %v169 = vld [vmem:[%s0 + $0x290] sm:$0xff]
  %v170 = vld [vmem:[%s0 + $0x298] sm:$0xff]
  %v171 = vld [vmem:[%s0 + $0x2a0] sm:$0xff]
  %v172 = vld [vmem:[%s0 + $0x2a8] sm:$0xff]
  %v173 = vld [vmem:[%s0 + $0x2b0] sm:$0xff]
  %v174 = vld [vmem:[%s0 + $0x2b8] sm:$0xff]
  %v175 = vld [vmem:[%s0 + $0x2c0] sm:$0xff]
  %v176 = vld [vmem:[%s0 + $0x2c8] sm:$0xff]
  %v177 = vld [vmem:[%s0 + $0x2d0] sm:$0xff]
  %v178 = vld [vmem:[%s0 + $0x2d8] sm:$0xff]
  %v179 = vld [vmem:[%s0 + $0x2e0] sm:$0xff]
  %v180 = vld [vmem:[%s0 + $0x2e8] sm:$0xff]
  %v181 = vld [vmem:[%s0 + $0x2f0] sm:$0xff]
  %v182 = vld [vmem:[%s0 + $0x2f8] sm:$0xff]
  %v183 = vld [vmem:[%s0 + $0x300] sm:$0xff]
  %v184 = vld [vmem:[%s0 + $0x308] sm:$0xff]
  %v185 = vld [vmem:[%s0 + $0x310] sm:$0xff]
  %v186 = vld [vmem:[%s0 + $0x318] sm:$0xff]
  %v187 = vld [vmem:[%s0 + $0x320] sm:$0xff]
  %v188 = vld [vmem:[%s0 + $0x328] sm:$0xff]
  %v189 = vld [vmem:[%s0 + $0x330] sm:$0xff]
  %v190 = vld [vmem:[%s0 + $0x338] sm:$0xff]
  %v191 = vld [vmem:[%s0 + $0x340] sm:$0xff]
  %v192 = vld [vmem:[%s0 + $0x348] sm:$0xff]
  %v193 = vld [vmem:[%s0 + $0x350] sm:$0xff]
  %v194 = vld [vmem:[%s0 + $0x358] sm:$0xff]
  %v195 = vld [vmem:[%s0 + $0x360] sm:$0xff]
  %v196 = vld [vmem:[%s0 + $0x368] sm:$0xff]
  %v197 = vld [vmem:[%s0 + $0x370] sm:$0xff]
  %v198 = vld [vmem:[%s0 + $0x378] sm:$0xff]
  %v199 = vld [vmem:[%s0 + $0x380] sm:$0xff]
  %v200 = vld [vmem:[%s0 + $0x388] sm:$0xff]
  %v201 = vld [vmem:[%s0 + $0x390] sm:$0xff]
  %v202 = vld [vmem:[%s0 + $0x398] sm:$0xff]
  %v203 = vld [vmem:[%s0 + $0x3a0] sm:$0xff]
  %v204 = vld [vmem:[%s0 + $0x3a8] sm:$0xff]
  %v205 = vld [vmem:[%s0 + $0x3b0] sm:$0xff]
  %v206 = vld [vmem:[%s0 + $0x3b8] sm:$0xff]
  %v207 = vld [vmem:[%s0 + $0x3c0] sm:$0xff]
  %v208 = vld [vmem:[%s0 + $0x3c8] sm:$0xff]
  %v209 = vld [vmem:[%s0 + $0x3d0] sm:$0xff]
  %v210 = vld [vmem:[%s0 + $0x3d8] sm:$0xff]
  %v211 = vld [vmem:[%s0 + $0x3e0] sm:$0xff]
  %v212 = vld [vmem:[%s0 + $0x3e8] sm:$0xff]
  %v213 = vld [vmem:[%s0 + $0x3f0] sm:$0xff]
  %v214 = vld [vmem:[%s0 + $0x3f8] sm:$0xff]
  %v215 = vld [vmem:[%s2] sm:$0xf]
  %vm216 = vcmask 31744
  %v218 = vsel %vm216, %v151, 0
  %v221 = vsel %vm216, %v152, 0
  %v224 = vsel %vm216, %v153, 0
  %v227 = vsel %vm216, %v154, 0
  %v230 = vsel %vm216, %v155, 0
  %v233 = vsel %vm216, %v156, 0
  %v236 = vsel %vm216, %v157, 0
  %v239 = vsel %vm216, %v158, 0
  %v242 = vsel %vm216, %v159, 0
  %v245 = vsel %vm216, %v160, 0
  %v248 = vsel %vm216, %v161, 0
  %v251 = vsel %vm216, %v162, 0
  %v254 = vsel %vm216, %v163, 0
  %v257 = vsel %vm216, %v164, 0
  %v260 = vsel %vm216, %v165, 0
  %v263 = vsel %vm216, %v166, 0
  %v266 = vsel %vm216, %v167, 0
  %v269 = vsel %vm216, %v168, 0
  %v272 = vsel %vm216, %v169, 0
  %v275 = vsel %vm216, %v170, 0
  %v278 = vsel %vm216, %v171, 0
  %v281 = vsel %vm216, %v172, 0
  %v284 = vsel %vm216, %v173, 0
  %v287 = vsel %vm216, %v174, 0
  %v290 = vsel %vm216, %v175, 0
  %v293 = vsel %vm216, %v176, 0
  %v296 = vsel %vm216, %v177, 0
  %v299 = vsel %vm216, %v178, 0
  %v302 = vsel %vm216, %v179, 0
  %v305 = vsel %vm216, %v180, 0
  %v308 = vsel %vm216, %v181, 0
  %v311 = vsel %vm216, %v182, 0
  %v314 = vsel %vm216, %v183, 0
  %v317 = vsel %vm216, %v184, 0
  %v320 = vsel %vm216, %v185, 0
  %v323 = vsel %vm216, %v186, 0
  %v326 = vsel %vm216, %v187, 0
  %v329 = vsel %vm216, %v188, 0
  %v332 = vsel %vm216, %v189, 0
  %v335 = vsel %vm216, %v190, 0
  %v338 = vsel %vm216, %v191, 0
  %v341 = vsel %vm216, %v192, 0
  %v344 = vsel %vm216, %v193, 0
  %v347 = vsel %vm216, %v194, 0
  %v350 = vsel %vm216, %v195, 0
  %v353 = vsel %vm216, %v196, 0
  %v356 = vsel %vm216, %v197, 0
  %v359 = vsel %vm216, %v198, 0
  %v362 = vsel %vm216, %v199, 0
  %v365 = vsel %vm216, %v200, 0
  %v368 = vsel %vm216, %v201, 0
  %v371 = vsel %vm216, %v202, 0
  %v374 = vsel %vm216, %v203, 0
  %v377 = vsel %vm216, %v204, 0
  %v380 = vsel %vm216, %v205, 0
  %v383 = vsel %vm216, %v206, 0
  %v386 = vsel %vm216, %v207, 0
  %v389 = vsel %vm216, %v208, 0
  %v392 = vsel %vm216, %v209, 0
  %v395 = vsel %vm216, %v210, 0
  %v398 = vsel %vm216, %v211, 0
  %v401 = vsel %vm216, %v212, 0
  %v404 = vsel %vm216, %v213, 0
  %v407 = vsel %vm216, %v214, 0
  %vm409 = vcmask 1043456
  %v411 = vsel %vm409, %v215, 0
  %413 = vmatprep.subr.mxu0 0.0
  %414 = vmatpush1.msra.mxu0 0.0
  %415 = vmatprep.subr.mxu0 0.0
  %416 = vmatpush1.msra.mxu0 0.0
  %417 = vmatprep.subr.mxu0 0.0
  %418 = vmatpush1.msra.mxu0 0.0
  %419 = vmatprep.subr.mxu0 0.0
  %420 = vmatpush1.msra.mxu0 0.0
  %421 = vmatprep.subr.mxu0 0.0
  %422 = vmatpush1.msra.mxu0 0.0
  %423 = vmatprep.subr.mxu0 0.0
  %424 = vmatpush1.msra.mxu0 0.0
  %425 = vmatprep.subr.mxu0 0.0
  %426 = vmatpush1.msra.mxu0 0.0
  %427 = vmatprep.subr.mxu0 0.0
  %428 = vmatpush1.msra.mxu0 0.0
  %429 = vmatprep.subr.mxu0 0.0
  %430 = vmatpush1.msra.mxu0 0.0
  %431 = vmatprep.subr.mxu0 0.0
  %432 = vmatpush1.msra.mxu0 0.0
  %433 = vmatprep.subr.mxu0 0.0
  %434 = vmatpush1.msra.mxu0 0.0
  %435 = vmatprep.subr.mxu0 0.0
  %436 = vmatpush1.msra.mxu0 0.0
  %437 = vmatprep.subr.mxu0 0.0
  %438 = vmatpush1.msra.mxu0 0.0
  %439 = vmatprep.subr.mxu0 0.0
  %440 = vmatpush1.msra.mxu0 0.0
  %441 = vmatprep.subr.mxu0 0.0
  %442 = vmatpush1.msra.mxu0 0.0
  %443 = vmatprep.subr.mxu0 0.0
  %444 = vmatpush1.msra.mxu0 %v411
  %445 = vmatprep.subr.mxu0 0.0
  %446 = vmatpush2.msra.mxu0 0.0
  %447 = vmatprep.subr.mxu0 0.0
  %448 = vmatpush2.msra.mxu0 0.0
  %449 = vmatprep.subr.mxu0 0.0
  %450 = vmatpush2.msra.mxu0 0.0
  %451 = vmatprep.subr.mxu0 0.0
  %452 = vmatpush2.msra.mxu0 0.0
  %453 = vmatprep.subr.mxu0 0.0
  %454 = vmatpush2.msra.mxu0 0.0
  %455 = vmatprep.subr.mxu0 0.0
  %456 = vmatpush2.msra.mxu0 0.0
  %457 = vmatprep.subr.mxu0 0.0
  %458 = vmatpush2.msra.mxu0 0.0
  %459 = vmatprep.subr.mxu0 0.0
  %460 = vmatpush2.msra.mxu0 0.0
  %461 = vmatprep.subr.mxu0 0.0
  %462 = vmatpush2.msra.mxu0 0.0
  %463 = vmatprep.subr.mxu0 0.0
  %464 = vmatpush2.msra.mxu0 0.0
  %465 = vmatprep.subr.mxu0 0.0
  %466 = vmatpush2.msra.mxu0 0.0
  %467 = vmatprep.subr.mxu0 0.0
  %468 = vmatpush2.msra.mxu0 0.0
  %469 = vmatprep.subr.mxu0 0.0
  %470 = vmatpush2.msra.mxu0 0.0
  %471 = vmatprep.subr.mxu0 0.0
  %472 = vmatpush2.msra.mxu0 0.0
  %473 = vmatprep.subr.mxu0 0.0
  %474 = vmatpush2.msra.mxu0 0.0
  %475 = vmatprep.subr.mxu0 0.0
  %476 = vmatpush2.msra.mxu0 0.0
  %477 = vmatprep.mubr.f32.mxu0 0.0
  %478 = vmatmul.mubr.f32.gmra.mxu0 %v218
  %v479 = vpop.f32.mrf.mxu0
  %v480 = vadd.f32 0.0, %v479
  %v481 = vpop.f32.mrf.mxu0
  %482 = vmatprep.mubr.f32.mxu0 0.0
  %483 = vmatmul.mubr.f32.gmra.mxu0 %v221
  %v484 = vpop.f32.mrf.mxu0
  %v485 = vadd.f32 0.0, %v484
  %v486 = vpop.f32.mrf.mxu0
  %487 = vmatprep.mubr.f32.mxu0 0.0
  %488 = vmatmul.mubr.f32.gmra.mxu0 %v224
  %v489 = vpop.f32.mrf.mxu0
  %v490 = vadd.f32 0.0, %v489
  %v491 = vpop.f32.mrf.mxu0
  %492 = vmatprep.mubr.f32.mxu0 0.0
  %493 = vmatmul.mubr.f32.gmra.mxu0 %v227
  %v494 = vpop.f32.mrf.mxu0
  %v495 = vadd.f32 0.0, %v494
  %v496 = vpop.f32.mrf.mxu0
  %497 = vmatprep.mubr.f32.mxu0 0.0
  %498 = vmatmul.mubr.f32.gmra.mxu0 %v230
  %v499 = vpop.f32.mrf.mxu0
  %v500 = vadd.f32 0.0, %v499
  %v501 = vpop.f32.mrf.mxu0
  %502 = vmatprep.mubr.f32.mxu0 0.0
  %503 = vmatmul.mubr.f32.gmra.mxu0 %v233
  %v504 = vpop.f32.mrf.mxu0
  %v505 = vadd.f32 0.0, %v504
  %v506 = vpop.f32.mrf.mxu0
  %507 = vmatprep.mubr.f32.mxu0 0.0
  %508 = vmatmul.mubr.f32.gmra.mxu0 %v236
  %v509 = vpop.f32.mrf.mxu0
  %v510 = vadd.f32 0.0, %v509
  %v511 = vpop.f32.mrf.mxu0
  %512 = vmatprep.mubr.f32.mxu0 0.0
  %513 = vmatmul.mubr.f32.gmra.mxu0 %v239
  %v514 = vpop.f32.mrf.mxu0
  %v515 = vadd.f32 0.0, %v514
  %v516 = vpop.f32.mrf.mxu0
  %517 = vmatprep.mubr.f32.mxu0 0.0
  %518 = vmatmul.mubr.f32.gmra.mxu0 %v242
  %v519 = vpop.f32.mrf.mxu0
  %v520 = vadd.f32 0.0, %v519
  %v521 = vpop.f32.mrf.mxu0
  %522 = vmatprep.mubr.f32.mxu0 0.0
  %523 = vmatmul.mubr.f32.gmra.mxu0 %v245
  %v524 = vpop.f32.mrf.mxu0
  %v525 = vadd.f32 0.0, %v524
  %v526 = vpop.f32.mrf.mxu0
  %527 = vmatprep.mubr.f32.mxu0 0.0
  %528 = vmatmul.mubr.f32.gmra.mxu0 %v248
  %v529 = vpop.f32.mrf.mxu0
  %v530 = vadd.f32 0.0, %v529
  %v531 = vpop.f32.mrf.mxu0
  %532 = vmatprep.mubr.f32.mxu0 0.0
  %533 = vmatmul.mubr.f32.gmra.mxu0 %v251
  %v534 = vpop.f32.mrf.mxu0
  %v535 = vadd.f32 0.0, %v534
  %v536 = vpop.f32.mrf.mxu0
  %537 = vmatprep.mubr.f32.mxu0 0.0
  %538 = vmatmul.mubr.f32.gmra.mxu0 %v254
  %v539 = vpop.f32.mrf.mxu0
  %v540 = vadd.f32 0.0, %v539
  %v541 = vpop.f32.mrf.mxu0
  %542 = vmatprep.mubr.f32.mxu0 0.0
  %543 = vmatmul.mubr.f32.gmra.mxu0 %v257
  %v544 = vpop.f32.mrf.mxu0
  %v545 = vadd.f32 0.0, %v544
  %v546 = vpop.f32.mrf.mxu0
  %547 = vmatprep.mubr.f32.mxu0 0.0
  %548 = vmatmul.mubr.f32.gmra.mxu0 %v260
  %v549 = vpop.f32.mrf.mxu0
  %v550 = vadd.f32 0.0, %v549
  %v551 = vpop.f32.mrf.mxu0
  %552 = vmatprep.mubr.f32.mxu0 0.0
  %553 = vmatmul.mubr.f32.gmra.mxu0 %v263
  %v554 = vpop.f32.mrf.mxu0
  %v555 = vadd.f32 0.0, %v554
  %v556 = vpop.f32.mrf.mxu0
  %557 = vmatprep.mubr.f32.mxu0 0.0
  %558 = vmatmul.mubr.f32.gmra.mxu0 %v266
  %v559 = vpop.f32.mrf.mxu0
  %v560 = vadd.f32 0.0, %v559
  %v561 = vpop.f32.mrf.mxu0
  %562 = vmatprep.mubr.f32.mxu0 0.0
  %563 = vmatmul.mubr.f32.gmra.mxu0 %v269
  %v564 = vpop.f32.mrf.mxu0
  %v565 = vadd.f32 0.0, %v564
  %v566 = vpop.f32.mrf.mxu0
  %567 = vmatprep.mubr.f32.mxu0 0.0
  %568 = vmatmul.mubr.f32.gmra.mxu0 %v272
  %v569 = vpop.f32.mrf.mxu0
  %v570 = vadd.f32 0.0, %v569
  %v571 = vpop.f32.mrf.mxu0
  %572 = vmatprep.mubr.f32.mxu0 0.0
  %573 = vmatmul.mubr.f32.gmra.mxu0 %v275
  %v574 = vpop.f32.mrf.mxu0
  %v575 = vadd.f32 0.0, %v574
  %v576 = vpop.f32.mrf.mxu0
  %577 = vmatprep.mubr.f32.mxu0 0.0
  %578 = vmatmul.mubr.f32.gmra.mxu0 %v278
  %v579 = vpop.f32.mrf.mxu0
  %v580 = vadd.f32 0.0, %v579
  %v581 = vpop.f32.mrf.mxu0
  %582 = vmatprep.mubr.f32.mxu0 0.0
  %583 = vmatmul.mubr.f32.gmra.mxu0 %v281
  %v584 = vpop.f32.mrf.mxu0
  %v585 = vadd.f32 0.0, %v584
  %v586 = vpop.f32.mrf.mxu0
  %587 = vmatprep.mubr.f32.mxu0 0.0
  %588 = vmatmul.mubr.f32.gmra.mxu0 %v284
  %v589 = vpop.f32.mrf.mxu0
  %v590 = vadd.f32 0.0, %v589
  %v591 = vpop.f32.mrf.mxu0
  %592 = vmatprep.mubr.f32.mxu0 0.0
  %593 = vmatmul.mubr.f32.gmra.mxu0 %v287
  %v594 = vpop.f32.mrf.mxu0
  %v595 = vadd.f32 0.0, %v594
  %v596 = vpop.f32.mrf.mxu0
  %597 = vmatprep.mubr.f32.mxu0 0.0
  %598 = vmatmul.mubr.f32.gmra.mxu0 %v290
  %v599 = vpop.f32.mrf.mxu0
  %v600 = vadd.f32 0.0, %v599
  %v601 = vpop.f32.mrf.mxu0
  %602 = vmatprep.mubr.f32.mxu0 0.0
  %603 = vmatmul.mubr.f32.gmra.mxu0 %v293
  %v604 = vpop.f32.mrf.mxu0
  %v605 = vadd.f32 0.0, %v604
  %v606 = vpop.f32.mrf.mxu0
  %607 = vmatprep.mubr.f32.mxu0 0.0
  %608 = vmatmul.mubr.f32.gmra.mxu0 %v296
  %v609 = vpop.f32.mrf.mxu0
  %v610 = vadd.f32 0.0, %v609
  %v611 = vpop.f32.mrf.mxu0
  %612 = vmatprep.mubr.f32.mxu0 0.0
  %613 = vmatmul.mubr.f32.gmra.mxu0 %v299
  %v614 = vpop.f32.mrf.mxu0
  %v615 = vadd.f32 0.0, %v614
  %v616 = vpop.f32.mrf.mxu0
  %617 = vmatprep.mubr.f32.mxu0 0.0
  %618 = vmatmul.mubr.f32.gmra.mxu0 %v302
  %v619 = vpop.f32.mrf.mxu0
  %v620 = vadd.f32 0.0, %v619
  %v621 = vpop.f32.mrf.mxu0
  %622 = vmatprep.mubr.f32.mxu0 0.0
  %623 = vmatmul.mubr.f32.gmra.mxu0 %v305
  %v624 = vpop.f32.mrf.mxu0
  %v625 = vadd.f32 0.0, %v624
  %v626 = vpop.f32.mrf.mxu0
  %627 = vmatprep.mubr.f32.mxu0 0.0
  %628 = vmatmul.mubr.f32.gmra.mxu0 %v308
  %v629 = vpop.f32.mrf.mxu0
  %v630 = vadd.f32 0.0, %v629
  %v631 = vpop.f32.mrf.mxu0
  %632 = vmatprep.mubr.f32.mxu0 0.0
  %633 = vmatmul.mubr.f32.gmra.mxu0 %v311
  %v634 = vpop.f32.mrf.mxu0
  %v635 = vadd.f32 0.0, %v634
  %v636 = vpop.f32.mrf.mxu0
  %637 = vmatprep.mubr.f32.mxu0 0.0
  %638 = vmatmul.mubr.f32.gmra.mxu0 %v314
  %v639 = vpop.f32.mrf.mxu0
  %v640 = vadd.f32 0.0, %v639
  %v641 = vpop.f32.mrf.mxu0
  %642 = vmatprep.mubr.f32.mxu0 0.0
  %643 = vmatmul.mubr.f32.gmra.mxu0 %v317
  %v644 = vpop.f32.mrf.mxu0
  %v645 = vadd.f32 0.0, %v644
  %v646 = vpop.f32.mrf.mxu0
  %647 = vmatprep.mubr.f32.mxu0 0.0
  %648 = vmatmul.mubr.f32.gmra.mxu0 %v320
  %v649 = vpop.f32.mrf.mxu0
  %v650 = vadd.f32 0.0, %v649
  %v651 = vpop.f32.mrf.mxu0
  %652 = vmatprep.mubr.f32.mxu0 0.0
  %653 = vmatmul.mubr.f32.gmra.mxu0 %v323
  %v654 = vpop.f32.mrf.mxu0
  %v655 = vadd.f32 0.0, %v654
  %v656 = vpop.f32.mrf.mxu0
  %657 = vmatprep.mubr.f32.mxu0 0.0
  %658 = vmatmul.mubr.f32.gmra.mxu0 %v326
  %v659 = vpop.f32.mrf.mxu0
  %v660 = vadd.f32 0.0, %v659
  %v661 = vpop.f32.mrf.mxu0
  %662 = vmatprep.mubr.f32.mxu0 0.0
  %663 = vmatmul.mubr.f32.gmra.mxu0 %v329
  %v664 = vpop.f32.mrf.mxu0
  %v665 = vadd.f32 0.0, %v664
  %v666 = vpop.f32.mrf.mxu0
  %667 = vmatprep.mubr.f32.mxu0 0.0
  %668 = vmatmul.mubr.f32.gmra.mxu0 %v332
  %v669 = vpop.f32.mrf.mxu0
  %v670 = vadd.f32 0.0, %v669
  %v671 = vpop.f32.mrf.mxu0
  %672 = vmatprep.mubr.f32.mxu0 0.0
  %673 = vmatmul.mubr.f32.gmra.mxu0 %v335
  %v674 = vpop.f32.mrf.mxu0
  %v675 = vadd.f32 0.0, %v674
  %v676 = vpop.f32.mrf.mxu0
  %677 = vmatprep.mubr.f32.mxu0 0.0
  %678 = vmatmul.mubr.f32.gmra.mxu0 %v338
  %v679 = vpop.f32.mrf.mxu0
  %v680 = vadd.f32 0.0, %v679
  %v681 = vpop.f32.mrf.mxu0
  %682 = vmatprep.mubr.f32.mxu0 0.0
  %683 = vmatmul.mubr.f32.gmra.mxu0 %v341
  %v684 = vpop.f32.mrf.mxu0
  %v685 = vadd.f32 0.0, %v684
  %v686 = vpop.f32.mrf.mxu0
  %687 = vmatprep.mubr.f32.mxu0 0.0
  %688 = vmatmul.mubr.f32.gmra.mxu0 %v344
  %v689 = vpop.f32.mrf.mxu0
  %v690 = vadd.f32 0.0, %v689
  %v691 = vpop.f32.mrf.mxu0
  %692 = vmatprep.mubr.f32.mxu0 0.0
  %693 = vmatmul.mubr.f32.gmra.mxu0 %v347
  %v694 = vpop.f32.mrf.mxu0
  %v695 = vadd.f32 0.0, %v694
  %v696 = vpop.f32.mrf.mxu0
  %697 = vmatprep.mubr.f32.mxu0 0.0
  %698 = vmatmul.mubr.f32.gmra.mxu0 %v350
  %v699 = vpop.f32.mrf.mxu0
  %v700 = vadd.f32 0.0, %v699
  %v701 = vpop.f32.mrf.mxu0
  %702 = vmatprep.mubr.f32.mxu0 0.0
  %703 = vmatmul.mubr.f32.gmra.mxu0 %v353
  %v704 = vpop.f32.mrf.mxu0
  %v705 = vadd.f32 0.0, %v704
  %v706 = vpop.f32.mrf.mxu0
  %707 = vmatprep.mubr.f32.mxu0 0.0
  %708 = vmatmul.mubr.f32.gmra.mxu0 %v356
  %v709 = vpop.f32.mrf.mxu0
  %v710 = vadd.f32 0.0, %v709
  %v711 = vpop.f32.mrf.mxu0
  %712 = vmatprep.mubr.f32.mxu0 0.0
  %713 = vmatmul.mubr.f32.gmra.mxu0 %v359
  %v714 = vpop.f32.mrf.mxu0
  %v715 = vadd.f32 0.0, %v714
  %v716 = vpop.f32.mrf.mxu0
  %717 = vmatprep.mubr.f32.mxu0 0.0
  %718 = vmatmul.mubr.f32.gmra.mxu0 %v362
  %v719 = vpop.f32.mrf.mxu0
  %v720 = vadd.f32 0.0, %v719
  %v721 = vpop.f32.mrf.mxu0
  %722 = vmatprep.mubr.f32.mxu0 0.0
  %723 = vmatmul.mubr.f32.gmra.mxu0 %v365
  %v724 = vpop.f32.mrf.mxu0
  %v725 = vadd.f32 0.0, %v724
  %v726 = vpop.f32.mrf.mxu0
  %727 = vmatprep.mubr.f32.mxu0 0.0
  %728 = vmatmul.mubr.f32.gmra.mxu0 %v368
  %v729 = vpop.f32.mrf.mxu0
  %v730 = vadd.f32 0.0, %v729
  %v731 = vpop.f32.mrf.mxu0
  %732 = vmatprep.mubr.f32.mxu0 0.0
  %733 = vmatmul.mubr.f32.gmra.mxu0 %v371
  %v734 = vpop.f32.mrf.mxu0
  %v735 = vadd.f32 0.0, %v734
  %v736 = vpop.f32.mrf.mxu0
  %737 = vmatprep.mubr.f32.mxu0 0.0
  %738 = vmatmul.mubr.f32.gmra.mxu0 %v374
  %v739 = vpop.f32.mrf.mxu0
  %v740 = vadd.f32 0.0, %v739
  %v741 = vpop.f32.mrf.mxu0
  %742 = vmatprep.mubr.f32.mxu0 0.0
  %743 = vmatmul.mubr.f32.gmra.mxu0 %v377
  %v744 = vpop.f32.mrf.mxu0
  %v745 = vadd.f32 0.0, %v744
  %v746 = vpop.f32.mrf.mxu0
  %747 = vmatprep.mubr.f32.mxu0 0.0
  %748 = vmatmul.mubr.f32.gmra.mxu0 %v380
  %v749 = vpop.f32.mrf.mxu0
  %v750 = vadd.f32 0.0, %v749
  %v751 = vpop.f32.mrf.mxu0
  %752 = vmatprep.mubr.f32.mxu0 0.0
  %753 = vmatmul.mubr.f32.gmra.mxu0 %v383
  %v754 = vpop.f32.mrf.mxu0
  %v755 = vadd.f32 0.0, %v754
  %v756 = vpop.f32.mrf.mxu0
  %757 = vmatprep.mubr.f32.mxu0 0.0
  %758 = vmatmul.mubr.f32.gmra.mxu0 %v386
  %v759 = vpop.f32.mrf.mxu0
  %v760 = vadd.f32 0.0, %v759
  %v761 = vpop.f32.mrf.mxu0
  %762 = vmatprep.mubr.f32.mxu0 0.0
  %763 = vmatmul.mubr.f32.gmra.mxu0 %v389
  %v764 = vpop.f32.mrf.mxu0
  %v765 = vadd.f32 0.0, %v764
  %v766 = vpop.f32.mrf.mxu0
  %767 = vmatprep.mubr.f32.mxu0 0.0
  %768 = vmatmul.mubr.f32.gmra.mxu0 %v392
  %v769 = vpop.f32.mrf.mxu0
  %v770 = vadd.f32 0.0, %v769
  %v771 = vpop.f32.mrf.mxu0
  %772 = vmatprep.mubr.f32.mxu0 0.0
  %773 = vmatmul.mubr.f32.gmra.mxu0 %v395
  %v774 = vpop.f32.mrf.mxu0
  %v775 = vadd.f32 0.0, %v774
  %v776 = vpop.f32.mrf.mxu0
  %777 = vmatprep.mubr.f32.mxu0 0.0
  %778 = vmatmul.mubr.f32.gmra.mxu0 %v398
  %v779 = vpop.f32.mrf.mxu0
  %v780 = vadd.f32 0.0, %v779
  %v781 = vpop.f32.mrf.mxu0
  %782 = vmatprep.mubr.f32.mxu0 0.0
  %783 = vmatmul.mubr.f32.gmra.mxu0 %v401
  %v784 = vpop.f32.mrf.mxu0
  %v785 = vadd.f32 0.0, %v784
  %v786 = vpop.f32.mrf.mxu0
  %787 = vmatprep.mubr.f32.mxu0 0.0
  %788 = vmatmul.mubr.f32.gmra.mxu0 %v404
  %v789 = vpop.f32.mrf.mxu0
  %v790 = vadd.f32 0.0, %v789
  %v791 = vpop.f32.mrf.mxu0
  %792 = vmatprep.mubr.f32.mxu0 0.0
  %793 = vmatmul.mubr.f32.gmra.mxu0 %v407
  %v794 = vpop.f32.mrf.mxu0
  %v795 = vadd.f32 0.0, %v794
  %v796 = vpop.f32.mrf.mxu0
  %797 = vdwg.mxu0
  %v799 = vsel %vm216, %v86, 0
  %v802 = vsel %vm216, %v87, 0
  %v805 = vsel %vm216, %v88, 0
  %v808 = vsel %vm216, %v89, 0
  %v811 = vsel %vm216, %v90, 0
  %v814 = vsel %vm216, %v91, 0
  %v817 = vsel %vm216, %v92, 0
  %v820 = vsel %vm216, %v93, 0
  %v823 = vsel %vm216, %v94, 0
  %v826 = vsel %vm216, %v95, 0
  %v829 = vsel %vm216, %v96, 0
  %v832 = vsel %vm216, %v97, 0
  %v835 = vsel %vm216, %v98, 0
  %v838 = vsel %vm216, %v99, 0
  %v841 = vsel %vm216, %v100, 0
  %v844 = vsel %vm216, %v101, 0
  %v847 = vsel %vm216, %v102, 0
  %v850 = vsel %vm216, %v103, 0
  %v853 = vsel %vm216, %v104, 0
  %v856 = vsel %vm216, %v105, 0
  %v859 = vsel %vm216, %v106, 0
  %v862 = vsel %vm216, %v107, 0
  %v865 = vsel %vm216, %v108, 0
  %v868 = vsel %vm216, %v109, 0
  %v871 = vsel %vm216, %v110, 0
  %v874 = vsel %vm216, %v111, 0
  %v877 = vsel %vm216, %v112, 0
  %v880 = vsel %vm216, %v113, 0
  %v883 = vsel %vm216, %v114, 0
  %v886 = vsel %vm216, %v115, 0
  %v889 = vsel %vm216, %v116, 0
  %v892 = vsel %vm216, %v117, 0
  %v895 = vsel %vm216, %v118, 0
  %v898 = vsel %vm216, %v119, 0
  %v901 = vsel %vm216, %v120, 0
  %v904 = vsel %vm216, %v121, 0
  %v907 = vsel %vm216, %v122, 0
  %v910 = vsel %vm216, %v123, 0
  %v913 = vsel %vm216, %v124, 0
  %v916 = vsel %vm216, %v125, 0
  %v919 = vsel %vm216, %v126, 0
  %v922 = vsel %vm216, %v127, 0
  %v925 = vsel %vm216, %v128, 0
  %v928 = vsel %vm216, %v129, 0
  %v931 = vsel %vm216, %v130, 0
  %v934 = vsel %vm216, %v131, 0
  %v937 = vsel %vm216, %v132, 0
  %v940 = vsel %vm216, %v133, 0
  %v943 = vsel %vm216, %v134, 0
  %v946 = vsel %vm216, %v135, 0
  %v949 = vsel %vm216, %v136, 0
  %v952 = vsel %vm216, %v137, 0
  %v955 = vsel %vm216, %v138, 0
  %v958 = vsel %vm216, %v139, 0
  %v961 = vsel %vm216, %v140, 0
  %v964 = vsel %vm216, %v141, 0
  %v967 = vsel %vm216, %v142, 0
  %v970 = vsel %vm216, %v143, 0
  %v973 = vsel %vm216, %v144, 0
  %v976 = vsel %vm216, %v145, 0
  %v979 = vsel %vm216, %v146, 0
  %v982 = vsel %vm216, %v147, 0
  %v985 = vsel %vm216, %v148, 0
  %v988 = vsel %vm216, %v149, 0
  %v991 = vsel %vm409, %v150, 0
  %993 = vmatprep.subr.mxu0 0.0
  %994 = vmatpush1.msra.mxu0 0.0
  %995 = vmatprep.subr.mxu0 0.0
  %996 = vmatpush1.msra.mxu0 0.0
  %997 = vmatprep.subr.mxu0 0.0
  %998 = vmatpush1.msra.mxu0 0.0
  %999 = vmatprep.subr.mxu0 0.0
  %1000 = vmatpush1.msra.mxu0 0.0
  %1001 = vmatprep.subr.mxu0 0.0
  %1002 = vmatpush1.msra.mxu0 0.0
  %1003 = vmatprep.subr.mxu0 0.0
  %1004 = vmatpush1.msra.mxu0 0.0
  %1005 = vmatprep.subr.mxu0 0.0
  %1006 = vmatpush1.msra.mxu0 0.0
  %1007 = vmatprep.subr.mxu0 0.0
  %1008 = vmatpush1.msra.mxu0 0.0
  %1009 = vmatprep.subr.mxu0 0.0
  %1010 = vmatpush1.msra.mxu0 0.0
  %1011 = vmatprep.subr.mxu0 0.0
  %1012 = vmatpush1.msra.mxu0 0.0
  %1013 = vmatprep.subr.mxu0 0.0
  %1014 = vmatpush1.msra.mxu0 0.0
  %1015 = vmatprep.subr.mxu0 0.0
  %1016 = vmatpush1.msra.mxu0 0.0
  %1017 = vmatprep.subr.mxu0 0.0
  %1018 = vmatpush1.msra.mxu0 0.0
  %1019 = vmatprep.subr.mxu0 0.0
  %1020 = vmatpush1.msra.mxu0 0.0
  %1021 = vmatprep.subr.mxu0 0.0
  %1022 = vmatpush1.msra.mxu0 0.0
  %1023 = vmatprep.subr.mxu0 0.0
  %1024 = vmatpush1.msra.mxu0 %v991
  %1025 = vmatprep.subr.mxu0 0.0
  %1026 = vmatpush2.msra.mxu0 0.0
  %1027 = vmatprep.subr.mxu0 0.0
  %1028 = vmatpush2.msra.mxu0 0.0
  %1029 = vmatprep.subr.mxu0 0.0
  %1030 = vmatpush2.msra.mxu0 0.0
  %1031 = vmatprep.subr.mxu0 0.0
  %1032 = vmatpush2.msra.mxu0 0.0
  %1033 = vmatprep.subr.mxu0 0.0
  %1034 = vmatpush2.msra.mxu0 0.0
  %1035 = vmatprep.subr.mxu0 0.0
  %1036 = vmatpush2.msra.mxu0 0.0
  %1037 = vmatprep.subr.mxu0 0.0
  %1038 = vmatpush2.msra.mxu0 0.0
  %1039 = vmatprep.subr.mxu0 0.0
  %1040 = vmatpush2.msra.mxu0 0.0
  %1041 = vmatprep.subr.mxu0 0.0
  %1042 = vmatpush2.msra.mxu0 0.0
  %1043 = vmatprep.subr.mxu0 0.0
  %1044 = vmatpush2.msra.mxu0 0.0
  %1045 = vmatprep.subr.mxu0 0.0
  %1046 = vmatpush2.msra.mxu0 0.0
  %1047 = vmatprep.subr.mxu0 0.0
  %1048 = vmatpush2.msra.mxu0 0.0
  %1049 = vmatprep.subr.mxu0 0.0
  %1050 = vmatpush2.msra.mxu0 0.0
  %1051 = vmatprep.subr.mxu0 0.0
  %1052 = vmatpush2.msra.mxu0 0.0
  %1053 = vmatprep.subr.mxu0 0.0
  %1054 = vmatpush2.msra.mxu0 0.0
  %1055 = vmatprep.subr.mxu0 0.0
  %1056 = vmatpush2.msra.mxu0 0.0
  %1057 = vmatprep.mubr.f32.mxu0 0.0
  %1058 = vmatmul.mubr.f32.gmra.mxu0 %v799
  %v1059 = vpop.f32.mrf.mxu0
  %v1060 = vadd.f32 %v480, %v1059
  %v1061 = vpop.f32.mrf.mxu0
  %1062 = vmatprep.mubr.f32.mxu0 0.0
  %1063 = vmatmul.mubr.f32.gmra.mxu0 %v802
  %v1064 = vpop.f32.mrf.mxu0
  %v1065 = vadd.f32 %v485, %v1064
  %v1066 = vpop.f32.mrf.mxu0
  %1067 = vmatprep.mubr.f32.mxu0 0.0
  %1068 = vmatmul.mubr.f32.gmra.mxu0 %v805
  %v1069 = vpop.f32.mrf.mxu0
  %v1070 = vadd.f32 %v490, %v1069
  %v1071 = vpop.f32.mrf.mxu0
  %1072 = vmatprep.mubr.f32.mxu0 0.0
  %1073 = vmatmul.mubr.f32.gmra.mxu0 %v808
  %v1074 = vpop.f32.mrf.mxu0
  %v1075 = vadd.f32 %v495, %v1074
  %v1076 = vpop.f32.mrf.mxu0
  %1077 = vmatprep.mubr.f32.mxu0 0.0
  %1078 = vmatmul.mubr.f32.gmra.mxu0 %v811
  %v1079 = vpop.f32.mrf.mxu0
  %v1080 = vadd.f32 %v500, %v1079
  %v1081 = vpop.f32.mrf.mxu0
  %1082 = vmatprep.mubr.f32.mxu0 0.0
  %1083 = vmatmul.mubr.f32.gmra.mxu0 %v814
  %v1084 = vpop.f32.mrf.mxu0
  %v1085 = vadd.f32 %v505, %v1084
  %v1086 = vpop.f32.mrf.mxu0
  %1087 = vmatprep.mubr.f32.mxu0 0.0
  %1088 = vmatmul.mubr.f32.gmra.mxu0 %v817
  %v1089 = vpop.f32.mrf.mxu0
  %v1090 = vadd.f32 %v510, %v1089
  %v1091 = vpop.f32.mrf.mxu0
  %1092 = vmatprep.mubr.f32.mxu0 0.0
  %1093 = vmatmul.mubr.f32.gmra.mxu0 %v820
  %v1094 = vpop.f32.mrf.mxu0
  %v1095 = vadd.f32 %v515, %v1094
  %v1096 = vpop.f32.mrf.mxu0
  %1097 = vmatprep.mubr.f32.mxu0 0.0
  %1098 = vmatmul.mubr.f32.gmra.mxu0 %v823
  %v1099 = vpop.f32.mrf.mxu0
  %v1100 = vadd.f32 %v520, %v1099
  %v1101 = vpop.f32.mrf.mxu0
  %1102 = vmatprep.mubr.f32.mxu0 0.0
  %1103 = vmatmul.mubr.f32.gmra.mxu0 %v826
  %v1104 = vpop.f32.mrf.mxu0
  %v1105 = vadd.f32 %v525, %v1104
  %v1106 = vpop.f32.mrf.mxu0
  %1107 = vmatprep.mubr.f32.mxu0 0.0
  %1108 = vmatmul.mubr.f32.gmra.mxu0 %v829
  %v1109 = vpop.f32.mrf.mxu0
  %v1110 = vadd.f32 %v530, %v1109
  %v1111 = vpop.f32.mrf.mxu0
  %1112 = vmatprep.mubr.f32.mxu0 0.0
  %1113 = vmatmul.mubr.f32.gmra.mxu0 %v832
  %v1114 = vpop.f32.mrf.mxu0
  %v1115 = vadd.f32 %v535, %v1114
  %v1116 = vpop.f32.mrf.mxu0
  %1117 = vmatprep.mubr.f32.mxu0 0.0
  %1118 = vmatmul.mubr.f32.gmra.mxu0 %v835
  %v1119 = vpop.f32.mrf.mxu0
  %v1120 = vadd.f32 %v540, %v1119
  %v1121 = vpop.f32.mrf.mxu0
  %1122 = vmatprep.mubr.f32.mxu0 0.0
  %1123 = vmatmul.mubr.f32.gmra.mxu0 %v838
  %v1124 = vpop.f32.mrf.mxu0
  %v1125 = vadd.f32 %v545, %v1124
  %v1126 = vpop.f32.mrf.mxu0
  %1127 = vmatprep.mubr.f32.mxu0 0.0
  %1128 = vmatmul.mubr.f32.gmra.mxu0 %v841
  %v1129 = vpop.f32.mrf.mxu0
  %v1130 = vadd.f32 %v550, %v1129
  %v1131 = vpop.f32.mrf.mxu0
  %1132 = vmatprep.mubr.f32.mxu0 0.0
  %1133 = vmatmul.mubr.f32.gmra.mxu0 %v844
  %v1134 = vpop.f32.mrf.mxu0
  %v1135 = vadd.f32 %v555, %v1134
  %v1136 = vpop.f32.mrf.mxu0
  %1137 = vmatprep.mubr.f32.mxu0 0.0
  %1138 = vmatmul.mubr.f32.gmra.mxu0 %v847
  %v1139 = vpop.f32.mrf.mxu0
  %v1140 = vadd.f32 %v560, %v1139
  %v1141 = vpop.f32.mrf.mxu0
  %1142 = vmatprep.mubr.f32.mxu0 0.0
  %1143 = vmatmul.mubr.f32.gmra.mxu0 %v850
  %v1144 = vpop.f32.mrf.mxu0
  %v1145 = vadd.f32 %v565, %v1144
  %v1146 = vpop.f32.mrf.mxu0
  %1147 = vmatprep.mubr.f32.mxu0 0.0
  %1148 = vmatmul.mubr.f32.gmra.mxu0 %v853
  %v1149 = vpop.f32.mrf.mxu0
  %v1150 = vadd.f32 %v570, %v1149
  %v1151 = vpop.f32.mrf.mxu0
  %1152 = vmatprep.mubr.f32.mxu0 0.0
  %1153 = vmatmul.mubr.f32.gmra.mxu0 %v856
  %v1154 = vpop.f32.mrf.mxu0
  %v1155 = vadd.f32 %v575, %v1154
  %v1156 = vpop.f32.mrf.mxu0
  %1157 = vmatprep.mubr.f32.mxu0 0.0
  %1158 = vmatmul.mubr.f32.gmra.mxu0 %v859
  %v1159 = vpop.f32.mrf.mxu0
  %v1160 = vadd.f32 %v580, %v1159
  %v1161 = vpop.f32.mrf.mxu0
  %1162 = vmatprep.mubr.f32.mxu0 0.0
  %1163 = vmatmul.mubr.f32.gmra.mxu0 %v862
  %v1164 = vpop.f32.mrf.mxu0
  %v1165 = vadd.f32 %v585, %v1164
  %v1166 = vpop.f32.mrf.mxu0
  %1167 = vmatprep.mubr.f32.mxu0 0.0
  %1168 = vmatmul.mubr.f32.gmra.mxu0 %v865
  %v1169 = vpop.f32.mrf.mxu0
  %v1170 = vadd.f32 %v590, %v1169
  %v1171 = vpop.f32.mrf.mxu0
  %1172 = vmatprep.mubr.f32.mxu0 0.0
  %1173 = vmatmul.mubr.f32.gmra.mxu0 %v868
  %v1174 = vpop.f32.mrf.mxu0
  %v1175 = vadd.f32 %v595, %v1174
  %v1176 = vpop.f32.mrf.mxu0
  %1177 = vmatprep.mubr.f32.mxu0 0.0
  %1178 = vmatmul.mubr.f32.gmra.mxu0 %v871
  %v1179 = vpop.f32.mrf.mxu0
  %v1180 = vadd.f32 %v600, %v1179
  %v1181 = vpop.f32.mrf.mxu0
  %1182 = vmatprep.mubr.f32.mxu0 0.0
  %1183 = vmatmul.mubr.f32.gmra.mxu0 %v874
  %v1184 = vpop.f32.mrf.mxu0
  %v1185 = vadd.f32 %v605, %v1184
  %v1186 = vpop.f32.mrf.mxu0
  %1187 = vmatprep.mubr.f32.mxu0 0.0
  %1188 = vmatmul.mubr.f32.gmra.mxu0 %v877
  %v1189 = vpop.f32.mrf.mxu0
  %v1190 = vadd.f32 %v610, %v1189
  %v1191 = vpop.f32.mrf.mxu0
  %1192 = vmatprep.mubr.f32.mxu0 0.0
  %1193 = vmatmul.mubr.f32.gmra.mxu0 %v880
  %v1194 = vpop.f32.mrf.mxu0
  %v1195 = vadd.f32 %v615, %v1194
  %v1196 = vpop.f32.mrf.mxu0
  %1197 = vmatprep.mubr.f32.mxu0 0.0
  %1198 = vmatmul.mubr.f32.gmra.mxu0 %v883
  %v1199 = vpop.f32.mrf.mxu0
  %v1200 = vadd.f32 %v620, %v1199
  %v1201 = vpop.f32.mrf.mxu0
  %1202 = vmatprep.mubr.f32.mxu0 0.0
  %1203 = vmatmul.mubr.f32.gmra.mxu0 %v886
  %v1204 = vpop.f32.mrf.mxu0
  %v1205 = vadd.f32 %v625, %v1204
  %v1206 = vpop.f32.mrf.mxu0
  %1207 = vmatprep.mubr.f32.mxu0 0.0
  %1208 = vmatmul.mubr.f32.gmra.mxu0 %v889
  %v1209 = vpop.f32.mrf.mxu0
  %v1210 = vadd.f32 %v630, %v1209
  %v1211 = vpop.f32.mrf.mxu0
  %1212 = vmatprep.mubr.f32.mxu0 0.0
  %1213 = vmatmul.mubr.f32.gmra.mxu0 %v892
  %v1214 = vpop.f32.mrf.mxu0
  %v1215 = vadd.f32 %v635, %v1214
  %v1216 = vpop.f32.mrf.mxu0
  %1217 = vmatprep.mubr.f32.mxu0 0.0
  %1218 = vmatmul.mubr.f32.gmra.mxu0 %v895
  %v1219 = vpop.f32.mrf.mxu0
  %v1220 = vadd.f32 %v640, %v1219
  %v1221 = vpop.f32.mrf.mxu0
  %1222 = vmatprep.mubr.f32.mxu0 0.0
  %1223 = vmatmul.mubr.f32.gmra.mxu0 %v898
  %v1224 = vpop.f32.mrf.mxu0
  %v1225 = vadd.f32 %v645, %v1224
  %v1226 = vpop.f32.mrf.mxu0
  %1227 = vmatprep.mubr.f32.mxu0 0.0
  %1228 = vmatmul.mubr.f32.gmra.mxu0 %v901
  %v1229 = vpop.f32.mrf.mxu0
  %v1230 = vadd.f32 %v650, %v1229
  %v1231 = vpop.f32.mrf.mxu0
  %1232 = vmatprep.mubr.f32.mxu0 0.0
  %1233 = vmatmul.mubr.f32.gmra.mxu0 %v904
  %v1234 = vpop.f32.mrf.mxu0
  %v1235 = vadd.f32 %v655, %v1234
  %v1236 = vpop.f32.mrf.mxu0
  %1237 = vmatprep.mubr.f32.mxu0 0.0
  %1238 = vmatmul.mubr.f32.gmra.mxu0 %v907
  %v1239 = vpop.f32.mrf.mxu0
  %v1240 = vadd.f32 %v660, %v1239
  %v1241 = vpop.f32.mrf.mxu0
  %1242 = vmatprep.mubr.f32.mxu0 0.0
  %1243 = vmatmul.mubr.f32.gmra.mxu0 %v910
  %v1244 = vpop.f32.mrf.mxu0
  %v1245 = vadd.f32 %v665, %v1244
  %v1246 = vpop.f32.mrf.mxu0
  %1247 = vmatprep.mubr.f32.mxu0 0.0
  %1248 = vmatmul.mubr.f32.gmra.mxu0 %v913
  %v1249 = vpop.f32.mrf.mxu0
  %v1250 = vadd.f32 %v670, %v1249
  %v1251 = vpop.f32.mrf.mxu0
  %1252 = vmatprep.mubr.f32.mxu0 0.0
  %1253 = vmatmul.mubr.f32.gmra.mxu0 %v916
  %v1254 = vpop.f32.mrf.mxu0
  %v1255 = vadd.f32 %v675, %v1254
  %v1256 = vpop.f32.mrf.mxu0
  %1257 = vmatprep.mubr.f32.mxu0 0.0
  %1258 = vmatmul.mubr.f32.gmra.mxu0 %v919
  %v1259 = vpop.f32.mrf.mxu0
  %v1260 = vadd.f32 %v680, %v1259
  %v1261 = vpop.f32.mrf.mxu0
  %1262 = vmatprep.mubr.f32.mxu0 0.0
  %1263 = vmatmul.mubr.f32.gmra.mxu0 %v922
  %v1264 = vpop.f32.mrf.mxu0
  %v1265 = vadd.f32 %v685, %v1264
  %v1266 = vpop.f32.mrf.mxu0
  %1267 = vmatprep.mubr.f32.mxu0 0.0
  %1268 = vmatmul.mubr.f32.gmra.mxu0 %v925
  %v1269 = vpop.f32.mrf.mxu0
  %v1270 = vadd.f32 %v690, %v1269
  %v1271 = vpop.f32.mrf.mxu0
  %1272 = vmatprep.mubr.f32.mxu0 0.0
  %1273 = vmatmul.mubr.f32.gmra.mxu0 %v928
  %v1274 = vpop.f32.mrf.mxu0
  %v1275 = vadd.f32 %v695, %v1274
  %v1276 = vpop.f32.mrf.mxu0
  %1277 = vmatprep.mubr.f32.mxu0 0.0
  %1278 = vmatmul.mubr.f32.gmra.mxu0 %v931
  %v1279 = vpop.f32.mrf.mxu0
  %v1280 = vadd.f32 %v700, %v1279
  %v1281 = vpop.f32.mrf.mxu0
  %1282 = vmatprep.mubr.f32.mxu0 0.0
  %1283 = vmatmul.mubr.f32.gmra.mxu0 %v934
  %v1284 = vpop.f32.mrf.mxu0
  %v1285 = vadd.f32 %v705, %v1284
  %v1286 = vpop.f32.mrf.mxu0
  %1287 = vmatprep.mubr.f32.mxu0 0.0
  %1288 = vmatmul.mubr.f32.gmra.mxu0 %v937
  %v1289 = vpop.f32.mrf.mxu0
  %v1290 = vadd.f32 %v710, %v1289
  %v1291 = vpop.f32.mrf.mxu0
  %1292 = vmatprep.mubr.f32.mxu0 0.0
  %1293 = vmatmul.mubr.f32.gmra.mxu0 %v940
  %v1294 = vpop.f32.mrf.mxu0
  %v1295 = vadd.f32 %v715, %v1294
  %v1296 = vpop.f32.mrf.mxu0
  %1297 = vmatprep.mubr.f32.mxu0 0.0
  %1298 = vmatmul.mubr.f32.gmra.mxu0 %v943
  %v1299 = vpop.f32.mrf.mxu0
  %v1300 = vadd.f32 %v720, %v1299
  %v1301 = vpop.f32.mrf.mxu0
  %1302 = vmatprep.mubr.f32.mxu0 0.0
  %1303 = vmatmul.mubr.f32.gmra.mxu0 %v946
  %v1304 = vpop.f32.mrf.mxu0
  %v1305 = vadd.f32 %v725, %v1304
  %v1306 = vpop.f32.mrf.mxu0
  %1307 = vmatprep.mubr.f32.mxu0 0.0
  %1308 = vmatmul.mubr.f32.gmra.mxu0 %v949
  %v1309 = vpop.f32.mrf.mxu0
  %v1310 = vadd.f32 %v730, %v1309
  %v1311 = vpop.f32.mrf.mxu0
  %1312 = vmatprep.mubr.f32.mxu0 0.0
  %1313 = vmatmul.mubr.f32.gmra.mxu0 %v952
  %v1314 = vpop.f32.mrf.mxu0
  %v1315 = vadd.f32 %v735, %v1314
  %v1316 = vpop.f32.mrf.mxu0
  %1317 = vmatprep.mubr.f32.mxu0 0.0
  %1318 = vmatmul.mubr.f32.gmra.mxu0 %v955
  %v1319 = vpop.f32.mrf.mxu0
  %v1320 = vadd.f32 %v740, %v1319
  %v1321 = vpop.f32.mrf.mxu0
  %1322 = vmatprep.mubr.f32.mxu0 0.0
  %1323 = vmatmul.mubr.f32.gmra.mxu0 %v958
  %v1324 = vpop.f32.mrf.mxu0
  %v1325 = vadd.f32 %v745, %v1324
  %v1326 = vpop.f32.mrf.mxu0
  %1327 = vmatprep.mubr.f32.mxu0 0.0
  %1328 = vmatmul.mubr.f32.gmra.mxu0 %v961
  %v1329 = vpop.f32.mrf.mxu0
  %v1330 = vadd.f32 %v750, %v1329
  %v1331 = vpop.f32.mrf.mxu0
  %1332 = vmatprep.mubr.f32.mxu0 0.0
  %1333 = vmatmul.mubr.f32.gmra.mxu0 %v964
  %v1334 = vpop.f32.mrf.mxu0
  %v1335 = vadd.f32 %v755, %v1334
  %v1336 = vpop.f32.mrf.mxu0
  %1337 = vmatprep.mubr.f32.mxu0 0.0
  %1338 = vmatmul.mubr.f32.gmra.mxu0 %v967
  %v1339 = vpop.f32.mrf.mxu0
  %v1340 = vadd.f32 %v760, %v1339
  %v1341 = vpop.f32.mrf.mxu0
  %1342 = vmatprep.mubr.f32.mxu0 0.0
  %1343 = vmatmul.mubr.f32.gmra.mxu0 %v970
  %v1344 = vpop.f32.mrf.mxu0
  %v1345 = vadd.f32 %v765, %v1344
  %v1346 = vpop.f32.mrf.mxu0
  %1347 = vmatprep.mubr.f32.mxu0 0.0
  %1348 = vmatmul.mubr.f32.gmra.mxu0 %v973
  %v1349 = vpop.f32.mrf.mxu0
  %v1350 = vadd.f32 %v770, %v1349
  %v1351 = vpop.f32.mrf.mxu0
  %1352 = vmatprep.mubr.f32.mxu0 0.0
  %1353 = vmatmul.mubr.f32.gmra.mxu0 %v976
  %v1354 = vpop.f32.mrf.mxu0
  %v1355 = vadd.f32 %v775, %v1354
  %v1356 = vpop.f32.mrf.mxu0
  %1357 = vmatprep.mubr.f32.mxu0 0.0
  %1358 = vmatmul.mubr.f32.gmra.mxu0 %v979
  %v1359 = vpop.f32.mrf.mxu0
  %v1360 = vadd.f32 %v780, %v1359
  %v1361 = vpop.f32.mrf.mxu0
  %1362 = vmatprep.mubr.f32.mxu0 0.0
  %1363 = vmatmul.mubr.f32.gmra.mxu0 %v982
  %v1364 = vpop.f32.mrf.mxu0
  %v1365 = vadd.f32 %v785, %v1364
  %v1366 = vpop.f32.mrf.mxu0
  %1367 = vmatprep.mubr.f32.mxu0 0.0
  %1368 = vmatmul.mubr.f32.gmra.mxu0 %v985
  %v1369 = vpop.f32.mrf.mxu0
  %v1370 = vadd.f32 %v790, %v1369
  %v1371 = vpop.f32.mrf.mxu0
  %1372 = vmatprep.mubr.f32.mxu0 0.0
  %1373 = vmatmul.mubr.f32.gmra.mxu0 %v988
  %v1374 = vpop.f32.mrf.mxu0
  %v1375 = vadd.f32 %v795, %v1374
  %v1376 = vpop.f32.mrf.mxu0
  %1377 = vdwg.mxu0
  %v1378 = vld [vmem:[%s0 + $0x400] sm:$0xff]
  %v1379 = vld [vmem:[%s0 + $0x408] sm:$0xff]
  %v1380 = vld [vmem:[%s0 + $0x410] sm:$0xff]
  %v1381 = vld [vmem:[%s0 + $0x418] sm:$0xff]
  %v1382 = vld [vmem:[%s0 + $0x420] sm:$0xff]
  %v1383 = vld [vmem:[%s0 + $0x428] sm:$0xff]
  %v1384 = vld [vmem:[%s0 + $0x430] sm:$0xff]
  %v1385 = vld [vmem:[%s0 + $0x438] sm:$0xff]
  %v1386 = vld [vmem:[%s0 + $0x440] sm:$0xff]
  %v1387 = vld [vmem:[%s0 + $0x448] sm:$0xff]
  %v1388 = vld [vmem:[%s0 + $0x450] sm:$0xff]
  %v1389 = vld [vmem:[%s0 + $0x458] sm:$0xff]
  %v1390 = vld [vmem:[%s0 + $0x460] sm:$0xff]
  %v1391 = vld [vmem:[%s0 + $0x468] sm:$0xff]
  %v1392 = vld [vmem:[%s0 + $0x470] sm:$0xff]
  %v1393 = vld [vmem:[%s0 + $0x478] sm:$0xff]
  %v1394 = vld [vmem:[%s0 + $0x480] sm:$0xff]
  %v1395 = vld [vmem:[%s0 + $0x488] sm:$0xff]
  %v1396 = vld [vmem:[%s0 + $0x490] sm:$0xff]
  %v1397 = vld [vmem:[%s0 + $0x498] sm:$0xff]
  %v1398 = vld [vmem:[%s0 + $0x4a0] sm:$0xff]
  %v1399 = vld [vmem:[%s0 + $0x4a8] sm:$0xff]
  %v1400 = vld [vmem:[%s0 + $0x4b0] sm:$0xff]
  %v1401 = vld [vmem:[%s0 + $0x4b8] sm:$0xff]
  %v1402 = vld [vmem:[%s0 + $0x4c0] sm:$0xff]
  %v1403 = vld [vmem:[%s0 + $0x4c8] sm:$0xff]
  %v1404 = vld [vmem:[%s0 + $0x4d0] sm:$0xff]
  %v1405 = vld [vmem:[%s0 + $0x4d8] sm:$0xff]
  %v1406 = vld [vmem:[%s0 + $0x4e0] sm:$0xff]
  %v1407 = vld [vmem:[%s0 + $0x4e8] sm:$0xff]
  %v1408 = vld [vmem:[%s0 + $0x4f0] sm:$0xff]
  %v1409 = vld [vmem:[%s0 + $0x4f8] sm:$0xff]
  %v1410 = vld [vmem:[%s0 + $0x500] sm:$0xff]
  %v1411 = vld [vmem:[%s0 + $0x508] sm:$0xff]
  %v1412 = vld [vmem:[%s0 + $0x510] sm:$0xff]
  %v1413 = vld [vmem:[%s0 + $0x518] sm:$0xff]
  %v1414 = vld [vmem:[%s0 + $0x520] sm:$0xff]
  %v1415 = vld [vmem:[%s0 + $0x528] sm:$0xff]
  %v1416 = vld [vmem:[%s0 + $0x530] sm:$0xff]
  %v1417 = vld [vmem:[%s0 + $0x538] sm:$0xff]
  %v1418 = vld [vmem:[%s0 + $0x540] sm:$0xff]
  %v1419 = vld [vmem:[%s0 + $0x548] sm:$0xff]
  %v1420 = vld [vmem:[%s0 + $0x550] sm:$0xff]
  %v1421 = vld [vmem:[%s0 + $0x558] sm:$0xff]
  %v1422 = vld [vmem:[%s0 + $0x560] sm:$0xff]
  %v1423 = vld [vmem:[%s0 + $0x568] sm:$0xff]
  %v1424 = vld [vmem:[%s0 + $0x570] sm:$0xff]
  %v1425 = vld [vmem:[%s0 + $0x578] sm:$0xff]
  %v1426 = vld [vmem:[%s0 + $0x580] sm:$0xff]
  %v1427 = vld [vmem:[%s0 + $0x588] sm:$0xff]
  %v1428 = vld [vmem:[%s0 + $0x590] sm:$0xff]
  %v1429 = vld [vmem:[%s0 + $0x598] sm:$0xff]
  %v1430 = vld [vmem:[%s0 + $0x5a0] sm:$0xff]
  %v1431 = vld [vmem:[%s0 + $0x5a8] sm:$0xff]
  %v1432 = vld [vmem:[%s0 + $0x5b0] sm:$0xff]
  %v1433 = vld [vmem:[%s0 + $0x5b8] sm:$0xff]
  %v1434 = vld [vmem:[%s0 + $0x5c0] sm:$0xff]
  %v1435 = vld [vmem:[%s0 + $0x5c8] sm:$0xff]
  %v1436 = vld [vmem:[%s0 + $0x5d0] sm:$0xff]
  %v1437 = vld [vmem:[%s0 + $0x5d8] sm:$0xff]
  %v1438 = vld [vmem:[%s0 + $0x5e0] sm:$0xff]
  %v1439 = vld [vmem:[%s0 + $0x5e8] sm:$0xff]
  %v1440 = vld [vmem:[%s0 + $0x5f0] sm:$0xff]
  %v1441 = vld [vmem:[%s0 + $0x5f8] sm:$0xff]
  %v1442 = vld [vmem:[%s3] sm:$0xf]
  %v1444 = vsel %vm216, %v1378, 0
  %v1447 = vsel %vm216, %v1379, 0
  %v1450 = vsel %vm216, %v1380, 0
  %v1453 = vsel %vm216, %v1381, 0
  %v1456 = vsel %vm216, %v1382, 0
  %v1459 = vsel %vm216, %v1383, 0
  %v1462 = vsel %vm216, %v1384, 0
  %v1465 = vsel %vm216, %v1385, 0
  %v1468 = vsel %vm216, %v1386, 0
  %v1471 = vsel %vm216, %v1387, 0
  %v1474 = vsel %vm216, %v1388, 0
  %v1477 = vsel %vm216, %v1389, 0
  %v1480 = vsel %vm216, %v1390, 0
  %v1483 = vsel %vm216, %v1391, 0
  %v1486 = vsel %vm216, %v1392, 0
  %v1489 = vsel %vm216, %v1393, 0
  %v1492 = vsel %vm216, %v1394, 0
  %v1495 = vsel %vm216, %v1395, 0
  %v1498 = vsel %vm216, %v1396, 0
  %v1501 = vsel %vm216, %v1397, 0
  %v1504 = vsel %vm216, %v1398, 0
  %v1507 = vsel %vm216, %v1399, 0
  %v1510 = vsel %vm216, %v1400, 0
  %v1513 = vsel %vm216, %v1401, 0
  %v1516 = vsel %vm216, %v1402, 0
  %v1519 = vsel %vm216, %v1403, 0
  %v1522 = vsel %vm216, %v1404, 0
  %v1525 = vsel %vm216, %v1405, 0
  %v1528 = vsel %vm216, %v1406, 0
  %v1531 = vsel %vm216, %v1407, 0
  %v1534 = vsel %vm216, %v1408, 0
  %v1537 = vsel %vm216, %v1409, 0
  %v1540 = vsel %vm216, %v1410, 0
  %v1543 = vsel %vm216, %v1411, 0
  %v1546 = vsel %vm216, %v1412, 0
  %v1549 = vsel %vm216, %v1413, 0
  %v1552 = vsel %vm216, %v1414, 0
  %v1555 = vsel %vm216, %v1415, 0
  %v1558 = vsel %vm216, %v1416, 0
  %v1561 = vsel %vm216, %v1417, 0
  %v1564 = vsel %vm216, %v1418, 0
  %v1567 = vsel %vm216, %v1419, 0
  %v1570 = vsel %vm216, %v1420, 0
  %v1573 = vsel %vm216, %v1421, 0
  %v1576 = vsel %vm216, %v1422, 0
  %v1579 = vsel %vm216, %v1423, 0
  %v1582 = vsel %vm216, %v1424, 0
  %v1585 = vsel %vm216, %v1425, 0
  %v1588 = vsel %vm216, %v1426, 0
  %v1591 = vsel %vm216, %v1427, 0
  %v1594 = vsel %vm216, %v1428, 0
  %v1597 = vsel %vm216, %v1429, 0
  %v1600 = vsel %vm216, %v1430, 0
  %v1603 = vsel %vm216, %v1431, 0
  %v1606 = vsel %vm216, %v1432, 0
  %v1609 = vsel %vm216, %v1433, 0
  %v1612 = vsel %vm216, %v1434, 0
  %v1615 = vsel %vm216, %v1435, 0
  %v1618 = vsel %vm216, %v1436, 0
  %v1621 = vsel %vm216, %v1437, 0
  %v1624 = vsel %vm216, %v1438, 0
  %v1627 = vsel %vm216, %v1439, 0
  %v1630 = vsel %vm216, %v1440, 0
  %v1633 = vsel %vm216, %v1441, 0
  %v1636 = vsel %vm409, %v1442, 0
  %1638 = vmatprep.subr.mxu0 0.0
  %1639 = vmatpush1.msra.mxu0 0.0
  %1640 = vmatprep.subr.mxu0 0.0
  %1641 = vmatpush1.msra.mxu0 0.0
  %1642 = vmatprep.subr.mxu0 0.0
  %1643 = vmatpush1.msra.mxu0 0.0
  %1644 = vmatprep.subr.mxu0 0.0
  %1645 = vmatpush1.msra.mxu0 0.0
  %1646 = vmatprep.subr.mxu0 0.0
  %1647 = vmatpush1.msra.mxu0 0.0
  %1648 = vmatprep.subr.mxu0 0.0
  %1649 = vmatpush1.msra.mxu0 0.0
  %1650 = vmatprep.subr.mxu0 0.0
  %1651 = vmatpush1.msra.mxu0 0.0
  %1652 = vmatprep.subr.mxu0 0.0
  %1653 = vmatpush1.msra.mxu0 0.0
  %1654 = vmatprep.subr.mxu0 0.0
  %1655 = vmatpush1.msra.mxu0 0.0
  %1656 = vmatprep.subr.mxu0 0.0
  %1657 = vmatpush1.msra.mxu0 0.0
  %1658 = vmatprep.subr.mxu0 0.0
  %1659 = vmatpush1.msra.mxu0 0.0
  %1660 = vmatprep.subr.mxu0 0.0
  %1661 = vmatpush1.msra.mxu0 0.0
  %1662 = vmatprep.subr.mxu0 0.0
  %1663 = vmatpush1.msra.mxu0 0.0
  %1664 = vmatprep.subr.mxu0 0.0
  %1665 = vmatpush1.msra.mxu0 0.0
  %1666 = vmatprep.subr.mxu0 0.0
  %1667 = vmatpush1.msra.mxu0 0.0
  %1668 = vmatprep.subr.mxu0 0.0
  %1669 = vmatpush1.msra.mxu0 %v1636
  %1670 = vmatprep.subr.mxu0 0.0
  %1671 = vmatpush2.msra.mxu0 0.0
  %1672 = vmatprep.subr.mxu0 0.0
  %1673 = vmatpush2.msra.mxu0 0.0
  %1674 = vmatprep.subr.mxu0 0.0
  %1675 = vmatpush2.msra.mxu0 0.0
  %1676 = vmatprep.subr.mxu0 0.0
  %1677 = vmatpush2.msra.mxu0 0.0
  %1678 = vmatprep.subr.mxu0 0.0
  %1679 = vmatpush2.msra.mxu0 0.0
  %1680 = vmatprep.subr.mxu0 0.0
  %1681 = vmatpush2.msra.mxu0 0.0
  %1682 = vmatprep.subr.mxu0 0.0
  %1683 = vmatpush2.msra.mxu0 0.0
  %1684 = vmatprep.subr.mxu0 0.0
  %1685 = vmatpush2.msra.mxu0 0.0
  %1686 = vmatprep.subr.mxu0 0.0
  %1687 = vmatpush2.msra.mxu0 0.0
  %1688 = vmatprep.subr.mxu0 0.0
  %1689 = vmatpush2.msra.mxu0 0.0
  %1690 = vmatprep.subr.mxu0 0.0
  %1691 = vmatpush2.msra.mxu0 0.0
  %1692 = vmatprep.subr.mxu0 0.0
  %1693 = vmatpush2.msra.mxu0 0.0
  %1694 = vmatprep.subr.mxu0 0.0
  %1695 = vmatpush2.msra.mxu0 0.0
  %1696 = vmatprep.subr.mxu0 0.0
  %1697 = vmatpush2.msra.mxu0 0.0
  %1698 = vmatprep.subr.mxu0 0.0
  %1699 = vmatpush2.msra.mxu0 0.0
  %1700 = vmatprep.subr.mxu0 0.0
  %1701 = vmatpush2.msra.mxu0 0.0
  %1702 = vmatprep.mubr.f32.mxu0 0.0
  %1703 = vmatmul.mubr.f32.gmra.mxu0 %v1444
  %v1704 = vpop.f32.mrf.mxu0
  %v1705 = vadd.f32 0.0, %v1704
  %v1706 = vpop.f32.mrf.mxu0
  %1707 = vmatprep.mubr.f32.mxu0 0.0
  %1708 = vmatmul.mubr.f32.gmra.mxu0 %v1447
  %v1709 = vpop.f32.mrf.mxu0
  %v1710 = vadd.f32 0.0, %v1709
  %v1711 = vpop.f32.mrf.mxu0
  %1712 = vmatprep.mubr.f32.mxu0 0.0
  %1713 = vmatmul.mubr.f32.gmra.mxu0 %v1450
  %v1714 = vpop.f32.mrf.mxu0
  %v1715 = vadd.f32 0.0, %v1714
  %v1716 = vpop.f32.mrf.mxu0
  %1717 = vmatprep.mubr.f32.mxu0 0.0
  %1718 = vmatmul.mubr.f32.gmra.mxu0 %v1453
  %v1719 = vpop.f32.mrf.mxu0
  %v1720 = vadd.f32 0.0, %v1719
  %v1721 = vpop.f32.mrf.mxu0
  %1722 = vmatprep.mubr.f32.mxu0 0.0
  %1723 = vmatmul.mubr.f32.gmra.mxu0 %v1456
  %v1724 = vpop.f32.mrf.mxu0
  %v1725 = vadd.f32 0.0, %v1724
  %v1726 = vpop.f32.mrf.mxu0
  %1727 = vmatprep.mubr.f32.mxu0 0.0
  %1728 = vmatmul.mubr.f32.gmra.mxu0 %v1459
  %v1729 = vpop.f32.mrf.mxu0
  %v1730 = vadd.f32 0.0, %v1729
  %v1731 = vpop.f32.mrf.mxu0
  %1732 = vmatprep.mubr.f32.mxu0 0.0
  %1733 = vmatmul.mubr.f32.gmra.mxu0 %v1462
  %v1734 = vpop.f32.mrf.mxu0
  %v1735 = vadd.f32 0.0, %v1734
  %v1736 = vpop.f32.mrf.mxu0
  %1737 = vmatprep.mubr.f32.mxu0 0.0
  %1738 = vmatmul.mubr.f32.gmra.mxu0 %v1465
  %v1739 = vpop.f32.mrf.mxu0
  %v1740 = vadd.f32 0.0, %v1739
  %v1741 = vpop.f32.mrf.mxu0
  %1742 = vmatprep.mubr.f32.mxu0 0.0
  %1743 = vmatmul.mubr.f32.gmra.mxu0 %v1468
  %v1744 = vpop.f32.mrf.mxu0
  %v1745 = vadd.f32 0.0, %v1744
  %v1746 = vpop.f32.mrf.mxu0
  %1747 = vmatprep.mubr.f32.mxu0 0.0
  %1748 = vmatmul.mubr.f32.gmra.mxu0 %v1471
  %v1749 = vpop.f32.mrf.mxu0
  %v1750 = vadd.f32 0.0, %v1749
  %v1751 = vpop.f32.mrf.mxu0
  %1752 = vmatprep.mubr.f32.mxu0 0.0
  %1753 = vmatmul.mubr.f32.gmra.mxu0 %v1474
  %v1754 = vpop.f32.mrf.mxu0
  %v1755 = vadd.f32 0.0, %v1754
  %v1756 = vpop.f32.mrf.mxu0
  %1757 = vmatprep.mubr.f32.mxu0 0.0
  %1758 = vmatmul.mubr.f32.gmra.mxu0 %v1477
  %v1759 = vpop.f32.mrf.mxu0
  %v1760 = vadd.f32 0.0, %v1759
  %v1761 = vpop.f32.mrf.mxu0
  %1762 = vmatprep.mubr.f32.mxu0 0.0
  %1763 = vmatmul.mubr.f32.gmra.mxu0 %v1480
  %v1764 = vpop.f32.mrf.mxu0
  %v1765 = vadd.f32 0.0, %v1764
  %v1766 = vpop.f32.mrf.mxu0
  %1767 = vmatprep.mubr.f32.mxu0 0.0
  %1768 = vmatmul.mubr.f32.gmra.mxu0 %v1483
  %v1769 = vpop.f32.mrf.mxu0
  %v1770 = vadd.f32 0.0, %v1769
  %v1771 = vpop.f32.mrf.mxu0
  %1772 = vmatprep.mubr.f32.mxu0 0.0
  %1773 = vmatmul.mubr.f32.gmra.mxu0 %v1486
  %v1774 = vpop.f32.mrf.mxu0
  %v1775 = vadd.f32 0.0, %v1774
  %v1776 = vpop.f32.mrf.mxu0
  %1777 = vmatprep.mubr.f32.mxu0 0.0
  %1778 = vmatmul.mubr.f32.gmra.mxu0 %v1489
  %v1779 = vpop.f32.mrf.mxu0
  %v1780 = vadd.f32 0.0, %v1779
  %v1781 = vpop.f32.mrf.mxu0
  %1782 = vmatprep.mubr.f32.mxu0 0.0
  %1783 = vmatmul.mubr.f32.gmra.mxu0 %v1492
  %v1784 = vpop.f32.mrf.mxu0
  %v1785 = vadd.f32 0.0, %v1784
  %v1786 = vpop.f32.mrf.mxu0
  %1787 = vmatprep.mubr.f32.mxu0 0.0
  %1788 = vmatmul.mubr.f32.gmra.mxu0 %v1495
  %v1789 = vpop.f32.mrf.mxu0
  %v1790 = vadd.f32 0.0, %v1789
  %v1791 = vpop.f32.mrf.mxu0
  %1792 = vmatprep.mubr.f32.mxu0 0.0
  %1793 = vmatmul.mubr.f32.gmra.mxu0 %v1498
  %v1794 = vpop.f32.mrf.mxu0
  %v1795 = vadd.f32 0.0, %v1794
  %v1796 = vpop.f32.mrf.mxu0
  %1797 = vmatprep.mubr.f32.mxu0 0.0
  %1798 = vmatmul.mubr.f32.gmra.mxu0 %v1501
  %v1799 = vpop.f32.mrf.mxu0
  %v1800 = vadd.f32 0.0, %v1799
  %v1801 = vpop.f32.mrf.mxu0
  %1802 = vmatprep.mubr.f32.mxu0 0.0
  %1803 = vmatmul.mubr.f32.gmra.mxu0 %v1504
  %v1804 = vpop.f32.mrf.mxu0
  %v1805 = vadd.f32 0.0, %v1804
  %v1806 = vpop.f32.mrf.mxu0
  %1807 = vmatprep.mubr.f32.mxu0 0.0
  %1808 = vmatmul.mubr.f32.gmra.mxu0 %v1507
  %v1809 = vpop.f32.mrf.mxu0
  %v1810 = vadd.f32 0.0, %v1809
  %v1811 = vpop.f32.mrf.mxu0
  %1812 = vmatprep.mubr.f32.mxu0 0.0
  %1813 = vmatmul.mubr.f32.gmra.mxu0 %v1510
  %v1814 = vpop.f32.mrf.mxu0
  %v1815 = vadd.f32 0.0, %v1814
  %v1816 = vpop.f32.mrf.mxu0
  %1817 = vmatprep.mubr.f32.mxu0 0.0
  %1818 = vmatmul.mubr.f32.gmra.mxu0 %v1513
  %v1819 = vpop.f32.mrf.mxu0
  %v1820 = vadd.f32 0.0, %v1819
  %v1821 = vpop.f32.mrf.mxu0
  %1822 = vmatprep.mubr.f32.mxu0 0.0
  %1823 = vmatmul.mubr.f32.gmra.mxu0 %v1516
  %v1824 = vpop.f32.mrf.mxu0
  %v1825 = vadd.f32 0.0, %v1824
  %v1826 = vpop.f32.mrf.mxu0
  %1827 = vmatprep.mubr.f32.mxu0 0.0
  %1828 = vmatmul.mubr.f32.gmra.mxu0 %v1519
  %v1829 = vpop.f32.mrf.mxu0
  %v1830 = vadd.f32 0.0, %v1829
  %v1831 = vpop.f32.mrf.mxu0
  %1832 = vmatprep.mubr.f32.mxu0 0.0
  %1833 = vmatmul.mubr.f32.gmra.mxu0 %v1522
  %v1834 = vpop.f32.mrf.mxu0
  %v1835 = vadd.f32 0.0, %v1834
  %v1836 = vpop.f32.mrf.mxu0
  %1837 = vmatprep.mubr.f32.mxu0 0.0
  %1838 = vmatmul.mubr.f32.gmra.mxu0 %v1525
  %v1839 = vpop.f32.mrf.mxu0
  %v1840 = vadd.f32 0.0, %v1839
  %v1841 = vpop.f32.mrf.mxu0
  %1842 = vmatprep.mubr.f32.mxu0 0.0
  %1843 = vmatmul.mubr.f32.gmra.mxu0 %v1528
  %v1844 = vpop.f32.mrf.mxu0
  %v1845 = vadd.f32 0.0, %v1844
  %v1846 = vpop.f32.mrf.mxu0
  %1847 = vmatprep.mubr.f32.mxu0 0.0
  %1848 = vmatmul.mubr.f32.gmra.mxu0 %v1531
  %v1849 = vpop.f32.mrf.mxu0
  %v1850 = vadd.f32 0.0, %v1849
  %v1851 = vpop.f32.mrf.mxu0
  %1852 = vmatprep.mubr.f32.mxu0 0.0
  %1853 = vmatmul.mubr.f32.gmra.mxu0 %v1534
  %v1854 = vpop.f32.mrf.mxu0
  %v1855 = vadd.f32 0.0, %v1854
  %v1856 = vpop.f32.mrf.mxu0
  %1857 = vmatprep.mubr.f32.mxu0 0.0
  %1858 = vmatmul.mubr.f32.gmra.mxu0 %v1537
  %v1859 = vpop.f32.mrf.mxu0
  %v1860 = vadd.f32 0.0, %v1859
  %v1861 = vpop.f32.mrf.mxu0
  %1862 = vmatprep.mubr.f32.mxu0 0.0
  %1863 = vmatmul.mubr.f32.gmra.mxu0 %v1540
  %v1864 = vpop.f32.mrf.mxu0
  %v1865 = vadd.f32 0.0, %v1864
  %v1866 = vpop.f32.mrf.mxu0
  %1867 = vmatprep.mubr.f32.mxu0 0.0
  %1868 = vmatmul.mubr.f32.gmra.mxu0 %v1543
  %v1869 = vpop.f32.mrf.mxu0
  %v1870 = vadd.f32 0.0, %v1869
  %v1871 = vpop.f32.mrf.mxu0
  %1872 = vmatprep.mubr.f32.mxu0 0.0
  %1873 = vmatmul.mubr.f32.gmra.mxu0 %v1546
  %v1874 = vpop.f32.mrf.mxu0
  %v1875 = vadd.f32 0.0, %v1874
  %v1876 = vpop.f32.mrf.mxu0
  %1877 = vmatprep.mubr.f32.mxu0 0.0
  %1878 = vmatmul.mubr.f32.gmra.mxu0 %v1549
  %v1879 = vpop.f32.mrf.mxu0
  %v1880 = vadd.f32 0.0, %v1879
  %v1881 = vpop.f32.mrf.mxu0
  %1882 = vmatprep.mubr.f32.mxu0 0.0
  %1883 = vmatmul.mubr.f32.gmra.mxu0 %v1552
  %v1884 = vpop.f32.mrf.mxu0
  %v1885 = vadd.f32 0.0, %v1884
  %v1886 = vpop.f32.mrf.mxu0
  %1887 = vmatprep.mubr.f32.mxu0 0.0
  %1888 = vmatmul.mubr.f32.gmra.mxu0 %v1555
  %v1889 = vpop.f32.mrf.mxu0
  %v1890 = vadd.f32 0.0, %v1889
  %v1891 = vpop.f32.mrf.mxu0
  %1892 = vmatprep.mubr.f32.mxu0 0.0
  %1893 = vmatmul.mubr.f32.gmra.mxu0 %v1558
  %v1894 = vpop.f32.mrf.mxu0
  %v1895 = vadd.f32 0.0, %v1894
  %v1896 = vpop.f32.mrf.mxu0
  %1897 = vmatprep.mubr.f32.mxu0 0.0
  %1898 = vmatmul.mubr.f32.gmra.mxu0 %v1561
  %v1899 = vpop.f32.mrf.mxu0
  %v1900 = vadd.f32 0.0, %v1899
  %v1901 = vpop.f32.mrf.mxu0
  %1902 = vmatprep.mubr.f32.mxu0 0.0
  %1903 = vmatmul.mubr.f32.gmra.mxu0 %v1564
  %v1904 = vpop.f32.mrf.mxu0
  %v1905 = vadd.f32 0.0, %v1904
  %v1906 = vpop.f32.mrf.mxu0
  %1907 = vmatprep.mubr.f32.mxu0 0.0
  %1908 = vmatmul.mubr.f32.gmra.mxu0 %v1567
  %v1909 = vpop.f32.mrf.mxu0
  %v1910 = vadd.f32 0.0, %v1909
  %v1911 = vpop.f32.mrf.mxu0
  %1912 = vmatprep.mubr.f32.mxu0 0.0
  %1913 = vmatmul.mubr.f32.gmra.mxu0 %v1570
  %v1914 = vpop.f32.mrf.mxu0
  %v1915 = vadd.f32 0.0, %v1914
  %v1916 = vpop.f32.mrf.mxu0
  %1917 = vmatprep.mubr.f32.mxu0 0.0
  %1918 = vmatmul.mubr.f32.gmra.mxu0 %v1573
  %v1919 = vpop.f32.mrf.mxu0
  %v1920 = vadd.f32 0.0, %v1919
  %v1921 = vpop.f32.mrf.mxu0
  %1922 = vmatprep.mubr.f32.mxu0 0.0
  %1923 = vmatmul.mubr.f32.gmra.mxu0 %v1576
  %v1924 = vpop.f32.mrf.mxu0
  %v1925 = vadd.f32 0.0, %v1924
  %v1926 = vpop.f32.mrf.mxu0
  %1927 = vmatprep.mubr.f32.mxu0 0.0
  %1928 = vmatmul.mubr.f32.gmra.mxu0 %v1579
  %v1929 = vpop.f32.mrf.mxu0
  %v1930 = vadd.f32 0.0, %v1929
  %v1931 = vpop.f32.mrf.mxu0
  %1932 = vmatprep.mubr.f32.mxu0 0.0
  %1933 = vmatmul.mubr.f32.gmra.mxu0 %v1582
  %v1934 = vpop.f32.mrf.mxu0
  %v1935 = vadd.f32 0.0, %v1934
  %v1936 = vpop.f32.mrf.mxu0
  %1937 = vmatprep.mubr.f32.mxu0 0.0
  %1938 = vmatmul.mubr.f32.gmra.mxu0 %v1585
  %v1939 = vpop.f32.mrf.mxu0
  %v1940 = vadd.f32 0.0, %v1939
  %v1941 = vpop.f32.mrf.mxu0
  %1942 = vmatprep.mubr.f32.mxu0 0.0
  %1943 = vmatmul.mubr.f32.gmra.mxu0 %v1588
  %v1944 = vpop.f32.mrf.mxu0
  %v1945 = vadd.f32 0.0, %v1944
  %v1946 = vpop.f32.mrf.mxu0
  %1947 = vmatprep.mubr.f32.mxu0 0.0
  %1948 = vmatmul.mubr.f32.gmra.mxu0 %v1591
  %v1949 = vpop.f32.mrf.mxu0
  %v1950 = vadd.f32 0.0, %v1949
  %v1951 = vpop.f32.mrf.mxu0
  %1952 = vmatprep.mubr.f32.mxu0 0.0
  %1953 = vmatmul.mubr.f32.gmra.mxu0 %v1594
  %v1954 = vpop.f32.mrf.mxu0
  %v1955 = vadd.f32 0.0, %v1954
  %v1956 = vpop.f32.mrf.mxu0
  %1957 = vmatprep.mubr.f32.mxu0 0.0
  %1958 = vmatmul.mubr.f32.gmra.mxu0 %v1597
  %v1959 = vpop.f32.mrf.mxu0
  %v1960 = vadd.f32 0.0, %v1959
  %v1961 = vpop.f32.mrf.mxu0
  %1962 = vmatprep.mubr.f32.mxu0 0.0
  %1963 = vmatmul.mubr.f32.gmra.mxu0 %v1600
  %v1964 = vpop.f32.mrf.mxu0
  %v1965 = vadd.f32 0.0, %v1964
  %v1966 = vpop.f32.mrf.mxu0
  %1967 = vmatprep.mubr.f32.mxu0 0.0
  %1968 = vmatmul.mubr.f32.gmra.mxu0 %v1603
  %v1969 = vpop.f32.mrf.mxu0
  %v1970 = vadd.f32 0.0, %v1969
  %v1971 = vpop.f32.mrf.mxu0
  %1972 = vmatprep.mubr.f32.mxu0 0.0
  %1973 = vmatmul.mubr.f32.gmra.mxu0 %v1606
  %v1974 = vpop.f32.mrf.mxu0
  %v1975 = vadd.f32 0.0, %v1974
  %v1976 = vpop.f32.mrf.mxu0
  %1977 = vmatprep.mubr.f32.mxu0 0.0
  %1978 = vmatmul.mubr.f32.gmra.mxu0 %v1609
  %v1979 = vpop.f32.mrf.mxu0
  %v1980 = vadd.f32 0.0, %v1979
  %v1981 = vpop.f32.mrf.mxu0
  %1982 = vmatprep.mubr.f32.mxu0 0.0
  %1983 = vmatmul.mubr.f32.gmra.mxu0 %v1612
  %v1984 = vpop.f32.mrf.mxu0
  %v1985 = vadd.f32 0.0, %v1984
  %v1986 = vpop.f32.mrf.mxu0
  %1987 = vmatprep.mubr.f32.mxu0 0.0
  %1988 = vmatmul.mubr.f32.gmra.mxu0 %v1615
  %v1989 = vpop.f32.mrf.mxu0
  %v1990 = vadd.f32 0.0, %v1989
  %v1991 = vpop.f32.mrf.mxu0
  %1992 = vmatprep.mubr.f32.mxu0 0.0
  %1993 = vmatmul.mubr.f32.gmra.mxu0 %v1618
  %v1994 = vpop.f32.mrf.mxu0
  %v1995 = vadd.f32 0.0, %v1994
  %v1996 = vpop.f32.mrf.mxu0
  %1997 = vmatprep.mubr.f32.mxu0 0.0
  %1998 = vmatmul.mubr.f32.gmra.mxu0 %v1621
  %v1999 = vpop.f32.mrf.mxu0
  %v2000 = vadd.f32 0.0, %v1999
  %v2001 = vpop.f32.mrf.mxu0
  %2002 = vmatprep.mubr.f32.mxu0 0.0
  %2003 = vmatmul.mubr.f32.gmra.mxu0 %v1624
  %v2004 = vpop.f32.mrf.mxu0
  %v2005 = vadd.f32 0.0, %v2004
  %v2006 = vpop.f32.mrf.mxu0
  %2007 = vmatprep.mubr.f32.mxu0 0.0
  %2008 = vmatmul.mubr.f32.gmra.mxu0 %v1627
  %v2009 = vpop.f32.mrf.mxu0
  %v2010 = vadd.f32 0.0, %v2009
  %v2011 = vpop.f32.mrf.mxu0
  %2012 = vmatprep.mubr.f32.mxu0 0.0
  %2013 = vmatmul.mubr.f32.gmra.mxu0 %v1630
  %v2014 = vpop.f32.mrf.mxu0
  %v2015 = vadd.f32 0.0, %v2014
  %v2016 = vpop.f32.mrf.mxu0
  %2017 = vmatprep.mubr.f32.mxu0 0.0
  %2018 = vmatmul.mubr.f32.gmra.mxu0 %v1633
  %v2019 = vpop.f32.mrf.mxu0
  %v2020 = vadd.f32 0.0, %v2019
  %v2021 = vpop.f32.mrf.mxu0
  %2022 = vdwg.mxu0
  %v2023 = vadd.f32 %v1060, %v1705
  %v2024 = vadd.f32 %v1065, %v1710
  %v2025 = vadd.f32 %v1070, %v1715
  %v2026 = vadd.f32 %v1075, %v1720
  %v2027 = vadd.f32 %v1080, %v1725
  %v2028 = vadd.f32 %v1085, %v1730
  %v2029 = vadd.f32 %v1090, %v1735
  %v2030 = vadd.f32 %v1095, %v1740
  %v2031 = vadd.f32 %v1100, %v1745
  %v2032 = vadd.f32 %v1105, %v1750
  %v2033 = vadd.f32 %v1110, %v1755
  %v2034 = vadd.f32 %v1115, %v1760
  %v2035 = vadd.f32 %v1120, %v1765
  %v2036 = vadd.f32 %v1125, %v1770
  %v2037 = vadd.f32 %v1130, %v1775
  %v2038 = vadd.f32 %v1135, %v1780
  %v2039 = vadd.f32 %v1140, %v1785
  %v2040 = vadd.f32 %v1145, %v1790
  %v2041 = vadd.f32 %v1150, %v1795
  %v2042 = vadd.f32 %v1155, %v1800
  %v2043 = vadd.f32 %v1160, %v1805
  %v2044 = vadd.f32 %v1165, %v1810
  %v2045 = vadd.f32 %v1170, %v1815
  %v2046 = vadd.f32 %v1175, %v1820
  %v2047 = vadd.f32 %v1180, %v1825
  %v2048 = vadd.f32 %v1185, %v1830
  %v2049 = vadd.f32 %v1190, %v1835
  %v2050 = vadd.f32 %v1195, %v1840
  %v2051 = vadd.f32 %v1200, %v1845
  %v2052 = vadd.f32 %v1205, %v1850
  %v2053 = vadd.f32 %v1210, %v1855
  %v2054 = vadd.f32 %v1215, %v1860
  %v2055 = vadd.f32 %v1220, %v1865
  %v2056 = vadd.f32 %v1225, %v1870
  %v2057 = vadd.f32 %v1230, %v1875
  %v2058 = vadd.f32 %v1235, %v1880
  %v2059 = vadd.f32 %v1240, %v1885
  %v2060 = vadd.f32 %v1245, %v1890
  %v2061 = vadd.f32 %v1250, %v1895
  %v2062 = vadd.f32 %v1255, %v1900
  %v2063 = vadd.f32 %v1260, %v1905
  %v2064 = vadd.f32 %v1265, %v1910
  %v2065 = vadd.f32 %v1270, %v1915
  %v2066 = vadd.f32 %v1275, %v1920
  %v2067 = vadd.f32 %v1280, %v1925
  %v2068 = vadd.f32 %v1285, %v1930
  %v2069 = vadd.f32 %v1290, %v1935
  %v2070 = vadd.f32 %v1295, %v1940
  %v2071 = vadd.f32 %v1300, %v1945
  %v2072 = vadd.f32 %v1305, %v1950
  %v2073 = vadd.f32 %v1310, %v1955
  %v2074 = vadd.f32 %v1315, %v1960
  %v2075 = vadd.f32 %v1320, %v1965
  %v2076 = vadd.f32 %v1325, %v1970
  %v2077 = vadd.f32 %v1330, %v1975
  %v2078 = vadd.f32 %v1335, %v1980
  %v2079 = vadd.f32 %v1340, %v1985
  %v2080 = vadd.f32 %v1345, %v1990
  %v2081 = vadd.f32 %v1350, %v1995
  %v2082 = vadd.f32 %v1355, %v2000
  %v2083 = vadd.f32 %v1360, %v2005
  %v2084 = vadd.f32 %v1365, %v2010
  %v2085 = vadd.f32 %v1370, %v2015
  %v2086 = vadd.f32 %v1375, %v2020
  %v2087 = vld [vmem:[%s0 + $0x600] sm:$0xff]
  %v2088 = vld [vmem:[%s0 + $0x608] sm:$0xff]
  %v2089 = vld [vmem:[%s0 + $0x610] sm:$0xff]
  %v2090 = vld [vmem:[%s0 + $0x618] sm:$0xff]
  %v2091 = vld [vmem:[%s0 + $0x620] sm:$0xff]
  %v2092 = vld [vmem:[%s0 + $0x628] sm:$0xff]
  %v2093 = vld [vmem:[%s0 + $0x630] sm:$0xff]
  %v2094 = vld [vmem:[%s0 + $0x638] sm:$0xff]
  %v2095 = vld [vmem:[%s0 + $0x640] sm:$0xff]
  %v2096 = vld [vmem:[%s0 + $0x648] sm:$0xff]
  %v2097 = vld [vmem:[%s0 + $0x650] sm:$0xff]
  %v2098 = vld [vmem:[%s0 + $0x658] sm:$0xff]
  %v2099 = vld [vmem:[%s0 + $0x660] sm:$0xff]
  %v2100 = vld [vmem:[%s0 + $0x668] sm:$0xff]
  %v2101 = vld [vmem:[%s0 + $0x670] sm:$0xff]
  %v2102 = vld [vmem:[%s0 + $0x678] sm:$0xff]
  %v2103 = vld [vmem:[%s0 + $0x680] sm:$0xff]
  %v2104 = vld [vmem:[%s0 + $0x688] sm:$0xff]
  %v2105 = vld [vmem:[%s0 + $0x690] sm:$0xff]
  %v2106 = vld [vmem:[%s0 + $0x698] sm:$0xff]
  %v2107 = vld [vmem:[%s0 + $0x6a0] sm:$0xff]
  %v2108 = vld [vmem:[%s0 + $0x6a8] sm:$0xff]
  %v2109 = vld [vmem:[%s0 + $0x6b0] sm:$0xff]
  %v2110 = vld [vmem:[%s0 + $0x6b8] sm:$0xff]
  %v2111 = vld [vmem:[%s0 + $0x6c0] sm:$0xff]
  %v2112 = vld [vmem:[%s0 + $0x6c8] sm:$0xff]
  %v2113 = vld [vmem:[%s0 + $0x6d0] sm:$0xff]
  %v2114 = vld [vmem:[%s0 + $0x6d8] sm:$0xff]
  %v2115 = vld [vmem:[%s0 + $0x6e0] sm:$0xff]
  %v2116 = vld [vmem:[%s0 + $0x6e8] sm:$0xff]
  %v2117 = vld [vmem:[%s0 + $0x6f0] sm:$0xff]
  %v2118 = vld [vmem:[%s0 + $0x6f8] sm:$0xff]
  %v2119 = vld [vmem:[%s0 + $0x700] sm:$0xff]
  %v2120 = vld [vmem:[%s0 + $0x708] sm:$0xff]
  %v2121 = vld [vmem:[%s0 + $0x710] sm:$0xff]
  %v2122 = vld [vmem:[%s0 + $0x718] sm:$0xff]
  %v2123 = vld [vmem:[%s0 + $0x720] sm:$0xff]
  %v2124 = vld [vmem:[%s0 + $0x728] sm:$0xff]
  %v2125 = vld [vmem:[%s0 + $0x730] sm:$0xff]
  %v2126 = vld [vmem:[%s0 + $0x738] sm:$0xff]
  %v2127 = vld [vmem:[%s0 + $0x740] sm:$0xff]
  %v2128 = vld [vmem:[%s0 + $0x748] sm:$0xff]
  %v2129 = vld [vmem:[%s0 + $0x750] sm:$0xff]
  %v2130 = vld [vmem:[%s0 + $0x758] sm:$0xff]
  %v2131 = vld [vmem:[%s0 + $0x760] sm:$0xff]
  %v2132 = vld [vmem:[%s0 + $0x768] sm:$0xff]
  %v2133 = vld [vmem:[%s0 + $0x770] sm:$0xff]
  %v2134 = vld [vmem:[%s0 + $0x778] sm:$0xff]
  %v2135 = vld [vmem:[%s0 + $0x780] sm:$0xff]
  %v2136 = vld [vmem:[%s0 + $0x788] sm:$0xff]
  %v2137 = vld [vmem:[%s0 + $0x790] sm:$0xff]
  %v2138 = vld [vmem:[%s0 + $0x798] sm:$0xff]
  %v2139 = vld [vmem:[%s0 + $0x7a0] sm:$0xff]
  %v2140 = vld [vmem:[%s0 + $0x7a8] sm:$0xff]
  %v2141 = vld [vmem:[%s0 + $0x7b0] sm:$0xff]
  %v2142 = vld [vmem:[%s0 + $0x7b8] sm:$0xff]
  %v2143 = vld [vmem:[%s0 + $0x7c0] sm:$0xff]
  %v2144 = vld [vmem:[%s0 + $0x7c8] sm:$0xff]
  %v2145 = vld [vmem:[%s0 + $0x7d0] sm:$0xff]
  %v2146 = vld [vmem:[%s0 + $0x7d8] sm:$0xff]
  %v2147 = vld [vmem:[%s0 + $0x7e0] sm:$0xff]
  %v2148 = vld [vmem:[%s0 + $0x7e8] sm:$0xff]
  %v2149 = vld [vmem:[%s0 + $0x7f0] sm:$0xff]
  %v2150 = vld [vmem:[%s0 + $0x7f8] sm:$0xff]
  %v2151 = vld [vmem:[%s4] sm:$0xf]
  %v2153 = vsel %vm216, %v2087, 0
  %v2156 = vsel %vm216, %v2088, 0
  %v2159 = vsel %vm216, %v2089, 0
  %v2162 = vsel %vm216, %v2090, 0
  %v2165 = vsel %vm216, %v2091, 0
  %v2168 = vsel %vm216, %v2092, 0
  %v2171 = vsel %vm216, %v2093, 0
  %v2174 = vsel %vm216, %v2094, 0
  %v2177 = vsel %vm216, %v2095, 0
  %v2180 = vsel %vm216, %v2096, 0
  %v2183 = vsel %vm216, %v2097, 0
  %v2186 = vsel %vm216, %v2098, 0
  %v2189 = vsel %vm216, %v2099, 0
  %v2192 = vsel %vm216, %v2100, 0
  %v2195 = vsel %vm216, %v2101, 0
  %v2198 = vsel %vm216, %v2102, 0
  %v2201 = vsel %vm216, %v2103, 0
  %v2204 = vsel %vm216, %v2104, 0
  %v2207 = vsel %vm216, %v2105, 0
  %v2210 = vsel %vm216, %v2106, 0
  %v2213 = vsel %vm216, %v2107, 0
  %v2216 = vsel %vm216, %v2108, 0
  %v2219 = vsel %vm216, %v2109, 0
  %v2222 = vsel %vm216, %v2110, 0
  %v2225 = vsel %vm216, %v2111, 0
  %v2228 = vsel %vm216, %v2112, 0
  %v2231 = vsel %vm216, %v2113, 0
  %v2234 = vsel %vm216, %v2114, 0
  %v2237 = vsel %vm216, %v2115, 0
  %v2240 = vsel %vm216, %v2116, 0
  %v2243 = vsel %vm216, %v2117, 0
  %v2246 = vsel %vm216, %v2118, 0
  %v2249 = vsel %vm216, %v2119, 0
  %v2252 = vsel %vm216, %v2120, 0
  %v2255 = vsel %vm216, %v2121, 0
  %v2258 = vsel %vm216, %v2122, 0
  %v2261 = vsel %vm216, %v2123, 0
  %v2264 = vsel %vm216, %v2124, 0
  %v2267 = vsel %vm216, %v2125, 0
  %v2270 = vsel %vm216, %v2126, 0
  %v2273 = vsel %vm216, %v2127, 0
  %v2276 = vsel %vm216, %v2128, 0
  %v2279 = vsel %vm216, %v2129, 0
  %v2282 = vsel %vm216, %v2130, 0
  %v2285 = vsel %vm216, %v2131, 0
  %v2288 = vsel %vm216, %v2132, 0
  %v2291 = vsel %vm216, %v2133, 0
  %v2294 = vsel %vm216, %v2134, 0
  %v2297 = vsel %vm216, %v2135, 0
  %v2300 = vsel %vm216, %v2136, 0
  %v2303 = vsel %vm216, %v2137, 0
  %v2306 = vsel %vm216, %v2138, 0
  %v2309 = vsel %vm216, %v2139, 0
  %v2312 = vsel %vm216, %v2140, 0
  %v2315 = vsel %vm216, %v2141, 0
  %v2318 = vsel %vm216, %v2142, 0
  %v2321 = vsel %vm216, %v2143, 0
  %v2324 = vsel %vm216, %v2144, 0
  %v2327 = vsel %vm216, %v2145, 0
  %v2330 = vsel %vm216, %v2146, 0
  %v2333 = vsel %vm216, %v2147, 0
  %v2336 = vsel %vm216, %v2148, 0
  %v2339 = vsel %vm216, %v2149, 0
  %v2342 = vsel %vm216, %v2150, 0
  %v2345 = vsel %vm409, %v2151, 0
  %2347 = vmatprep.subr.mxu0 0.0
  %2348 = vmatpush1.msra.mxu0 0.0
  %2349 = vmatprep.subr.mxu0 0.0
  %2350 = vmatpush1.msra.mxu0 0.0
  %2351 = vmatprep.subr.mxu0 0.0
  %2352 = vmatpush1.msra.mxu0 0.0
  %2353 = vmatprep.subr.mxu0 0.0
  %2354 = vmatpush1.msra.mxu0 0.0
  %2355 = vmatprep.subr.mxu0 0.0
  %2356 = vmatpush1.msra.mxu0 0.0
  %2357 = vmatprep.subr.mxu0 0.0
  %2358 = vmatpush1.msra.mxu0 0.0
  %2359 = vmatprep.subr.mxu0 0.0
  %2360 = vmatpush1.msra.mxu0 0.0
  %2361 = vmatprep.subr.mxu0 0.0
  %2362 = vmatpush1.msra.mxu0 0.0
  %2363 = vmatprep.subr.mxu0 0.0
  %2364 = vmatpush1.msra.mxu0 0.0
  %2365 = vmatprep.subr.mxu0 0.0
  %2366 = vmatpush1.msra.mxu0 0.0
  %2367 = vmatprep.subr.mxu0 0.0
  %2368 = vmatpush1.msra.mxu0 0.0
  %2369 = vmatprep.subr.mxu0 0.0
  %2370 = vmatpush1.msra.mxu0 0.0
  %2371 = vmatprep.subr.mxu0 0.0
  %2372 = vmatpush1.msra.mxu0 0.0
  %2373 = vmatprep.subr.mxu0 0.0
  %2374 = vmatpush1.msra.mxu0 0.0
  %2375 = vmatprep.subr.mxu0 0.0
  %2376 = vmatpush1.msra.mxu0 0.0
  %2377 = vmatprep.subr.mxu0 0.0
  %2378 = vmatpush1.msra.mxu0 %v2345
  %2379 = vmatprep.subr.mxu0 0.0
  %2380 = vmatpush2.msra.mxu0 0.0
  %2381 = vmatprep.subr.mxu0 0.0
  %2382 = vmatpush2.msra.mxu0 0.0
  %2383 = vmatprep.subr.mxu0 0.0
  %2384 = vmatpush2.msra.mxu0 0.0
  %2385 = vmatprep.subr.mxu0 0.0
  %2386 = vmatpush2.msra.mxu0 0.0
  %2387 = vmatprep.subr.mxu0 0.0
  %2388 = vmatpush2.msra.mxu0 0.0
  %2389 = vmatprep.subr.mxu0 0.0
  %2390 = vmatpush2.msra.mxu0 0.0
  %2391 = vmatprep.subr.mxu0 0.0
  %2392 = vmatpush2.msra.mxu0 0.0
  %2393 = vmatprep.subr.mxu0 0.0
  %2394 = vmatpush2.msra.mxu0 0.0
  %2395 = vmatprep.subr.mxu0 0.0
  %2396 = vmatpush2.msra.mxu0 0.0
  %2397 = vmatprep.subr.mxu0 0.0
  %2398 = vmatpush2.msra.mxu0 0.0
  %2399 = vmatprep.subr.mxu0 0.0
  %2400 = vmatpush2.msra.mxu0 0.0
  %2401 = vmatprep.subr.mxu0 0.0
  %2402 = vmatpush2.msra.mxu0 0.0
  %2403 = vmatprep.subr.mxu0 0.0
  %2404 = vmatpush2.msra.mxu0 0.0
  %2405 = vmatprep.subr.mxu0 0.0
  %2406 = vmatpush2.msra.mxu0 0.0
  %2407 = vmatprep.subr.mxu0 0.0
  %2408 = vmatpush2.msra.mxu0 0.0
  %2409 = vmatprep.subr.mxu0 0.0
  %2410 = vmatpush2.msra.mxu0 0.0
  %2411 = vmatprep.mubr.f32.mxu0 0.0
  %2412 = vmatmul.mubr.f32.gmra.mxu0 %v2153
  %v2413 = vpop.f32.mrf.mxu0
  %v2414 = vadd.f32 0.0, %v2413
  %v2415 = vpop.f32.mrf.mxu0
  %2416 = vmatprep.mubr.f32.mxu0 0.0
  %2417 = vmatmul.mubr.f32.gmra.mxu0 %v2156
  %v2418 = vpop.f32.mrf.mxu0
  %v2419 = vadd.f32 0.0, %v2418
  %v2420 = vpop.f32.mrf.mxu0
  %2421 = vmatprep.mubr.f32.mxu0 0.0
  %2422 = vmatmul.mubr.f32.gmra.mxu0 %v2159
  %v2423 = vpop.f32.mrf.mxu0
  %v2424 = vadd.f32 0.0, %v2423
  %v2425 = vpop.f32.mrf.mxu0
  %2426 = vmatprep.mubr.f32.mxu0 0.0
  %2427 = vmatmul.mubr.f32.gmra.mxu0 %v2162
  %v2428 = vpop.f32.mrf.mxu0
  %v2429 = vadd.f32 0.0, %v2428
  %v2430 = vpop.f32.mrf.mxu0
  %2431 = vmatprep.mubr.f32.mxu0 0.0
  %2432 = vmatmul.mubr.f32.gmra.mxu0 %v2165
  %v2433 = vpop.f32.mrf.mxu0
  %v2434 = vadd.f32 0.0, %v2433
  %v2435 = vpop.f32.mrf.mxu0
  %2436 = vmatprep.mubr.f32.mxu0 0.0
  %2437 = vmatmul.mubr.f32.gmra.mxu0 %v2168
  %v2438 = vpop.f32.mrf.mxu0
  %v2439 = vadd.f32 0.0, %v2438
  %v2440 = vpop.f32.mrf.mxu0
  %2441 = vmatprep.mubr.f32.mxu0 0.0
  %2442 = vmatmul.mubr.f32.gmra.mxu0 %v2171
  %v2443 = vpop.f32.mrf.mxu0
  %v2444 = vadd.f32 0.0, %v2443
  %v2445 = vpop.f32.mrf.mxu0
  %2446 = vmatprep.mubr.f32.mxu0 0.0
  %2447 = vmatmul.mubr.f32.gmra.mxu0 %v2174
  %v2448 = vpop.f32.mrf.mxu0
  %v2449 = vadd.f32 0.0, %v2448
  %v2450 = vpop.f32.mrf.mxu0
  %2451 = vmatprep.mubr.f32.mxu0 0.0
  %2452 = vmatmul.mubr.f32.gmra.mxu0 %v2177
  %v2453 = vpop.f32.mrf.mxu0
  %v2454 = vadd.f32 0.0, %v2453
  %v2455 = vpop.f32.mrf.mxu0
  %2456 = vmatprep.mubr.f32.mxu0 0.0
  %2457 = vmatmul.mubr.f32.gmra.mxu0 %v2180
  %v2458 = vpop.f32.mrf.mxu0
  %v2459 = vadd.f32 0.0, %v2458
  %v2460 = vpop.f32.mrf.mxu0
  %2461 = vmatprep.mubr.f32.mxu0 0.0
  %2462 = vmatmul.mubr.f32.gmra.mxu0 %v2183
  %v2463 = vpop.f32.mrf.mxu0
  %v2464 = vadd.f32 0.0, %v2463
  %v2465 = vpop.f32.mrf.mxu0
  %2466 = vmatprep.mubr.f32.mxu0 0.0
  %2467 = vmatmul.mubr.f32.gmra.mxu0 %v2186
  %v2468 = vpop.f32.mrf.mxu0
  %v2469 = vadd.f32 0.0, %v2468
  %v2470 = vpop.f32.mrf.mxu0
  %2471 = vmatprep.mubr.f32.mxu0 0.0
  %2472 = vmatmul.mubr.f32.gmra.mxu0 %v2189
  %v2473 = vpop.f32.mrf.mxu0
  %v2474 = vadd.f32 0.0, %v2473
  %v2475 = vpop.f32.mrf.mxu0
  %2476 = vmatprep.mubr.f32.mxu0 0.0
  %2477 = vmatmul.mubr.f32.gmra.mxu0 %v2192
  %v2478 = vpop.f32.mrf.mxu0
  %v2479 = vadd.f32 0.0, %v2478
  %v2480 = vpop.f32.mrf.mxu0
  %2481 = vmatprep.mubr.f32.mxu0 0.0
  %2482 = vmatmul.mubr.f32.gmra.mxu0 %v2195
  %v2483 = vpop.f32.mrf.mxu0
  %v2484 = vadd.f32 0.0, %v2483
  %v2485 = vpop.f32.mrf.mxu0
  %2486 = vmatprep.mubr.f32.mxu0 0.0
  %2487 = vmatmul.mubr.f32.gmra.mxu0 %v2198
  %v2488 = vpop.f32.mrf.mxu0
  %v2489 = vadd.f32 0.0, %v2488
  %v2490 = vpop.f32.mrf.mxu0
  %2491 = vmatprep.mubr.f32.mxu0 0.0
  %2492 = vmatmul.mubr.f32.gmra.mxu0 %v2201
  %v2493 = vpop.f32.mrf.mxu0
  %v2494 = vadd.f32 0.0, %v2493
  %v2495 = vpop.f32.mrf.mxu0
  %2496 = vmatprep.mubr.f32.mxu0 0.0
  %2497 = vmatmul.mubr.f32.gmra.mxu0 %v2204
  %v2498 = vpop.f32.mrf.mxu0
  %v2499 = vadd.f32 0.0, %v2498
  %v2500 = vpop.f32.mrf.mxu0
  %2501 = vmatprep.mubr.f32.mxu0 0.0
  %2502 = vmatmul.mubr.f32.gmra.mxu0 %v2207
  %v2503 = vpop.f32.mrf.mxu0
  %v2504 = vadd.f32 0.0, %v2503
  %v2505 = vpop.f32.mrf.mxu0
  %2506 = vmatprep.mubr.f32.mxu0 0.0
  %2507 = vmatmul.mubr.f32.gmra.mxu0 %v2210
  %v2508 = vpop.f32.mrf.mxu0
  %v2509 = vadd.f32 0.0, %v2508
  %v2510 = vpop.f32.mrf.mxu0
  %2511 = vmatprep.mubr.f32.mxu0 0.0
  %2512 = vmatmul.mubr.f32.gmra.mxu0 %v2213
  %v2513 = vpop.f32.mrf.mxu0
  %v2514 = vadd.f32 0.0, %v2513
  %v2515 = vpop.f32.mrf.mxu0
  %2516 = vmatprep.mubr.f32.mxu0 0.0
  %2517 = vmatmul.mubr.f32.gmra.mxu0 %v2216
  %v2518 = vpop.f32.mrf.mxu0
  %v2519 = vadd.f32 0.0, %v2518
  %v2520 = vpop.f32.mrf.mxu0
  %2521 = vmatprep.mubr.f32.mxu0 0.0
  %2522 = vmatmul.mubr.f32.gmra.mxu0 %v2219
  %v2523 = vpop.f32.mrf.mxu0
  %v2524 = vadd.f32 0.0, %v2523
  %v2525 = vpop.f32.mrf.mxu0
  %2526 = vmatprep.mubr.f32.mxu0 0.0
  %2527 = vmatmul.mubr.f32.gmra.mxu0 %v2222
  %v2528 = vpop.f32.mrf.mxu0
  %v2529 = vadd.f32 0.0, %v2528
  %v2530 = vpop.f32.mrf.mxu0
  %2531 = vmatprep.mubr.f32.mxu0 0.0
  %2532 = vmatmul.mubr.f32.gmra.mxu0 %v2225
  %v2533 = vpop.f32.mrf.mxu0
  %v2534 = vadd.f32 0.0, %v2533
  %v2535 = vpop.f32.mrf.mxu0
  %2536 = vmatprep.mubr.f32.mxu0 0.0
  %2537 = vmatmul.mubr.f32.gmra.mxu0 %v2228
  %v2538 = vpop.f32.mrf.mxu0
  %v2539 = vadd.f32 0.0, %v2538
  %v2540 = vpop.f32.mrf.mxu0
  %2541 = vmatprep.mubr.f32.mxu0 0.0
  %2542 = vmatmul.mubr.f32.gmra.mxu0 %v2231
  %v2543 = vpop.f32.mrf.mxu0
  %v2544 = vadd.f32 0.0, %v2543
  %v2545 = vpop.f32.mrf.mxu0
  %2546 = vmatprep.mubr.f32.mxu0 0.0
  %2547 = vmatmul.mubr.f32.gmra.mxu0 %v2234
  %v2548 = vpop.f32.mrf.mxu0
  %v2549 = vadd.f32 0.0, %v2548
  %v2550 = vpop.f32.mrf.mxu0
  %2551 = vmatprep.mubr.f32.mxu0 0.0
  %2552 = vmatmul.mubr.f32.gmra.mxu0 %v2237
  %v2553 = vpop.f32.mrf.mxu0
  %v2554 = vadd.f32 0.0, %v2553
  %v2555 = vpop.f32.mrf.mxu0
  %2556 = vmatprep.mubr.f32.mxu0 0.0
  %2557 = vmatmul.mubr.f32.gmra.mxu0 %v2240
  %v2558 = vpop.f32.mrf.mxu0
  %v2559 = vadd.f32 0.0, %v2558
  %v2560 = vpop.f32.mrf.mxu0
  %2561 = vmatprep.mubr.f32.mxu0 0.0
  %2562 = vmatmul.mubr.f32.gmra.mxu0 %v2243
  %v2563 = vpop.f32.mrf.mxu0
  %v2564 = vadd.f32 0.0, %v2563
  %v2565 = vpop.f32.mrf.mxu0
  %2566 = vmatprep.mubr.f32.mxu0 0.0
  %2567 = vmatmul.mubr.f32.gmra.mxu0 %v2246
  %v2568 = vpop.f32.mrf.mxu0
  %v2569 = vadd.f32 0.0, %v2568
  %v2570 = vpop.f32.mrf.mxu0
  %2571 = vmatprep.mubr.f32.mxu0 0.0
  %2572 = vmatmul.mubr.f32.gmra.mxu0 %v2249
  %v2573 = vpop.f32.mrf.mxu0
  %v2574 = vadd.f32 0.0, %v2573
  %v2575 = vpop.f32.mrf.mxu0
  %2576 = vmatprep.mubr.f32.mxu0 0.0
  %2577 = vmatmul.mubr.f32.gmra.mxu0 %v2252
  %v2578 = vpop.f32.mrf.mxu0
  %v2579 = vadd.f32 0.0, %v2578
  %v2580 = vpop.f32.mrf.mxu0
  %2581 = vmatprep.mubr.f32.mxu0 0.0
  %2582 = vmatmul.mubr.f32.gmra.mxu0 %v2255
  %v2583 = vpop.f32.mrf.mxu0
  %v2584 = vadd.f32 0.0, %v2583
  %v2585 = vpop.f32.mrf.mxu0
  %2586 = vmatprep.mubr.f32.mxu0 0.0
  %2587 = vmatmul.mubr.f32.gmra.mxu0 %v2258
  %v2588 = vpop.f32.mrf.mxu0
  %v2589 = vadd.f32 0.0, %v2588
  %v2590 = vpop.f32.mrf.mxu0
  %2591 = vmatprep.mubr.f32.mxu0 0.0
  %2592 = vmatmul.mubr.f32.gmra.mxu0 %v2261
  %v2593 = vpop.f32.mrf.mxu0
  %v2594 = vadd.f32 0.0, %v2593
  %v2595 = vpop.f32.mrf.mxu0
  %2596 = vmatprep.mubr.f32.mxu0 0.0
  %2597 = vmatmul.mubr.f32.gmra.mxu0 %v2264
  %v2598 = vpop.f32.mrf.mxu0
  %v2599 = vadd.f32 0.0, %v2598
  %v2600 = vpop.f32.mrf.mxu0
  %2601 = vmatprep.mubr.f32.mxu0 0.0
  %2602 = vmatmul.mubr.f32.gmra.mxu0 %v2267
  %v2603 = vpop.f32.mrf.mxu0
  %v2604 = vadd.f32 0.0, %v2603
  %v2605 = vpop.f32.mrf.mxu0
  %2606 = vmatprep.mubr.f32.mxu0 0.0
  %2607 = vmatmul.mubr.f32.gmra.mxu0 %v2270
  %v2608 = vpop.f32.mrf.mxu0
  %v2609 = vadd.f32 0.0, %v2608
  %v2610 = vpop.f32.mrf.mxu0
  %2611 = vmatprep.mubr.f32.mxu0 0.0
  %2612 = vmatmul.mubr.f32.gmra.mxu0 %v2273
  %v2613 = vpop.f32.mrf.mxu0
  %v2614 = vadd.f32 0.0, %v2613
  %v2615 = vpop.f32.mrf.mxu0
  %2616 = vmatprep.mubr.f32.mxu0 0.0
  %2617 = vmatmul.mubr.f32.gmra.mxu0 %v2276
  %v2618 = vpop.f32.mrf.mxu0
  %v2619 = vadd.f32 0.0, %v2618
  %v2620 = vpop.f32.mrf.mxu0
  %2621 = vmatprep.mubr.f32.mxu0 0.0
  %2622 = vmatmul.mubr.f32.gmra.mxu0 %v2279
  %v2623 = vpop.f32.mrf.mxu0
  %v2624 = vadd.f32 0.0, %v2623
  %v2625 = vpop.f32.mrf.mxu0
  %2626 = vmatprep.mubr.f32.mxu0 0.0
  %2627 = vmatmul.mubr.f32.gmra.mxu0 %v2282
  %v2628 = vpop.f32.mrf.mxu0
  %v2629 = vadd.f32 0.0, %v2628
  %v2630 = vpop.f32.mrf.mxu0
  %2631 = vmatprep.mubr.f32.mxu0 0.0
  %2632 = vmatmul.mubr.f32.gmra.mxu0 %v2285
  %v2633 = vpop.f32.mrf.mxu0
  %v2634 = vadd.f32 0.0, %v2633
  %v2635 = vpop.f32.mrf.mxu0
  %2636 = vmatprep.mubr.f32.mxu0 0.0
  %2637 = vmatmul.mubr.f32.gmra.mxu0 %v2288
  %v2638 = vpop.f32.mrf.mxu0
  %v2639 = vadd.f32 0.0, %v2638
  %v2640 = vpop.f32.mrf.mxu0
  %2641 = vmatprep.mubr.f32.mxu0 0.0
  %2642 = vmatmul.mubr.f32.gmra.mxu0 %v2291
  %v2643 = vpop.f32.mrf.mxu0
  %v2644 = vadd.f32 0.0, %v2643
  %v2645 = vpop.f32.mrf.mxu0
  %2646 = vmatprep.mubr.f32.mxu0 0.0
  %2647 = vmatmul.mubr.f32.gmra.mxu0 %v2294
  %v2648 = vpop.f32.mrf.mxu0
  %v2649 = vadd.f32 0.0, %v2648
  %v2650 = vpop.f32.mrf.mxu0
  %2651 = vmatprep.mubr.f32.mxu0 0.0
  %2652 = vmatmul.mubr.f32.gmra.mxu0 %v2297
  %v2653 = vpop.f32.mrf.mxu0
  %v2654 = vadd.f32 0.0, %v2653
  %v2655 = vpop.f32.mrf.mxu0
  %2656 = vmatprep.mubr.f32.mxu0 0.0
  %2657 = vmatmul.mubr.f32.gmra.mxu0 %v2300
  %v2658 = vpop.f32.mrf.mxu0
  %v2659 = vadd.f32 0.0, %v2658
  %v2660 = vpop.f32.mrf.mxu0
  %2661 = vmatprep.mubr.f32.mxu0 0.0
  %2662 = vmatmul.mubr.f32.gmra.mxu0 %v2303
  %v2663 = vpop.f32.mrf.mxu0
  %v2664 = vadd.f32 0.0, %v2663
  %v2665 = vpop.f32.mrf.mxu0
  %2666 = vmatprep.mubr.f32.mxu0 0.0
  %2667 = vmatmul.mubr.f32.gmra.mxu0 %v2306
  %v2668 = vpop.f32.mrf.mxu0
  %v2669 = vadd.f32 0.0, %v2668
  %v2670 = vpop.f32.mrf.mxu0
  %2671 = vmatprep.mubr.f32.mxu0 0.0
  %2672 = vmatmul.mubr.f32.gmra.mxu0 %v2309
  %v2673 = vpop.f32.mrf.mxu0
  %v2674 = vadd.f32 0.0, %v2673
  %v2675 = vpop.f32.mrf.mxu0
  %2676 = vmatprep.mubr.f32.mxu0 0.0
  %2677 = vmatmul.mubr.f32.gmra.mxu0 %v2312
  %v2678 = vpop.f32.mrf.mxu0
  %v2679 = vadd.f32 0.0, %v2678
  %v2680 = vpop.f32.mrf.mxu0
  %2681 = vmatprep.mubr.f32.mxu0 0.0
  %2682 = vmatmul.mubr.f32.gmra.mxu0 %v2315
  %v2683 = vpop.f32.mrf.mxu0
  %v2684 = vadd.f32 0.0, %v2683
  %v2685 = vpop.f32.mrf.mxu0
  %2686 = vmatprep.mubr.f32.mxu0 0.0
  %2687 = vmatmul.mubr.f32.gmra.mxu0 %v2318
  %v2688 = vpop.f32.mrf.mxu0
  %v2689 = vadd.f32 0.0, %v2688
  %v2690 = vpop.f32.mrf.mxu0
  %2691 = vmatprep.mubr.f32.mxu0 0.0
  %2692 = vmatmul.mubr.f32.gmra.mxu0 %v2321
  %v2693 = vpop.f32.mrf.mxu0
  %v2694 = vadd.f32 0.0, %v2693
  %v2695 = vpop.f32.mrf.mxu0
  %2696 = vmatprep.mubr.f32.mxu0 0.0
  %2697 = vmatmul.mubr.f32.gmra.mxu0 %v2324
  %v2698 = vpop.f32.mrf.mxu0
  %v2699 = vadd.f32 0.0, %v2698
  %v2700 = vpop.f32.mrf.mxu0
  %2701 = vmatprep.mubr.f32.mxu0 0.0
  %2702 = vmatmul.mubr.f32.gmra.mxu0 %v2327
  %v2703 = vpop.f32.mrf.mxu0
  %v2704 = vadd.f32 0.0, %v2703
  %v2705 = vpop.f32.mrf.mxu0
  %2706 = vmatprep.mubr.f32.mxu0 0.0
  %2707 = vmatmul.mubr.f32.gmra.mxu0 %v2330
  %v2708 = vpop.f32.mrf.mxu0
  %v2709 = vadd.f32 0.0, %v2708
  %v2710 = vpop.f32.mrf.mxu0
  %2711 = vmatprep.mubr.f32.mxu0 0.0
  %2712 = vmatmul.mubr.f32.gmra.mxu0 %v2333
  %v2713 = vpop.f32.mrf.mxu0
  %v2714 = vadd.f32 0.0, %v2713
  %v2715 = vpop.f32.mrf.mxu0
  %2716 = vmatprep.mubr.f32.mxu0 0.0
  %2717 = vmatmul.mubr.f32.gmra.mxu0 %v2336
  %v2718 = vpop.f32.mrf.mxu0
  %v2719 = vadd.f32 0.0, %v2718
  %v2720 = vpop.f32.mrf.mxu0
  %2721 = vmatprep.mubr.f32.mxu0 0.0
  %2722 = vmatmul.mubr.f32.gmra.mxu0 %v2339
  %v2723 = vpop.f32.mrf.mxu0
  %v2724 = vadd.f32 0.0, %v2723
  %v2725 = vpop.f32.mrf.mxu0
  %2726 = vmatprep.mubr.f32.mxu0 0.0
  %2727 = vmatmul.mubr.f32.gmra.mxu0 %v2342
  %v2728 = vpop.f32.mrf.mxu0
  %v2729 = vadd.f32 0.0, %v2728
  %v2730 = vpop.f32.mrf.mxu0
  %2731 = vdwg.mxu0
  %v2732 = vadd.f32 %v2023, %v2414
  %v2733 = vadd.f32 %v2024, %v2419
  %v2734 = vadd.f32 %v2025, %v2424
  %v2735 = vadd.f32 %v2026, %v2429
  %v2736 = vadd.f32 %v2027, %v2434
  %v2737 = vadd.f32 %v2028, %v2439
  %v2738 = vadd.f32 %v2029, %v2444
  %v2739 = vadd.f32 %v2030, %v2449
  %v2740 = vadd.f32 %v2031, %v2454
  %v2741 = vadd.f32 %v2032, %v2459
  %v2742 = vadd.f32 %v2033, %v2464
  %v2743 = vadd.f32 %v2034, %v2469
  %v2744 = vadd.f32 %v2035, %v2474
  %v2745 = vadd.f32 %v2036, %v2479
  %v2746 = vadd.f32 %v2037, %v2484
  %v2747 = vadd.f32 %v2038, %v2489
  %v2748 = vadd.f32 %v2039, %v2494
  %v2749 = vadd.f32 %v2040, %v2499
  %v2750 = vadd.f32 %v2041, %v2504
  %v2751 = vadd.f32 %v2042, %v2509
  %v2752 = vadd.f32 %v2043, %v2514
  %v2753 = vadd.f32 %v2044, %v2519
  %v2754 = vadd.f32 %v2045, %v2524
  %v2755 = vadd.f32 %v2046, %v2529
  %v2756 = vadd.f32 %v2047, %v2534
  %v2757 = vadd.f32 %v2048, %v2539
  %v2758 = vadd.f32 %v2049, %v2544
  %v2759 = vadd.f32 %v2050, %v2549
  %v2760 = vadd.f32 %v2051, %v2554
  %v2761 = vadd.f32 %v2052, %v2559
  %v2762 = vadd.f32 %v2053, %v2564
  %v2763 = vadd.f32 %v2054, %v2569
  %v2764 = vadd.f32 %v2055, %v2574
  %v2765 = vadd.f32 %v2056, %v2579
  %v2766 = vadd.f32 %v2057, %v2584
  %v2767 = vadd.f32 %v2058, %v2589
  %v2768 = vadd.f32 %v2059, %v2594
  %v2769 = vadd.f32 %v2060, %v2599
  %v2770 = vadd.f32 %v2061, %v2604
  %v2771 = vadd.f32 %v2062, %v2609
  %v2772 = vadd.f32 %v2063, %v2614
  %v2773 = vadd.f32 %v2064, %v2619
  %v2774 = vadd.f32 %v2065, %v2624
  %v2775 = vadd.f32 %v2066, %v2629
  %v2776 = vadd.f32 %v2067, %v2634
  %v2777 = vadd.f32 %v2068, %v2639
  %v2778 = vadd.f32 %v2069, %v2644
  %v2779 = vadd.f32 %v2070, %v2649
  %v2780 = vadd.f32 %v2071, %v2654
  %v2781 = vadd.f32 %v2072, %v2659
  %v2782 = vadd.f32 %v2073, %v2664
  %v2783 = vadd.f32 %v2074, %v2669
  %v2784 = vadd.f32 %v2075, %v2674
  %v2785 = vadd.f32 %v2076, %v2679
  %v2786 = vadd.f32 %v2077, %v2684
  %v2787 = vadd.f32 %v2078, %v2689
  %v2788 = vadd.f32 %v2079, %v2694
  %v2789 = vadd.f32 %v2080, %v2699
  %v2790 = vadd.f32 %v2081, %v2704
  %v2791 = vadd.f32 %v2082, %v2709
  %v2792 = vadd.f32 %v2083, %v2714
  %v2793 = vadd.f32 %v2084, %v2719
  %v2794 = vadd.f32 %v2085, %v2724
  %v2795 = vadd.f32 %v2086, %v2729
  %v2796 = vld [vmem:[%s5] sm:$0x1]
  %v2798 = vlaneseq
  %v2799 = vshrl.u32 %v2798, 7
  %v2800 = vsub.s32 0, %v2799
  %v2801 = vrot.slane %v2796, %v2800
  %v2803 = vadd.f32 %v2732, %v2801
  %v2804 = vadd.f32 %v2733, %v2801
  %v2805 = vadd.f32 %v2734, %v2801
  %v2806 = vadd.f32 %v2735, %v2801
  %v2807 = vadd.f32 %v2736, %v2801
  %v2808 = vadd.f32 %v2737, %v2801
  %v2809 = vadd.f32 %v2738, %v2801
  %v2810 = vadd.f32 %v2739, %v2801
  %v2811 = vadd.f32 %v2740, %v2801
  %v2812 = vadd.f32 %v2741, %v2801
  %v2813 = vadd.f32 %v2742, %v2801
  %v2814 = vadd.f32 %v2743, %v2801
  %v2815 = vadd.f32 %v2744, %v2801
  %v2816 = vadd.f32 %v2745, %v2801
  %v2817 = vadd.f32 %v2746, %v2801
  %v2818 = vadd.f32 %v2747, %v2801
  %v2819 = vadd.f32 %v2748, %v2801
  %v2820 = vadd.f32 %v2749, %v2801
  %v2821 = vadd.f32 %v2750, %v2801
  %v2822 = vadd.f32 %v2751, %v2801
  %v2823 = vadd.f32 %v2752, %v2801
  %v2824 = vadd.f32 %v2753, %v2801
  %v2825 = vadd.f32 %v2754, %v2801
  %v2826 = vadd.f32 %v2755, %v2801
  %v2827 = vadd.f32 %v2756, %v2801
  %v2828 = vadd.f32 %v2757, %v2801
  %v2829 = vadd.f32 %v2758, %v2801
  %v2830 = vadd.f32 %v2759, %v2801
  %v2831 = vadd.f32 %v2760, %v2801
  %v2832 = vadd.f32 %v2761, %v2801
  %v2833 = vadd.f32 %v2762, %v2801
  %v2834 = vadd.f32 %v2763, %v2801
  %v2835 = vadd.f32 %v2764, %v2801
  %v2836 = vadd.f32 %v2765, %v2801
  %v2837 = vadd.f32 %v2766, %v2801
  %v2838 = vadd.f32 %v2767, %v2801
  %v2839 = vadd.f32 %v2768, %v2801
  %v2840 = vadd.f32 %v2769, %v2801
  %v2841 = vadd.f32 %v2770, %v2801
  %v2842 = vadd.f32 %v2771, %v2801
  %v2843 = vadd.f32 %v2772, %v2801
  %v2844 = vadd.f32 %v2773, %v2801
  %v2845 = vadd.f32 %v2774, %v2801
  %v2846 = vadd.f32 %v2775, %v2801
  %v2847 = vadd.f32 %v2776, %v2801
  %v2848 = vadd.f32 %v2777, %v2801
  %v2849 = vadd.f32 %v2778, %v2801
  %v2850 = vadd.f32 %v2779, %v2801
  %v2851 = vadd.f32 %v2780, %v2801
  %v2852 = vadd.f32 %v2781, %v2801
  %v2853 = vadd.f32 %v2782, %v2801
  %v2854 = vadd.f32 %v2783, %v2801
  %v2855 = vadd.f32 %v2784, %v2801
  %v2856 = vadd.f32 %v2785, %v2801
  %v2857 = vadd.f32 %v2786, %v2801
  %v2858 = vadd.f32 %v2787, %v2801
  %v2859 = vadd.f32 %v2788, %v2801
  %v2860 = vadd.f32 %v2789, %v2801
  %v2861 = vadd.f32 %v2790, %v2801
  %v2862 = vadd.f32 %v2791, %v2801
  %v2863 = vadd.f32 %v2792, %v2801
  %v2864 = vadd.f32 %v2793, %v2801
  %v2865 = vadd.f32 %v2794, %v2801
  %v2866 = vadd.f32 %v2795, %v2801
  %v2867 = vmax.f32 %v2803, 0.0
  %v2868 = vmax.f32 %v2804, 0.0
  %v2869 = vmax.f32 %v2805, 0.0
  %v2870 = vmax.f32 %v2806, 0.0
  %v2871 = vmax.f32 %v2807, 0.0
  %v2872 = vmax.f32 %v2808, 0.0
  %v2873 = vmax.f32 %v2809, 0.0
  %v2874 = vmax.f32 %v2810, 0.0
  %v2875 = vmax.f32 %v2811, 0.0
  %v2876 = vmax.f32 %v2812, 0.0
  %v2877 = vmax.f32 %v2813, 0.0
  %v2878 = vmax.f32 %v2814, 0.0
  %v2879 = vmax.f32 %v2815, 0.0
  %v2880 = vmax.f32 %v2816, 0.0
  %v2881 = vmax.f32 %v2817, 0.0
  %v2882 = vmax.f32 %v2818, 0.0
  %v2883 = vmax.f32 %v2819, 0.0
  %v2884 = vmax.f32 %v2820, 0.0
  %v2885 = vmax.f32 %v2821, 0.0
  %v2886 = vmax.f32 %v2822, 0.0
  %v2887 = vmax.f32 %v2823, 0.0
  %v2888 = vmax.f32 %v2824, 0.0
  %v2889 = vmax.f32 %v2825, 0.0
  %v2890 = vmax.f32 %v2826, 0.0
  %v2891 = vmax.f32 %v2827, 0.0
  %v2892 = vmax.f32 %v2828, 0.0
  %v2893 = vmax.f32 %v2829, 0.0
  %v2894 = vmax.f32 %v2830, 0.0
  %v2895 = vmax.f32 %v2831, 0.0
  %v2896 = vmax.f32 %v2832, 0.0
  %v2897 = vmax.f32 %v2833, 0.0
  %v2898 = vmax.f32 %v2834, 0.0
  %v2899 = vmax.f32 %v2835, 0.0
  %v2900 = vmax.f32 %v2836, 0.0
  %v2901 = vmax.f32 %v2837, 0.0
  %v2902 = vmax.f32 %v2838, 0.0
  %v2903 = vmax.f32 %v2839, 0.0
  %v2904 = vmax.f32 %v2840, 0.0
  %v2905 = vmax.f32 %v2841, 0.0
  %v2906 = vmax.f32 %v2842, 0.0
  %v2907 = vmax.f32 %v2843, 0.0
  %v2908 = vmax.f32 %v2844, 0.0
  %v2909 = vmax.f32 %v2845, 0.0
  %v2910 = vmax.f32 %v2846, 0.0
  %v2911 = vmax.f32 %v2847, 0.0
  %v2912 = vmax.f32 %v2848, 0.0
  %v2913 = vmax.f32 %v2849, 0.0
  %v2914 = vmax.f32 %v2850, 0.0
  %v2915 = vmax.f32 %v2851, 0.0
  %v2916 = vmax.f32 %v2852, 0.0
  %v2917 = vmax.f32 %v2853, 0.0
  %v2918 = vmax.f32 %v2854, 0.0
  %v2919 = vmax.f32 %v2855, 0.0
  %v2920 = vmax.f32 %v2856, 0.0
  %v2921 = vmax.f32 %v2857, 0.0
  %v2922 = vmax.f32 %v2858, 0.0
  %v2923 = vmax.f32 %v2859, 0.0
  %v2924 = vmax.f32 %v2860, 0.0
  %v2925 = vmax.f32 %v2861, 0.0
  %v2926 = vmax.f32 %v2862, 0.0
  %v2927 = vmax.f32 %v2863, 0.0
  %v2928 = vmax.f32 %v2864, 0.0
  %v2929 = vmax.f32 %v2865, 0.0
  %v2930 = vmax.f32 %v2866, 0.0
  %v2931 = vld [vmem:[%s6] sm:$0xff]
  %v2932 = vld [vmem:[%s7] sm:$0xff]
  %vm2933 = vcmask 64512
  %v2935 = vsel %vm2933, %v2883, 0
  %v2938 = vsel %vm2933, %v2884, 0
  %v2941 = vsel %vm2933, %v2885, 0
  %v2944 = vsel %vm2933, %v2886, 0
  %v2947 = vsel %vm2933, %v2887, 0
  %v2950 = vsel %vm2933, %v2888, 0
  %v2953 = vsel %vm2933, %v2889, 0
  %v2956 = vsel %vm2933, %v2890, 0
  %v2959 = vsel %vm2933, %v2891, 0
  %v2962 = vsel %vm2933, %v2892, 0
  %v2965 = vsel %vm2933, %v2893, 0
  %v2968 = vsel %vm2933, %v2894, 0
  %v2971 = vsel %vm2933, %v2895, 0
  %v2974 = vsel %vm2933, %v2896, 0
  %v2977 = vsel %vm2933, %v2897, 0
  %v2980 = vsel %vm2933, %v2898, 0
  %2982 = vmatprep.subr.mxu0 0.0
  %2983 = vmatpush1.msra.mxu0 0.0
  %2984 = vmatprep.subr.mxu0 0.0
  %2985 = vmatpush1.msra.mxu0 0.0
  %2986 = vmatprep.subr.mxu0 0.0
  %2987 = vmatpush1.msra.mxu0 0.0
  %2988 = vmatprep.subr.mxu0 0.0
  %2989 = vmatpush1.msra.mxu0 0.0
  %2990 = vmatprep.subr.mxu0 0.0
  %2991 = vmatpush1.msra.mxu0 0.0
  %2992 = vmatprep.subr.mxu0 0.0
  %2993 = vmatpush1.msra.mxu0 0.0
  %2994 = vmatprep.subr.mxu0 0.0
  %2995 = vmatpush1.msra.mxu0 0.0
  %2996 = vmatprep.subr.mxu0 0.0
  %2997 = vmatpush1.msra.mxu0 0.0
  %2998 = vmatprep.subr.mxu0 0.0
  %2999 = vmatpush1.msra.mxu0 0.0
  %3000 = vmatprep.subr.mxu0 0.0
  %3001 = vmatpush1.msra.mxu0 0.0
  %3002 = vmatprep.subr.mxu0 0.0
  %3003 = vmatpush1.msra.mxu0 0.0
  %3004 = vmatprep.subr.mxu0 0.0
  %3005 = vmatpush1.msra.mxu0 0.0
  %3006 = vmatprep.subr.mxu0 0.0
  %3007 = vmatpush1.msra.mxu0 0.0
  %3008 = vmatprep.subr.mxu0 0.0
  %3009 = vmatpush1.msra.mxu0 0.0
  %3010 = vmatprep.subr.mxu0 0.0
  %3011 = vmatpush1.msra.mxu0 0.0
  %3012 = vmatprep.subr.mxu0 0.0
  %3013 = vmatpush1.msra.mxu0 %v2932
  %3014 = vmatprep.subr.mxu0 0.0
  %3015 = vmatpush2.msra.mxu0 0.0
  %3016 = vmatprep.subr.mxu0 0.0
  %3017 = vmatpush2.msra.mxu0 0.0
  %3018 = vmatprep.subr.mxu0 0.0
  %3019 = vmatpush2.msra.mxu0 0.0
  %3020 = vmatprep.subr.mxu0 0.0
  %3021 = vmatpush2.msra.mxu0 0.0
  %3022 = vmatprep.subr.mxu0 0.0
  %3023 = vmatpush2.msra.mxu0 0.0
  %3024 = vmatprep.subr.mxu0 0.0
  %3025 = vmatpush2.msra.mxu0 0.0
  %3026 = vmatprep.subr.mxu0 0.0
  %3027 = vmatpush2.msra.mxu0 0.0
  %3028 = vmatprep.subr.mxu0 0.0
  %3029 = vmatpush2.msra.mxu0 0.0
  %3030 = vmatprep.subr.mxu0 0.0
  %3031 = vmatpush2.msra.mxu0 0.0
  %3032 = vmatprep.subr.mxu0 0.0
  %3033 = vmatpush2.msra.mxu0 0.0
  %3034 = vmatprep.subr.mxu0 0.0
  %3035 = vmatpush2.msra.mxu0 0.0
  %3036 = vmatprep.subr.mxu0 0.0
  %3037 = vmatpush2.msra.mxu0 0.0
  %3038 = vmatprep.subr.mxu0 0.0
  %3039 = vmatpush2.msra.mxu0 0.0
  %3040 = vmatprep.subr.mxu0 0.0
  %3041 = vmatpush2.msra.mxu0 0.0
  %3042 = vmatprep.subr.mxu0 0.0
  %3043 = vmatpush2.msra.mxu0 0.0
  %3044 = vmatprep.subr.mxu0 0.0
  %3045 = vmatpush2.msra.mxu0 0.0
  %3046 = vmatprep.mubr.f32.mxu0 0.0
  %3047 = vmatmul.mubr.f32.gmra.mxu0 %v2935
  %v3048 = vpop.f32.mrf.mxu0
  %v3049 = vadd.f32 0.0, %v3048
  %v3050 = vpop.f32.mrf.mxu0
  %3051 = vmatprep.mubr.f32.mxu0 0.0
  %3052 = vmatmul.mubr.f32.gmra.mxu0 %v2938
  %v3053 = vpop.f32.mrf.mxu0
  %v3054 = vadd.f32 0.0, %v3053
  %v3055 = vpop.f32.mrf.mxu0
  %3056 = vmatprep.mubr.f32.mxu0 0.0
  %3057 = vmatmul.mubr.f32.gmra.mxu0 %v2941
  %v3058 = vpop.f32.mrf.mxu0
  %v3059 = vadd.f32 0.0, %v3058
  %v3060 = vpop.f32.mrf.mxu0
  %3061 = vmatprep.mubr.f32.mxu0 0.0
  %3062 = vmatmul.mubr.f32.gmra.mxu0 %v2944
  %v3063 = vpop.f32.mrf.mxu0
  %v3064 = vadd.f32 0.0, %v3063
  %v3065 = vpop.f32.mrf.mxu0
  %3066 = vmatprep.mubr.f32.mxu0 0.0
  %3067 = vmatmul.mubr.f32.gmra.mxu0 %v2947
  %v3068 = vpop.f32.mrf.mxu0
  %v3069 = vadd.f32 0.0, %v3068
  %v3070 = vpop.f32.mrf.mxu0
  %3071 = vmatprep.mubr.f32.mxu0 0.0
  %3072 = vmatmul.mubr.f32.gmra.mxu0 %v2950
  %v3073 = vpop.f32.mrf.mxu0
  %v3074 = vadd.f32 0.0, %v3073
  %v3075 = vpop.f32.mrf.mxu0
  %3076 = vmatprep.mubr.f32.mxu0 0.0
  %3077 = vmatmul.mubr.f32.gmra.mxu0 %v2953
  %v3078 = vpop.f32.mrf.mxu0
  %v3079 = vadd.f32 0.0, %v3078
  %v3080 = vpop.f32.mrf.mxu0
  %3081 = vmatprep.mubr.f32.mxu0 0.0
  %3082 = vmatmul.mubr.f32.gmra.mxu0 %v2956
  %v3083 = vpop.f32.mrf.mxu0
  %v3084 = vadd.f32 0.0, %v3083
  %v3085 = vpop.f32.mrf.mxu0
  %3086 = vmatprep.mubr.f32.mxu0 0.0
  %3087 = vmatmul.mubr.f32.gmra.mxu0 %v2959
  %v3088 = vpop.f32.mrf.mxu0
  %v3089 = vadd.f32 0.0, %v3088
  %v3090 = vpop.f32.mrf.mxu0
  %3091 = vmatprep.mubr.f32.mxu0 0.0
  %3092 = vmatmul.mubr.f32.gmra.mxu0 %v2962
  %v3093 = vpop.f32.mrf.mxu0
  %v3094 = vadd.f32 0.0, %v3093
  %v3095 = vpop.f32.mrf.mxu0
  %3096 = vmatprep.mubr.f32.mxu0 0.0
  %3097 = vmatmul.mubr.f32.gmra.mxu0 %v2965
  %v3098 = vpop.f32.mrf.mxu0
  %v3099 = vadd.f32 0.0, %v3098
  %v3100 = vpop.f32.mrf.mxu0
  %3101 = vmatprep.mubr.f32.mxu0 0.0
  %3102 = vmatmul.mubr.f32.gmra.mxu0 %v2968
  %v3103 = vpop.f32.mrf.mxu0
  %v3104 = vadd.f32 0.0, %v3103
  %v3105 = vpop.f32.mrf.mxu0
  %3106 = vmatprep.mubr.f32.mxu0 0.0
  %3107 = vmatmul.mubr.f32.gmra.mxu0 %v2971
  %v3108 = vpop.f32.mrf.mxu0
  %v3109 = vadd.f32 0.0, %v3108
  %v3110 = vpop.f32.mrf.mxu0
  %3111 = vmatprep.mubr.f32.mxu0 0.0
  %3112 = vmatmul.mubr.f32.gmra.mxu0 %v2974
  %v3113 = vpop.f32.mrf.mxu0
  %v3114 = vadd.f32 0.0, %v3113
  %v3115 = vpop.f32.mrf.mxu0
  %3116 = vmatprep.mubr.f32.mxu0 0.0
  %3117 = vmatmul.mubr.f32.gmra.mxu0 %v2977
  %v3118 = vpop.f32.mrf.mxu0
  %v3119 = vadd.f32 0.0, %v3118
  %v3120 = vpop.f32.mrf.mxu0
  %3121 = vmatprep.mubr.f32.mxu0 0.0
  %3122 = vmatmul.mubr.f32.gmra.mxu0 %v2980
  %v3123 = vpop.f32.mrf.mxu0
  %v3124 = vadd.f32 0.0, %v3123
  %v3125 = vpop.f32.mrf.mxu0
  %3126 = vdwg.mxu0
  %v3128 = vsel %vm2933, %v2867, 0
  %v3131 = vsel %vm2933, %v2868, 0
  %v3134 = vsel %vm2933, %v2869, 0
  %v3137 = vsel %vm2933, %v2870, 0
  %v3140 = vsel %vm2933, %v2871, 0
  %v3143 = vsel %vm2933, %v2872, 0
  %v3146 = vsel %vm2933, %v2873, 0
  %v3149 = vsel %vm2933, %v2874, 0
  %v3152 = vsel %vm2933, %v2875, 0
  %v3155 = vsel %vm2933, %v2876, 0
  %v3158 = vsel %vm2933, %v2877, 0
  %v3161 = vsel %vm2933, %v2878, 0
  %v3164 = vsel %vm2933, %v2879, 0
  %v3167 = vsel %vm2933, %v2880, 0
  %v3170 = vsel %vm2933, %v2881, 0
  %v3173 = vsel %vm2933, %v2882, 0
  %3175 = vmatprep.subr.mxu0 0.0
  %3176 = vmatpush1.msra.mxu0 0.0
  %3177 = vmatprep.subr.mxu0 0.0
  %3178 = vmatpush1.msra.mxu0 0.0
  %3179 = vmatprep.subr.mxu0 0.0
  %3180 = vmatpush1.msra.mxu0 0.0
  %3181 = vmatprep.subr.mxu0 0.0
  %3182 = vmatpush1.msra.mxu0 0.0
  %3183 = vmatprep.subr.mxu0 0.0
  %3184 = vmatpush1.msra.mxu0 0.0
  %3185 = vmatprep.subr.mxu0 0.0
  %3186 = vmatpush1.msra.mxu0 0.0
  %3187 = vmatprep.subr.mxu0 0.0
  %3188 = vmatpush1.msra.mxu0 0.0
  %3189 = vmatprep.subr.mxu0 0.0
  %3190 = vmatpush1.msra.mxu0 0.0
  %3191 = vmatprep.subr.mxu0 0.0
  %3192 = vmatpush1.msra.mxu0 0.0
  %3193 = vmatprep.subr.mxu0 0.0
  %3194 = vmatpush1.msra.mxu0 0.0
  %3195 = vmatprep.subr.mxu0 0.0
  %3196 = vmatpush1.msra.mxu0 0.0
  %3197 = vmatprep.subr.mxu0 0.0
  %3198 = vmatpush1.msra.mxu0 0.0
  %3199 = vmatprep.subr.mxu0 0.0
  %3200 = vmatpush1.msra.mxu0 0.0
  %3201 = vmatprep.subr.mxu0 0.0
  %3202 = vmatpush1.msra.mxu0 0.0
  %3203 = vmatprep.subr.mxu0 0.0
  %3204 = vmatpush1.msra.mxu0 0.0
  %3205 = vmatprep.subr.mxu0 0.0
  %3206 = vmatpush1.msra.mxu0 %v2931
  %3207 = vmatprep.subr.mxu0 0.0
  %3208 = vmatpush2.msra.mxu0 0.0
  %3209 = vmatprep.subr.mxu0 0.0
  %3210 = vmatpush2.msra.mxu0 0.0
  %3211 = vmatprep.subr.mxu0 0.0
  %3212 = vmatpush2.msra.mxu0 0.0
  %3213 = vmatprep.subr.mxu0 0.0
  %3214 = vmatpush2.msra.mxu0 0.0
  %3215 = vmatprep.subr.mxu0 0.0
  %3216 = vmatpush2.msra.mxu0 0.0
  %3217 = vmatprep.subr.mxu0 0.0
  %3218 = vmatpush2.msra.mxu0 0.0
  %3219 = vmatprep.subr.mxu0 0.0
  %3220 = vmatpush2.msra.mxu0 0.0
  %3221 = vmatprep.subr.mxu0 0.0
  %3222 = vmatpush2.msra.mxu0 0.0
  %3223 = vmatprep.subr.mxu0 0.0
  %3224 = vmatpush2.msra.mxu0 0.0
  %3225 = vmatprep.subr.mxu0 0.0
  %3226 = vmatpush2.msra.mxu0 0.0
  %3227 = vmatprep.subr.mxu0 0.0
  %3228 = vmatpush2.msra.mxu0 0.0
  %3229 = vmatprep.subr.mxu0 0.0
  %3230 = vmatpush2.msra.mxu0 0.0
  %3231 = vmatprep.subr.mxu0 0.0
  %3232 = vmatpush2.msra.mxu0 0.0
  %3233 = vmatprep.subr.mxu0 0.0
  %3234 = vmatpush2.msra.mxu0 0.0
  %3235 = vmatprep.subr.mxu0 0.0
  %3236 = vmatpush2.msra.mxu0 0.0
  %3237 = vmatprep.subr.mxu0 0.0
  %3238 = vmatpush2.msra.mxu0 0.0
  %3239 = vmatprep.mubr.f32.mxu0 0.0
  %3240 = vmatmul.mubr.f32.gmra.mxu0 %v3128
  %v3241 = vpop.f32.mrf.mxu0
  %v3242 = vadd.f32 %v3049, %v3241
  %v3243 = vpop.f32.mrf.mxu0
  %3244 = vmatprep.mubr.f32.mxu0 0.0
  %3245 = vmatmul.mubr.f32.gmra.mxu0 %v3131
  %v3246 = vpop.f32.mrf.mxu0
  %v3247 = vadd.f32 %v3054, %v3246
  %v3248 = vpop.f32.mrf.mxu0
  %3249 = vmatprep.mubr.f32.mxu0 0.0
  %3250 = vmatmul.mubr.f32.gmra.mxu0 %v3134
  %v3251 = vpop.f32.mrf.mxu0
  %v3252 = vadd.f32 %v3059, %v3251
  %v3253 = vpop.f32.mrf.mxu0
  %3254 = vmatprep.mubr.f32.mxu0 0.0
  %3255 = vmatmul.mubr.f32.gmra.mxu0 %v3137
  %v3256 = vpop.f32.mrf.mxu0
  %v3257 = vadd.f32 %v3064, %v3256
  %v3258 = vpop.f32.mrf.mxu0
  %3259 = vmatprep.mubr.f32.mxu0 0.0
  %3260 = vmatmul.mubr.f32.gmra.mxu0 %v3140
  %v3261 = vpop.f32.mrf.mxu0
  %v3262 = vadd.f32 %v3069, %v3261
  %v3263 = vpop.f32.mrf.mxu0
  %3264 = vmatprep.mubr.f32.mxu0 0.0
  %3265 = vmatmul.mubr.f32.gmra.mxu0 %v3143
  %v3266 = vpop.f32.mrf.mxu0
  %v3267 = vadd.f32 %v3074, %v3266
  %v3268 = vpop.f32.mrf.mxu0
  %3269 = vmatprep.mubr.f32.mxu0 0.0
  %3270 = vmatmul.mubr.f32.gmra.mxu0 %v3146
  %v3271 = vpop.f32.mrf.mxu0
  %v3272 = vadd.f32 %v3079, %v3271
  %v3273 = vpop.f32.mrf.mxu0
  %3274 = vmatprep.mubr.f32.mxu0 0.0
  %3275 = vmatmul.mubr.f32.gmra.mxu0 %v3149
  %v3276 = vpop.f32.mrf.mxu0
  %v3277 = vadd.f32 %v3084, %v3276
  %v3278 = vpop.f32.mrf.mxu0
  %3279 = vmatprep.mubr.f32.mxu0 0.0
  %3280 = vmatmul.mubr.f32.gmra.mxu0 %v3152
  %v3281 = vpop.f32.mrf.mxu0
  %v3282 = vadd.f32 %v3089, %v3281
  %v3283 = vpop.f32.mrf.mxu0
  %3284 = vmatprep.mubr.f32.mxu0 0.0
  %3285 = vmatmul.mubr.f32.gmra.mxu0 %v3155
  %v3286 = vpop.f32.mrf.mxu0
  %v3287 = vadd.f32 %v3094, %v3286
  %v3288 = vpop.f32.mrf.mxu0
  %3289 = vmatprep.mubr.f32.mxu0 0.0
  %3290 = vmatmul.mubr.f32.gmra.mxu0 %v3158
  %v3291 = vpop.f32.mrf.mxu0
  %v3292 = vadd.f32 %v3099, %v3291
  %v3293 = vpop.f32.mrf.mxu0
  %3294 = vmatprep.mubr.f32.mxu0 0.0
  %3295 = vmatmul.mubr.f32.gmra.mxu0 %v3161
  %v3296 = vpop.f32.mrf.mxu0
  %v3297 = vadd.f32 %v3104, %v3296
  %v3298 = vpop.f32.mrf.mxu0
  %3299 = vmatprep.mubr.f32.mxu0 0.0
  %3300 = vmatmul.mubr.f32.gmra.mxu0 %v3164
  %v3301 = vpop.f32.mrf.mxu0
  %v3302 = vadd.f32 %v3109, %v3301
  %v3303 = vpop.f32.mrf.mxu0
  %3304 = vmatprep.mubr.f32.mxu0 0.0
  %3305 = vmatmul.mubr.f32.gmra.mxu0 %v3167
  %v3306 = vpop.f32.mrf.mxu0
  %v3307 = vadd.f32 %v3114, %v3306
  %v3308 = vpop.f32.mrf.mxu0
  %3309 = vmatprep.mubr.f32.mxu0 0.0
  %3310 = vmatmul.mubr.f32.gmra.mxu0 %v3170
  %v3311 = vpop.f32.mrf.mxu0
  %v3312 = vadd.f32 %v3119, %v3311
  %v3313 = vpop.f32.mrf.mxu0
  %3314 = vmatprep.mubr.f32.mxu0 0.0
  %3315 = vmatmul.mubr.f32.gmra.mxu0 %v3173
  %v3316 = vpop.f32.mrf.mxu0
  %v3317 = vadd.f32 %v3124, %v3316
  %v3318 = vpop.f32.mrf.mxu0
  %3319 = vdwg.mxu0
  %v3320 = vld [vmem:[%s8] sm:$0xff]
  %v3322 = vsel %vm2933, %v2899, 0
  %v3325 = vsel %vm2933, %v2900, 0
  %v3328 = vsel %vm2933, %v2901, 0
  %v3331 = vsel %vm2933, %v2902, 0
  %v3334 = vsel %vm2933, %v2903, 0
  %v3337 = vsel %vm2933, %v2904, 0
  %v3340 = vsel %vm2933, %v2905, 0
  %v3343 = vsel %vm2933, %v2906, 0
  %v3346 = vsel %vm2933, %v2907, 0
  %v3349 = vsel %vm2933, %v2908, 0
  %v3352 = vsel %vm2933, %v2909, 0
  %v3355 = vsel %vm2933, %v2910, 0
  %v3358 = vsel %vm2933, %v2911, 0
  %v3361 = vsel %vm2933, %v2912, 0
  %v3364 = vsel %vm2933, %v2913, 0
  %v3367 = vsel %vm2933, %v2914, 0
  %3369 = vmatprep.subr.mxu0 0.0
  %3370 = vmatpush1.msra.mxu0 0.0
  %3371 = vmatprep.subr.mxu0 0.0
  %3372 = vmatpush1.msra.mxu0 0.0
  %3373 = vmatprep.subr.mxu0 0.0
  %3374 = vmatpush1.msra.mxu0 0.0
  %3375 = vmatprep.subr.mxu0 0.0
  %3376 = vmatpush1.msra.mxu0 0.0
  %3377 = vmatprep.subr.mxu0 0.0
  %3378 = vmatpush1.msra.mxu0 0.0
  %3379 = vmatprep.subr.mxu0 0.0
  %3380 = vmatpush1.msra.mxu0 0.0
  %3381 = vmatprep.subr.mxu0 0.0
  %3382 = vmatpush1.msra.mxu0 0.0
  %3383 = vmatprep.subr.mxu0 0.0
  %3384 = vmatpush1.msra.mxu0 0.0
  %3385 = vmatprep.subr.mxu0 0.0
  %3386 = vmatpush1.msra.mxu0 0.0
  %3387 = vmatprep.subr.mxu0 0.0
  %3388 = vmatpush1.msra.mxu0 0.0
  %3389 = vmatprep.subr.mxu0 0.0
  %3390 = vmatpush1.msra.mxu0 0.0
  %3391 = vmatprep.subr.mxu0 0.0
  %3392 = vmatpush1.msra.mxu0 0.0
  %3393 = vmatprep.subr.mxu0 0.0
  %3394 = vmatpush1.msra.mxu0 0.0
  %3395 = vmatprep.subr.mxu0 0.0
  %3396 = vmatpush1.msra.mxu0 0.0
  %3397 = vmatprep.subr.mxu0 0.0
  %3398 = vmatpush1.msra.mxu0 0.0
  %3399 = vmatprep.subr.mxu0 0.0
  %3400 = vmatpush1.msra.mxu0 %v3320
  %3401 = vmatprep.subr.mxu0 0.0
  %3402 = vmatpush2.msra.mxu0 0.0
  %3403 = vmatprep.subr.mxu0 0.0
  %3404 = vmatpush2.msra.mxu0 0.0
  %3405 = vmatprep.subr.mxu0 0.0
  %3406 = vmatpush2.msra.mxu0 0.0
  %3407 = vmatprep.subr.mxu0 0.0
  %3408 = vmatpush2.msra.mxu0 0.0
  %3409 = vmatprep.subr.mxu0 0.0
  %3410 = vmatpush2.msra.mxu0 0.0
  %3411 = vmatprep.subr.mxu0 0.0
  %3412 = vmatpush2.msra.mxu0 0.0
  %3413 = vmatprep.subr.mxu0 0.0
  %3414 = vmatpush2.msra.mxu0 0.0
  %3415 = vmatprep.subr.mxu0 0.0
  %3416 = vmatpush2.msra.mxu0 0.0
  %3417 = vmatprep.subr.mxu0 0.0
  %3418 = vmatpush2.msra.mxu0 0.0
  %3419 = vmatprep.subr.mxu0 0.0
  %3420 = vmatpush2.msra.mxu0 0.0
  %3421 = vmatprep.subr.mxu0 0.0
  %3422 = vmatpush2.msra.mxu0 0.0
  %3423 = vmatprep.subr.mxu0 0.0
  %3424 = vmatpush2.msra.mxu0 0.0
  %3425 = vmatprep.subr.mxu0 0.0
  %3426 = vmatpush2.msra.mxu0 0.0
  %3427 = vmatprep.subr.mxu0 0.0
  %3428 = vmatpush2.msra.mxu0 0.0
  %3429 = vmatprep.subr.mxu0 0.0
  %3430 = vmatpush2.msra.mxu0 0.0
  %3431 = vmatprep.subr.mxu0 0.0
  %3432 = vmatpush2.msra.mxu0 0.0
  %3433 = vmatprep.mubr.f32.mxu0 0.0
  %3434 = vmatmul.mubr.f32.gmra.mxu0 %v3322
  %v3435 = vpop.f32.mrf.mxu0
  %v3436 = vadd.f32 0.0, %v3435
  %v3437 = vpop.f32.mrf.mxu0
  %3438 = vmatprep.mubr.f32.mxu0 0.0
  %3439 = vmatmul.mubr.f32.gmra.mxu0 %v3325
  %v3440 = vpop.f32.mrf.mxu0
  %v3441 = vadd.f32 0.0, %v3440
  %v3442 = vpop.f32.mrf.mxu0
  %3443 = vmatprep.mubr.f32.mxu0 0.0
  %3444 = vmatmul.mubr.f32.gmra.mxu0 %v3328
  %v3445 = vpop.f32.mrf.mxu0
  %v3446 = vadd.f32 0.0, %v3445
  %v3447 = vpop.f32.mrf.mxu0
  %3448 = vmatprep.mubr.f32.mxu0 0.0
  %3449 = vmatmul.mubr.f32.gmra.mxu0 %v3331
  %v3450 = vpop.f32.mrf.mxu0
  %v3451 = vadd.f32 0.0, %v3450
  %v3452 = vpop.f32.mrf.mxu0
  %3453 = vmatprep.mubr.f32.mxu0 0.0
  %3454 = vmatmul.mubr.f32.gmra.mxu0 %v3334
  %v3455 = vpop.f32.mrf.mxu0
  %v3456 = vadd.f32 0.0, %v3455
  %v3457 = vpop.f32.mrf.mxu0
  %3458 = vmatprep.mubr.f32.mxu0 0.0
  %3459 = vmatmul.mubr.f32.gmra.mxu0 %v3337
  %v3460 = vpop.f32.mrf.mxu0
  %v3461 = vadd.f32 0.0, %v3460
  %v3462 = vpop.f32.mrf.mxu0
  %3463 = vmatprep.mubr.f32.mxu0 0.0
  %3464 = vmatmul.mubr.f32.gmra.mxu0 %v3340
  %v3465 = vpop.f32.mrf.mxu0
  %v3466 = vadd.f32 0.0, %v3465
  %v3467 = vpop.f32.mrf.mxu0
  %3468 = vmatprep.mubr.f32.mxu0 0.0
  %3469 = vmatmul.mubr.f32.gmra.mxu0 %v3343
  %v3470 = vpop.f32.mrf.mxu0
  %v3471 = vadd.f32 0.0, %v3470
  %v3472 = vpop.f32.mrf.mxu0
  %3473 = vmatprep.mubr.f32.mxu0 0.0
  %3474 = vmatmul.mubr.f32.gmra.mxu0 %v3346
  %v3475 = vpop.f32.mrf.mxu0
  %v3476 = vadd.f32 0.0, %v3475
  %v3477 = vpop.f32.mrf.mxu0
  %3478 = vmatprep.mubr.f32.mxu0 0.0
  %3479 = vmatmul.mubr.f32.gmra.mxu0 %v3349
  %v3480 = vpop.f32.mrf.mxu0
  %v3481 = vadd.f32 0.0, %v3480
  %v3482 = vpop.f32.mrf.mxu0
  %3483 = vmatprep.mubr.f32.mxu0 0.0
  %3484 = vmatmul.mubr.f32.gmra.mxu0 %v3352
  %v3485 = vpop.f32.mrf.mxu0
  %v3486 = vadd.f32 0.0, %v3485
  %v3487 = vpop.f32.mrf.mxu0
  %3488 = vmatprep.mubr.f32.mxu0 0.0
  %3489 = vmatmul.mubr.f32.gmra.mxu0 %v3355
  %v3490 = vpop.f32.mrf.mxu0
  %v3491 = vadd.f32 0.0, %v3490
  %v3492 = vpop.f32.mrf.mxu0
  %3493 = vmatprep.mubr.f32.mxu0 0.0
  %3494 = vmatmul.mubr.f32.gmra.mxu0 %v3358
  %v3495 = vpop.f32.mrf.mxu0
  %v3496 = vadd.f32 0.0, %v3495
  %v3497 = vpop.f32.mrf.mxu0
  %3498 = vmatprep.mubr.f32.mxu0 0.0
  %3499 = vmatmul.mubr.f32.gmra.mxu0 %v3361
  %v3500 = vpop.f32.mrf.mxu0
  %v3501 = vadd.f32 0.0, %v3500
  %v3502 = vpop.f32.mrf.mxu0
  %3503 = vmatprep.mubr.f32.mxu0 0.0
  %3504 = vmatmul.mubr.f32.gmra.mxu0 %v3364
  %v3505 = vpop.f32.mrf.mxu0
  %v3506 = vadd.f32 0.0, %v3505
  %v3507 = vpop.f32.mrf.mxu0
  %3508 = vmatprep.mubr.f32.mxu0 0.0
  %3509 = vmatmul.mubr.f32.gmra.mxu0 %v3367
  %v3510 = vpop.f32.mrf.mxu0
  %v3511 = vadd.f32 0.0, %v3510
  %v3512 = vpop.f32.mrf.mxu0
  %3513 = vdwg.mxu0
  %v3514 = vadd.f32 %v3242, %v3436
  %v3515 = vadd.f32 %v3247, %v3441
  %v3516 = vadd.f32 %v3252, %v3446
  %v3517 = vadd.f32 %v3257, %v3451
  %v3518 = vadd.f32 %v3262, %v3456
  %v3519 = vadd.f32 %v3267, %v3461
  %v3520 = vadd.f32 %v3272, %v3466
  %v3521 = vadd.f32 %v3277, %v3471
  %v3522 = vadd.f32 %v3282, %v3476
  %v3523 = vadd.f32 %v3287, %v3481
  %v3524 = vadd.f32 %v3292, %v3486
  %v3525 = vadd.f32 %v3297, %v3491
  %v3526 = vadd.f32 %v3302, %v3496
  %v3527 = vadd.f32 %v3307, %v3501
  %v3528 = vadd.f32 %v3312, %v3506
  %v3529 = vadd.f32 %v3317, %v3511
  %v3530 = vld [vmem:[%s9] sm:$0xff]
  %v3532 = vsel %vm2933, %v2915, 0
  %v3535 = vsel %vm2933, %v2916, 0
  %v3538 = vsel %vm2933, %v2917, 0
  %v3541 = vsel %vm2933, %v2918, 0
  %v3544 = vsel %vm2933, %v2919, 0
  %v3547 = vsel %vm2933, %v2920, 0
  %v3550 = vsel %vm2933, %v2921, 0
  %v3553 = vsel %vm2933, %v2922, 0
  %v3556 = vsel %vm2933, %v2923, 0
  %v3559 = vsel %vm2933, %v2924, 0
  %v3562 = vsel %vm2933, %v2925, 0
  %v3565 = vsel %vm2933, %v2926, 0
  %v3568 = vsel %vm2933, %v2927, 0
  %v3571 = vsel %vm2933, %v2928, 0
  %v3574 = vsel %vm2933, %v2929, 0
  %v3577 = vsel %vm2933, %v2930, 0
  %3579 = vmatprep.subr.mxu0 0.0
  %3580 = vmatpush1.msra.mxu0 0.0
  %3581 = vmatprep.subr.mxu0 0.0
  %3582 = vmatpush1.msra.mxu0 0.0
  %3583 = vmatprep.subr.mxu0 0.0
  %3584 = vmatpush1.msra.mxu0 0.0
  %3585 = vmatprep.subr.mxu0 0.0
  %3586 = vmatpush1.msra.mxu0 0.0
  %3587 = vmatprep.subr.mxu0 0.0
  %3588 = vmatpush1.msra.mxu0 0.0
  %3589 = vmatprep.subr.mxu0 0.0
  %3590 = vmatpush1.msra.mxu0 0.0
  %3591 = vmatprep.subr.mxu0 0.0
  %3592 = vmatpush1.msra.mxu0 0.0
  %3593 = vmatprep.subr.mxu0 0.0
  %3594 = vmatpush1.msra.mxu0 0.0
  %3595 = vmatprep.subr.mxu0 0.0
  %3596 = vmatpush1.msra.mxu0 0.0
  %3597 = vmatprep.subr.mxu0 0.0
  %3598 = vmatpush1.msra.mxu0 0.0
  %3599 = vmatprep.subr.mxu0 0.0
  %3600 = vmatpush1.msra.mxu0 0.0
  %3601 = vmatprep.subr.mxu0 0.0
  %3602 = vmatpush1.msra.mxu0 0.0
  %3603 = vmatprep.subr.mxu0 0.0
  %3604 = vmatpush1.msra.mxu0 0.0
  %3605 = vmatprep.subr.mxu0 0.0
  %3606 = vmatpush1.msra.mxu0 0.0
  %3607 = vmatprep.subr.mxu0 0.0
  %3608 = vmatpush1.msra.mxu0 0.0
  %3609 = vmatprep.subr.mxu0 0.0
  %3610 = vmatpush1.msra.mxu0 %v3530
  %3611 = vmatprep.subr.mxu0 0.0
  %3612 = vmatpush2.msra.mxu0 0.0
  %3613 = vmatprep.subr.mxu0 0.0
  %3614 = vmatpush2.msra.mxu0 0.0
  %3615 = vmatprep.subr.mxu0 0.0
  %3616 = vmatpush2.msra.mxu0 0.0
  %3617 = vmatprep.subr.mxu0 0.0
  %3618 = vmatpush2.msra.mxu0 0.0
  %3619 = vmatprep.subr.mxu0 0.0
  %3620 = vmatpush2.msra.mxu0 0.0
  %3621 = vmatprep.subr.mxu0 0.0
  %3622 = vmatpush2.msra.mxu0 0.0
  %3623 = vmatprep.subr.mxu0 0.0
  %3624 = vmatpush2.msra.mxu0 0.0
  %3625 = vmatprep.subr.mxu0 0.0
  %3626 = vmatpush2.msra.mxu0 0.0
  %3627 = vmatprep.subr.mxu0 0.0
  %3628 = vmatpush2.msra.mxu0 0.0
  %3629 = vmatprep.subr.mxu0 0.0
  %3630 = vmatpush2.msra.mxu0 0.0
  %3631 = vmatprep.subr.mxu0 0.0
  %3632 = vmatpush2.msra.mxu0 0.0
  %3633 = vmatprep.subr.mxu0 0.0
  %3634 = vmatpush2.msra.mxu0 0.0
  %3635 = vmatprep.subr.mxu0 0.0
  %3636 = vmatpush2.msra.mxu0 0.0
  %3637 = vmatprep.subr.mxu0 0.0
  %3638 = vmatpush2.msra.mxu0 0.0
  %3639 = vmatprep.subr.mxu0 0.0
  %3640 = vmatpush2.msra.mxu0 0.0
  %3641 = vmatprep.subr.mxu0 0.0
  %3642 = vmatpush2.msra.mxu0 0.0
  %3643 = vmatprep.mubr.f32.mxu0 0.0
  %3644 = vmatmul.mubr.f32.gmra.mxu0 %v3532
  %v3645 = vpop.f32.mrf.mxu0
  %v3646 = vadd.f32 0.0, %v3645
  %v3647 = vpop.f32.mrf.mxu0
  %3648 = vmatprep.mubr.f32.mxu0 0.0
  %3649 = vmatmul.mubr.f32.gmra.mxu0 %v3535
  %v3650 = vpop.f32.mrf.mxu0
  %v3651 = vadd.f32 0.0, %v3650
  %v3652 = vpop.f32.mrf.mxu0
  %3653 = vmatprep.mubr.f32.mxu0 0.0
  %3654 = vmatmul.mubr.f32.gmra.mxu0 %v3538
  %v3655 = vpop.f32.mrf.mxu0
  %v3656 = vadd.f32 0.0, %v3655
  %v3657 = vpop.f32.mrf.mxu0
  %3658 = vmatprep.mubr.f32.mxu0 0.0
  %3659 = vmatmul.mubr.f32.gmra.mxu0 %v3541
  %v3660 = vpop.f32.mrf.mxu0
  %v3661 = vadd.f32 0.0, %v3660
  %v3662 = vpop.f32.mrf.mxu0
  %3663 = vmatprep.mubr.f32.mxu0 0.0
  %3664 = vmatmul.mubr.f32.gmra.mxu0 %v3544
  %v3665 = vpop.f32.mrf.mxu0
  %v3666 = vadd.f32 0.0, %v3665
  %v3667 = vpop.f32.mrf.mxu0
  %3668 = vmatprep.mubr.f32.mxu0 0.0
  %3669 = vmatmul.mubr.f32.gmra.mxu0 %v3547
  %v3670 = vpop.f32.mrf.mxu0
  %v3671 = vadd.f32 0.0, %v3670
  %v3672 = vpop.f32.mrf.mxu0
  %3673 = vmatprep.mubr.f32.mxu0 0.0
  %3674 = vmatmul.mubr.f32.gmra.mxu0 %v3550
  %v3675 = vpop.f32.mrf.mxu0
  %v3676 = vadd.f32 0.0, %v3675
  %v3677 = vpop.f32.mrf.mxu0
  %3678 = vmatprep.mubr.f32.mxu0 0.0
  %3679 = vmatmul.mubr.f32.gmra.mxu0 %v3553
  %v3680 = vpop.f32.mrf.mxu0
  %v3681 = vadd.f32 0.0, %v3680
  %v3682 = vpop.f32.mrf.mxu0
  %3683 = vmatprep.mubr.f32.mxu0 0.0
  %3684 = vmatmul.mubr.f32.gmra.mxu0 %v3556
  %v3685 = vpop.f32.mrf.mxu0
  %v3686 = vadd.f32 0.0, %v3685
  %v3687 = vpop.f32.mrf.mxu0
  %3688 = vmatprep.mubr.f32.mxu0 0.0
  %3689 = vmatmul.mubr.f32.gmra.mxu0 %v3559
  %v3690 = vpop.f32.mrf.mxu0
  %v3691 = vadd.f32 0.0, %v3690
  %v3692 = vpop.f32.mrf.mxu0
  %3693 = vmatprep.mubr.f32.mxu0 0.0
  %3694 = vmatmul.mubr.f32.gmra.mxu0 %v3562
  %v3695 = vpop.f32.mrf.mxu0
  %v3696 = vadd.f32 0.0, %v3695
  %v3697 = vpop.f32.mrf.mxu0
  %3698 = vmatprep.mubr.f32.mxu0 0.0
  %3699 = vmatmul.mubr.f32.gmra.mxu0 %v3565
  %v3700 = vpop.f32.mrf.mxu0
  %v3701 = vadd.f32 0.0, %v3700
  %v3702 = vpop.f32.mrf.mxu0
  %3703 = vmatprep.mubr.f32.mxu0 0.0
  %3704 = vmatmul.mubr.f32.gmra.mxu0 %v3568
  %v3705 = vpop.f32.mrf.mxu0
  %v3706 = vadd.f32 0.0, %v3705
  %v3707 = vpop.f32.mrf.mxu0
  %3708 = vmatprep.mubr.f32.mxu0 0.0
  %3709 = vmatmul.mubr.f32.gmra.mxu0 %v3571
  %v3710 = vpop.f32.mrf.mxu0
  %v3711 = vadd.f32 0.0, %v3710
  %v3712 = vpop.f32.mrf.mxu0
  %3713 = vmatprep.mubr.f32.mxu0 0.0
  %3714 = vmatmul.mubr.f32.gmra.mxu0 %v3574
  %v3715 = vpop.f32.mrf.mxu0
  %v3716 = vadd.f32 0.0, %v3715
  %v3717 = vpop.f32.mrf.mxu0
  %3718 = vmatprep.mubr.f32.mxu0 0.0
  %3719 = vmatmul.mubr.f32.gmra.mxu0 %v3577
  %v3720 = vpop.f32.mrf.mxu0
  %v3721 = vadd.f32 0.0, %v3720
  %v3722 = vpop.f32.mrf.mxu0
  %3723 = vdwg.mxu0
  %v3724 = vadd.f32 %v3514, %v3646
  %v3725 = vadd.f32 %v3515, %v3651
  %v3726 = vadd.f32 %v3516, %v3656
  %v3727 = vadd.f32 %v3517, %v3661
  %v3728 = vadd.f32 %v3518, %v3666
  %v3729 = vadd.f32 %v3519, %v3671
  %v3730 = vadd.f32 %v3520, %v3676
  %v3731 = vadd.f32 %v3521, %v3681
  %v3732 = vadd.f32 %v3522, %v3686
  %v3733 = vadd.f32 %v3523, %v3691
  %v3734 = vadd.f32 %v3524, %v3696
  %v3735 = vadd.f32 %v3525, %v3701
  %v3736 = vadd.f32 %v3526, %v3706
  %v3737 = vadd.f32 %v3527, %v3711
  %v3738 = vadd.f32 %v3528, %v3716
  %v3739 = vadd.f32 %v3529, %v3721
  %v3740 = vld [vmem:[%s10] sm:$0x1]
  %v3742 = vlaneseq
  %v3743 = vshrl.u32 %v3742, 7
  %v3744 = vsub.s32 0, %v3743
  %v3745 = vrot.slane %v3740, %v3744
  %v3747 = vadd.f32 %v3724, %v3745
  %v3748 = vadd.f32 %v3725, %v3745
  %v3749 = vadd.f32 %v3726, %v3745
  %v3750 = vadd.f32 %v3727, %v3745
  %v3751 = vadd.f32 %v3728, %v3745
  %v3752 = vadd.f32 %v3729, %v3745
  %v3753 = vadd.f32 %v3730, %v3745
  %v3754 = vadd.f32 %v3731, %v3745
  %v3755 = vadd.f32 %v3732, %v3745
  %v3756 = vadd.f32 %v3733, %v3745
  %v3757 = vadd.f32 %v3734, %v3745
  %v3758 = vadd.f32 %v3735, %v3745
  %v3759 = vadd.f32 %v3736, %v3745
  %v3760 = vadd.f32 %v3737, %v3745
  %v3761 = vadd.f32 %v3738, %v3745
  %v3762 = vadd.f32 %v3739, %v3745
  %v3763 = vmax.f32 %v3747, 0.0
  %v3764 = vmax.f32 %v3748, 0.0
  %v3765 = vmax.f32 %v3749, 0.0
  %v3766 = vmax.f32 %v3750, 0.0
  %v3767 = vmax.f32 %v3751, 0.0
  %v3768 = vmax.f32 %v3752, 0.0
  %v3769 = vmax.f32 %v3753, 0.0
  %v3770 = vmax.f32 %v3754, 0.0
  %v3771 = vmax.f32 %v3755, 0.0
  %v3772 = vmax.f32 %v3756, 0.0
  %v3773 = vmax.f32 %v3757, 0.0
  %v3774 = vmax.f32 %v3758, 0.0
  %v3775 = vmax.f32 %v3759, 0.0
  %v3776 = vmax.f32 %v3760, 0.0
  %v3777 = vmax.f32 %v3761, 0.0
  %v3778 = vmax.f32 %v3762, 0.0
  %v3779 = vld [vmem:[%s11] sm:$0xff]
  %v3780 = vld [vmem:[%s12] sm:$0xff]
  %v3782 = vsel %vm2933, %v3767, 0
  %v3785 = vsel %vm2933, %v3768, 0
  %v3788 = vsel %vm2933, %v3769, 0
  %v3791 = vsel %vm2933, %v3770, 0
  %3793 = vmatprep.subr.mxu0 0.0
  %3794 = vmatpush1.msra.mxu0 0.0
  %3795 = vmatprep.subr.mxu0 0.0
  %3796 = vmatpush1.msra.mxu0 0.0
  %3797 = vmatprep.subr.mxu0 0.0
  %3798 = vmatpush1.msra.mxu0 0.0
  %3799 = vmatprep.subr.mxu0 0.0
  %3800 = vmatpush1.msra.mxu0 0.0
  %3801 = vmatprep.subr.mxu0 0.0
  %3802 = vmatpush1.msra.mxu0 0.0
  %3803 = vmatprep.subr.mxu0 0.0
  %3804 = vmatpush1.msra.mxu0 0.0
  %3805 = vmatprep.subr.mxu0 0.0
  %3806 = vmatpush1.msra.mxu0 0.0
  %3807 = vmatprep.subr.mxu0 0.0
  %3808 = vmatpush1.msra.mxu0 0.0
  %3809 = vmatprep.subr.mxu0 0.0
  %3810 = vmatpush1.msra.mxu0 0.0
  %3811 = vmatprep.subr.mxu0 0.0
  %3812 = vmatpush1.msra.mxu0 0.0
  %3813 = vmatprep.subr.mxu0 0.0
  %3814 = vmatpush1.msra.mxu0 0.0
  %3815 = vmatprep.subr.mxu0 0.0
  %3816 = vmatpush1.msra.mxu0 0.0
  %3817 = vmatprep.subr.mxu0 0.0
  %3818 = vmatpush1.msra.mxu0 0.0
  %3819 = vmatprep.subr.mxu0 0.0
  %3820 = vmatpush1.msra.mxu0 0.0
  %3821 = vmatprep.subr.mxu0 0.0
  %3822 = vmatpush1.msra.mxu0 0.0
  %3823 = vmatprep.subr.mxu0 0.0
  %3824 = vmatpush1.msra.mxu0 %v3780
  %3825 = vmatprep.subr.mxu0 0.0
  %3826 = vmatpush2.msra.mxu0 0.0
  %3827 = vmatprep.subr.mxu0 0.0
  %3828 = vmatpush2.msra.mxu0 0.0
  %3829 = vmatprep.subr.mxu0 0.0
  %3830 = vmatpush2.msra.mxu0 0.0
  %3831 = vmatprep.subr.mxu0 0.0
  %3832 = vmatpush2.msra.mxu0 0.0
  %3833 = vmatprep.subr.mxu0 0.0
  %3834 = vmatpush2.msra.mxu0 0.0
  %3835 = vmatprep.subr.mxu0 0.0
  %3836 = vmatpush2.msra.mxu0 0.0
  %3837 = vmatprep.subr.mxu0 0.0
  %3838 = vmatpush2.msra.mxu0 0.0
  %3839 = vmatprep.subr.mxu0 0.0
  %3840 = vmatpush2.msra.mxu0 0.0
  %3841 = vmatprep.subr.mxu0 0.0
  %3842 = vmatpush2.msra.mxu0 0.0
  %3843 = vmatprep.subr.mxu0 0.0
  %3844 = vmatpush2.msra.mxu0 0.0
  %3845 = vmatprep.subr.mxu0 0.0
  %3846 = vmatpush2.msra.mxu0 0.0
  %3847 = vmatprep.subr.mxu0 0.0
  %3848 = vmatpush2.msra.mxu0 0.0
  %3849 = vmatprep.subr.mxu0 0.0
  %3850 = vmatpush2.msra.mxu0 0.0
  %3851 = vmatprep.subr.mxu0 0.0
  %3852 = vmatpush2.msra.mxu0 0.0
  %3853 = vmatprep.subr.mxu0 0.0
  %3854 = vmatpush2.msra.mxu0 0.0
  %3855 = vmatprep.subr.mxu0 0.0
  %3856 = vmatpush2.msra.mxu0 0.0
  %3857 = vmatprep.mubr.f32.mxu0 0.0
  %3858 = vmatmul.mubr.f32.gmra.mxu0 %v3782
  %v3859 = vpop.f32.mrf.mxu0
  %v3860 = vadd.f32 0.0, %v3859
  %v3861 = vpop.f32.mrf.mxu0
  %3862 = vmatprep.mubr.f32.mxu0 0.0
  %3863 = vmatmul.mubr.f32.gmra.mxu0 %v3785
  %v3864 = vpop.f32.mrf.mxu0
  %v3865 = vadd.f32 0.0, %v3864
  %v3866 = vpop.f32.mrf.mxu0
  %3867 = vmatprep.mubr.f32.mxu0 0.0
  %3868 = vmatmul.mubr.f32.gmra.mxu0 %v3788
  %v3869 = vpop.f32.mrf.mxu0
  %v3870 = vadd.f32 0.0, %v3869
  %v3871 = vpop.f32.mrf.mxu0
  %3872 = vmatprep.mubr.f32.mxu0 0.0
  %3873 = vmatmul.mubr.f32.gmra.mxu0 %v3791
  %v3874 = vpop.f32.mrf.mxu0
  %v3875 = vadd.f32 0.0, %v3874
  %v3876 = vpop.f32.mrf.mxu0
  %3877 = vdwg.mxu0
  %v3879 = vsel %vm2933, %v3763, 0
  %v3882 = vsel %vm2933, %v3764, 0
  %v3885 = vsel %vm2933, %v3765, 0
  %v3888 = vsel %vm2933, %v3766, 0
  %3890 = vmatprep.subr.mxu0 0.0
  %3891 = vmatpush1.msra.mxu0 0.0
  %3892 = vmatprep.subr.mxu0 0.0
  %3893 = vmatpush1.msra.mxu0 0.0
  %3894 = vmatprep.subr.mxu0 0.0
  %3895 = vmatpush1.msra.mxu0 0.0
  %3896 = vmatprep.subr.mxu0 0.0
  %3897 = vmatpush1.msra.mxu0 0.0
  %3898 = vmatprep.subr.mxu0 0.0
  %3899 = vmatpush1.msra.mxu0 0.0
  %3900 = vmatprep.subr.mxu0 0.0
  %3901 = vmatpush1.msra.mxu0 0.0
  %3902 = vmatprep.subr.mxu0 0.0
  %3903 = vmatpush1.msra.mxu0 0.0
  %3904 = vmatprep.subr.mxu0 0.0
  %3905 = vmatpush1.msra.mxu0 0.0
  %3906 = vmatprep.subr.mxu0 0.0
  %3907 = vmatpush1.msra.mxu0 0.0
  %3908 = vmatprep.subr.mxu0 0.0
  %3909 = vmatpush1.msra.mxu0 0.0
  %3910 = vmatprep.subr.mxu0 0.0
  %3911 = vmatpush1.msra.mxu0 0.0
  %3912 = vmatprep.subr.mxu0 0.0
  %3913 = vmatpush1.msra.mxu0 0.0
  %3914 = vmatprep.subr.mxu0 0.0
  %3915 = vmatpush1.msra.mxu0 0.0
  %3916 = vmatprep.subr.mxu0 0.0
  %3917 = vmatpush1.msra.mxu0 0.0
  %3918 = vmatprep.subr.mxu0 0.0
  %3919 = vmatpush1.msra.mxu0 0.0
  %3920 = vmatprep.subr.mxu0 0.0
  %3921 = vmatpush1.msra.mxu0 %v3779
  %3922 = vmatprep.subr.mxu0 0.0
  %3923 = vmatpush2.msra.mxu0 0.0
  %3924 = vmatprep.subr.mxu0 0.0
  %3925 = vmatpush2.msra.mxu0 0.0
  %3926 = vmatprep.subr.mxu0 0.0
  %3927 = vmatpush2.msra.mxu0 0.0
  %3928 = vmatprep.subr.mxu0 0.0
  %3929 = vmatpush2.msra.mxu0 0.0
  %3930 = vmatprep.subr.mxu0 0.0
  %3931 = vmatpush2.msra.mxu0 0.0
  %3932 = vmatprep.subr.mxu0 0.0
  %3933 = vmatpush2.msra.mxu0 0.0
  %3934 = vmatprep.subr.mxu0 0.0
  %3935 = vmatpush2.msra.mxu0 0.0
  %3936 = vmatprep.subr.mxu0 0.0
  %3937 = vmatpush2.msra.mxu0 0.0
  %3938 = vmatprep.subr.mxu0 0.0
  %3939 = vmatpush2.msra.mxu0 0.0
  %3940 = vmatprep.subr.mxu0 0.0
  %3941 = vmatpush2.msra.mxu0 0.0
  %3942 = vmatprep.subr.mxu0 0.0
  %3943 = vmatpush2.msra.mxu0 0.0
  %3944 = vmatprep.subr.mxu0 0.0
  %3945 = vmatpush2.msra.mxu0 0.0
  %3946 = vmatprep.subr.mxu0 0.0
  %3947 = vmatpush2.msra.mxu0 0.0
  %3948 = vmatprep.subr.mxu0 0.0
  %3949 = vmatpush2.msra.mxu0 0.0
  %3950 = vmatprep.subr.mxu0 0.0
  %3951 = vmatpush2.msra.mxu0 0.0
  %3952 = vmatprep.subr.mxu0 0.0
  %3953 = vmatpush2.msra.mxu0 0.0
  %3954 = vmatprep.mubr.f32.mxu0 0.0
  %3955 = vmatmul.mubr.f32.gmra.mxu0 %v3879
  %v3956 = vpop.f32.mrf.mxu0
  %v3957 = vadd.f32 %v3860, %v3956
  %v3958 = vpop.f32.mrf.mxu0
  %3959 = vmatprep.mubr.f32.mxu0 0.0
  %3960 = vmatmul.mubr.f32.gmra.mxu0 %v3882
  %v3961 = vpop.f32.mrf.mxu0
  %v3962 = vadd.f32 %v3865, %v3961
  %v3963 = vpop.f32.mrf.mxu0
  %3964 = vmatprep.mubr.f32.mxu0 0.0
  %3965 = vmatmul.mubr.f32.gmra.mxu0 %v3885
  %v3966 = vpop.f32.mrf.mxu0
  %v3967 = vadd.f32 %v3870, %v3966
  %v3968 = vpop.f32.mrf.mxu0
  %3969 = vmatprep.mubr.f32.mxu0 0.0
  %3970 = vmatmul.mubr.f32.gmra.mxu0 %v3888
  %v3971 = vpop.f32.mrf.mxu0
  %v3972 = vadd.f32 %v3875, %v3971
  %v3973 = vpop.f32.mrf.mxu0
  %3974 = vdwg.mxu0
  %v3975 = vld [vmem:[%s13] sm:$0xff]
  %v3977 = vsel %vm2933, %v3771, 0
  %v3980 = vsel %vm2933, %v3772, 0
  %v3983 = vsel %vm2933, %v3773, 0
  %v3986 = vsel %vm2933, %v3774, 0
  %3988 = vmatprep.subr.mxu0 0.0
  %3989 = vmatpush1.msra.mxu0 0.0
  %3990 = vmatprep.subr.mxu0 0.0
  %3991 = vmatpush1.msra.mxu0 0.0
  %3992 = vmatprep.subr.mxu0 0.0
  %3993 = vmatpush1.msra.mxu0 0.0
  %3994 = vmatprep.subr.mxu0 0.0
  %3995 = vmatpush1.msra.mxu0 0.0
  %3996 = vmatprep.subr.mxu0 0.0
  %3997 = vmatpush1.msra.mxu0 0.0
  %3998 = vmatprep.subr.mxu0 0.0
  %3999 = vmatpush1.msra.mxu0 0.0
  %4000 = vmatprep.subr.mxu0 0.0
  %4001 = vmatpush1.msra.mxu0 0.0
  %4002 = vmatprep.subr.mxu0 0.0
  %4003 = vmatpush1.msra.mxu0 0.0
  %4004 = vmatprep.subr.mxu0 0.0
  %4005 = vmatpush1.msra.mxu0 0.0
  %4006 = vmatprep.subr.mxu0 0.0
  %4007 = vmatpush1.msra.mxu0 0.0
  %4008 = vmatprep.subr.mxu0 0.0
  %4009 = vmatpush1.msra.mxu0 0.0
  %4010 = vmatprep.subr.mxu0 0.0
  %4011 = vmatpush1.msra.mxu0 0.0
  %4012 = vmatprep.subr.mxu0 0.0
  %4013 = vmatpush1.msra.mxu0 0.0
  %4014 = vmatprep.subr.mxu0 0.0
  %4015 = vmatpush1.msra.mxu0 0.0
  %4016 = vmatprep.subr.mxu0 0.0
  %4017 = vmatpush1.msra.mxu0 0.0
  %4018 = vmatprep.subr.mxu0 0.0
  %4019 = vmatpush1.msra.mxu0 %v3975
  %4020 = vmatprep.subr.mxu0 0.0
  %4021 = vmatpush2.msra.mxu0 0.0
  %4022 = vmatprep.subr.mxu0 0.0
  %4023 = vmatpush2.msra.mxu0 0.0
  %4024 = vmatprep.subr.mxu0 0.0
  %4025 = vmatpush2.msra.mxu0 0.0
  %4026 = vmatprep.subr.mxu0 0.0
  %4027 = vmatpush2.msra.mxu0 0.0
  %4028 = vmatprep.subr.mxu0 0.0
  %4029 = vmatpush2.msra.mxu0 0.0
  %4030 = vmatprep.subr.mxu0 0.0
  %4031 = vmatpush2.msra.mxu0 0.0
  %4032 = vmatprep.subr.mxu0 0.0
  %4033 = vmatpush2.msra.mxu0 0.0
  %4034 = vmatprep.subr.mxu0 0.0
  %4035 = vmatpush2.msra.mxu0 0.0
  %4036 = vmatprep.subr.mxu0 0.0
  %4037 = vmatpush2.msra.mxu0 0.0
  %4038 = vmatprep.subr.mxu0 0.0
  %4039 = vmatpush2.msra.mxu0 0.0
  %4040 = vmatprep.subr.mxu0 0.0
  %4041 = vmatpush2.msra.mxu0 0.0
  %4042 = vmatprep.subr.mxu0 0.0
  %4043 = vmatpush2.msra.mxu0 0.0
  %4044 = vmatprep.subr.mxu0 0.0
  %4045 = vmatpush2.msra.mxu0 0.0
  %4046 = vmatprep.subr.mxu0 0.0
  %4047 = vmatpush2.msra.mxu0 0.0
  %4048 = vmatprep.subr.mxu0 0.0
  %4049 = vmatpush2.msra.mxu0 0.0
  %4050 = vmatprep.subr.mxu0 0.0
  %4051 = vmatpush2.msra.mxu0 0.0
  %4052 = vmatprep.mubr.f32.mxu0 0.0
  %4053 = vmatmul.mubr.f32.gmra.mxu0 %v3977
  %v4054 = vpop.f32.mrf.mxu0
  %v4055 = vadd.f32 0.0, %v4054
  %v4056 = vpop.f32.mrf.mxu0
  %4057 = vmatprep.mubr.f32.mxu0 0.0
  %4058 = vmatmul.mubr.f32.gmra.mxu0 %v3980
  %v4059 = vpop.f32.mrf.mxu0
  %v4060 = vadd.f32 0.0, %v4059
  %v4061 = vpop.f32.mrf.mxu0
  %4062 = vmatprep.mubr.f32.mxu0 0.0
  %4063 = vmatmul.mubr.f32.gmra.mxu0 %v3983
  %v4064 = vpop.f32.mrf.mxu0
  %v4065 = vadd.f32 0.0, %v4064
  %v4066 = vpop.f32.mrf.mxu0
  %4067 = vmatprep.mubr.f32.mxu0 0.0
  %4068 = vmatmul.mubr.f32.gmra.mxu0 %v3986
  %v4069 = vpop.f32.mrf.mxu0
  %v4070 = vadd.f32 0.0, %v4069
  %v4071 = vpop.f32.mrf.mxu0
  %4072 = vdwg.mxu0
  %v4073 = vadd.f32 %v3957, %v4055
  %v4074 = vadd.f32 %v3962, %v4060
  %v4075 = vadd.f32 %v3967, %v4065
  %v4076 = vadd.f32 %v3972, %v4070
  %v4077 = vld [vmem:[%s14] sm:$0xff]
  %v4079 = vsel %vm2933, %v3775, 0
  %v4082 = vsel %vm2933, %v3776, 0
  %v4085 = vsel %vm2933, %v3777, 0
  %v4088 = vsel %vm2933, %v3778, 0
  %4090 = vmatprep.subr.mxu0 0.0
  %4091 = vmatpush1.msra.mxu0 0.0
  %4092 = vmatprep.subr.mxu0 0.0
  %4093 = vmatpush1.msra.mxu0 0.0
  %4094 = vmatprep.subr.mxu0 0.0
  %4095 = vmatpush1.msra.mxu0 0.0
  %4096 = vmatprep.subr.mxu0 0.0
  %4097 = vmatpush1.msra.mxu0 0.0
  %4098 = vmatprep.subr.mxu0 0.0
  %4099 = vmatpush1.msra.mxu0 0.0
  %4100 = vmatprep.subr.mxu0 0.0
  %4101 = vmatpush1.msra.mxu0 0.0
  %4102 = vmatprep.subr.mxu0 0.0
  %4103 = vmatpush1.msra.mxu0 0.0
  %4104 = vmatprep.subr.mxu0 0.0
  %4105 = vmatpush1.msra.mxu0 0.0
  %4106 = vmatprep.subr.mxu0 0.0
  %4107 = vmatpush1.msra.mxu0 0.0
  %4108 = vmatprep.subr.mxu0 0.0
  %4109 = vmatpush1.msra.mxu0 0.0
  %4110 = vmatprep.subr.mxu0 0.0
  %4111 = vmatpush1.msra.mxu0 0.0
  %4112 = vmatprep.subr.mxu0 0.0
  %4113 = vmatpush1.msra.mxu0 0.0
  %4114 = vmatprep.subr.mxu0 0.0
  %4115 = vmatpush1.msra.mxu0 0.0
  %4116 = vmatprep.subr.mxu0 0.0
  %4117 = vmatpush1.msra.mxu0 0.0
  %4118 = vmatprep.subr.mxu0 0.0
  %4119 = vmatpush1.msra.mxu0 0.0
  %4120 = vmatprep.subr.mxu0 0.0
  %4121 = vmatpush1.msra.mxu0 %v4077
  %4122 = vmatprep.subr.mxu0 0.0
  %4123 = vmatpush2.msra.mxu0 0.0
  %4124 = vmatprep.subr.mxu0 0.0
  %4125 = vmatpush2.msra.mxu0 0.0
  %4126 = vmatprep.subr.mxu0 0.0
  %4127 = vmatpush2.msra.mxu0 0.0
  %4128 = vmatprep.subr.mxu0 0.0
  %4129 = vmatpush2.msra.mxu0 0.0
  %4130 = vmatprep.subr.mxu0 0.0
  %4131 = vmatpush2.msra.mxu0 0.0
  %4132 = vmatprep.subr.mxu0 0.0
  %4133 = vmatpush2.msra.mxu0 0.0
  %4134 = vmatprep.subr.mxu0 0.0
  %4135 = vmatpush2.msra.mxu0 0.0
  %4136 = vmatprep.subr.mxu0 0.0
  %4137 = vmatpush2.msra.mxu0 0.0
  %4138 = vmatprep.subr.mxu0 0.0
  %4139 = vmatpush2.msra.mxu0 0.0
  %4140 = vmatprep.subr.mxu0 0.0
  %4141 = vmatpush2.msra.mxu0 0.0
  %4142 = vmatprep.subr.mxu0 0.0
  %4143 = vmatpush2.msra.mxu0 0.0
  %4144 = vmatprep.subr.mxu0 0.0
  %4145 = vmatpush2.msra.mxu0 0.0
  %4146 = vmatprep.subr.mxu0 0.0
  %4147 = vmatpush2.msra.mxu0 0.0
  %4148 = vmatprep.subr.mxu0 0.0
  %4149 = vmatpush2.msra.mxu0 0.0
  %4150 = vmatprep.subr.mxu0 0.0
  %4151 = vmatpush2.msra.mxu0 0.0
  %4152 = vmatprep.subr.mxu0 0.0
  %4153 = vmatpush2.msra.mxu0 0.0
  %4154 = vmatprep.mubr.f32.mxu0 0.0
  %4155 = vmatmul.mubr.f32.gmra.mxu0 %v4079
  %v4156 = vpop.f32.mrf.mxu0
  %v4157 = vadd.f32 0.0, %v4156
  %v4158 = vpop.f32.mrf.mxu0
  %4159 = vmatprep.mubr.f32.mxu0 0.0
  %4160 = vmatmul.mubr.f32.gmra.mxu0 %v4082
  %v4161 = vpop.f32.mrf.mxu0
  %v4162 = vadd.f32 0.0, %v4161
  %v4163 = vpop.f32.mrf.mxu0
  %4164 = vmatprep.mubr.f32.mxu0 0.0
  %4165 = vmatmul.mubr.f32.gmra.mxu0 %v4085
  %v4166 = vpop.f32.mrf.mxu0
  %v4167 = vadd.f32 0.0, %v4166
  %v4168 = vpop.f32.mrf.mxu0
  %4169 = vmatprep.mubr.f32.mxu0 0.0
  %4170 = vmatmul.mubr.f32.gmra.mxu0 %v4088
  %v4171 = vpop.f32.mrf.mxu0
  %v4172 = vadd.f32 0.0, %v4171
  %v4173 = vpop.f32.mrf.mxu0
  %4174 = vdwg.mxu0
  %v4175 = vadd.f32 %v4073, %v4157
  %v4176 = vadd.f32 %v4074, %v4162
  %v4177 = vadd.f32 %v4075, %v4167
  %v4178 = vadd.f32 %v4076, %v4172
  %v4179 = vld [vmem:[%s15] sm:$0x1]
  %v4181 = vlaneseq
  %v4182 = vshrl.u32 %v4181, 7
  %v4183 = vsub.s32 0, %v4182
  %v4184 = vrot.slane %v4179, %v4183
  %v4186 = vadd.f32 %v4175, %v4184
  %v4187 = vadd.f32 %v4176, %v4184
  %v4188 = vadd.f32 %v4177, %v4184
  %v4189 = vadd.f32 %v4178, %v4184
  %v4190 = vmax.f32 %v4186, 0.0
  %v4191 = vmax.f32 %v4187, 0.0
  %v4192 = vmax.f32 %v4188, 0.0
  %v4193 = vmax.f32 %v4189, 0.0
  %v4194 = vld [vmem:[%s16] sm:$0xff]
  %v4195 = vld [vmem:[%s17] sm:$0xff]
  %v4197 = vsel %vm2933, %v4191, 0
  %4199 = vmatprep.subr.mxu0 0.0
  %4200 = vmatpush1.msra.mxu0 0.0
  %4201 = vmatprep.subr.mxu0 0.0
  %4202 = vmatpush1.msra.mxu0 0.0
  %4203 = vmatprep.subr.mxu0 0.0
  %4204 = vmatpush1.msra.mxu0 0.0
  %4205 = vmatprep.subr.mxu0 0.0
  %4206 = vmatpush1.msra.mxu0 0.0
  %4207 = vmatprep.subr.mxu0 0.0
  %4208 = vmatpush1.msra.mxu0 0.0
  %4209 = vmatprep.subr.mxu0 0.0
  %4210 = vmatpush1.msra.mxu0 0.0
  %4211 = vmatprep.subr.mxu0 0.0
  %4212 = vmatpush1.msra.mxu0 0.0
  %4213 = vmatprep.subr.mxu0 0.0
  %4214 = vmatpush1.msra.mxu0 0.0
  %4215 = vmatprep.subr.mxu0 0.0
  %4216 = vmatpush1.msra.mxu0 0.0
  %4217 = vmatprep.subr.mxu0 0.0
  %4218 = vmatpush1.msra.mxu0 0.0
  %4219 = vmatprep.subr.mxu0 0.0
  %4220 = vmatpush1.msra.mxu0 0.0
  %4221 = vmatprep.subr.mxu0 0.0
  %4222 = vmatpush1.msra.mxu0 0.0
  %4223 = vmatprep.subr.mxu0 0.0
  %4224 = vmatpush1.msra.mxu0 0.0
  %4225 = vmatprep.subr.mxu0 0.0
  %4226 = vmatpush1.msra.mxu0 0.0
  %4227 = vmatprep.subr.mxu0 0.0
  %4228 = vmatpush1.msra.mxu0 0.0
  %4229 = vmatprep.subr.mxu0 0.0
  %4230 = vmatpush1.msra.mxu0 %v4195
  %4231 = vmatprep.subr.mxu0 0.0
  %4232 = vmatpush2.msra.mxu0 0.0
  %4233 = vmatprep.subr.mxu0 0.0
  %4234 = vmatpush2.msra.mxu0 0.0
  %4235 = vmatprep.subr.mxu0 0.0
  %4236 = vmatpush2.msra.mxu0 0.0
  %4237 = vmatprep.subr.mxu0 0.0
  %4238 = vmatpush2.msra.mxu0 0.0
  %4239 = vmatprep.subr.mxu0 0.0
  %4240 = vmatpush2.msra.mxu0 0.0
  %4241 = vmatprep.subr.mxu0 0.0
  %4242 = vmatpush2.msra.mxu0 0.0
  %4243 = vmatprep.subr.mxu0 0.0
  %4244 = vmatpush2.msra.mxu0 0.0
  %4245 = vmatprep.subr.mxu0 0.0
  %4246 = vmatpush2.msra.mxu0 0.0
  %4247 = vmatprep.subr.mxu0 0.0
  %4248 = vmatpush2.msra.mxu0 0.0
  %4249 = vmatprep.subr.mxu0 0.0
  %4250 = vmatpush2.msra.mxu0 0.0
  %4251 = vmatprep.subr.mxu0 0.0
  %4252 = vmatpush2.msra.mxu0 0.0
  %4253 = vmatprep.subr.mxu0 0.0
  %4254 = vmatpush2.msra.mxu0 0.0
  %4255 = vmatprep.subr.mxu0 0.0
  %4256 = vmatpush2.msra.mxu0 0.0
  %4257 = vmatprep.subr.mxu0 0.0
  %4258 = vmatpush2.msra.mxu0 0.0
  %4259 = vmatprep.subr.mxu0 0.0
  %4260 = vmatpush2.msra.mxu0 0.0
  %4261 = vmatprep.subr.mxu0 0.0
  %4262 = vmatpush2.msra.mxu0 0.0
  %4263 = vmatprep.mubr.f32.mxu0 0.0
  %4264 = vmatmul.mubr.f32.gmra.mxu0 %v4197
  %v4265 = vpop.f32.mrf.mxu0
  %v4266 = vadd.f32 0.0, %v4265
  %v4267 = vpop.f32.mrf.mxu0
  %4268 = vdwg.mxu0
  %v4270 = vsel %vm2933, %v4190, 0
  %4272 = vmatprep.subr.mxu0 0.0
  %4273 = vmatpush1.msra.mxu0 0.0
  %4274 = vmatprep.subr.mxu0 0.0
  %4275 = vmatpush1.msra.mxu0 0.0
  %4276 = vmatprep.subr.mxu0 0.0
  %4277 = vmatpush1.msra.mxu0 0.0
  %4278 = vmatprep.subr.mxu0 0.0
  %4279 = vmatpush1.msra.mxu0 0.0
  %4280 = vmatprep.subr.mxu0 0.0
  %4281 = vmatpush1.msra.mxu0 0.0
  %4282 = vmatprep.subr.mxu0 0.0
  %4283 = vmatpush1.msra.mxu0 0.0
  %4284 = vmatprep.subr.mxu0 0.0
  %4285 = vmatpush1.msra.mxu0 0.0
  %4286 = vmatprep.subr.mxu0 0.0
  %4287 = vmatpush1.msra.mxu0 0.0
  %4288 = vmatprep.subr.mxu0 0.0
  %4289 = vmatpush1.msra.mxu0 0.0
  %4290 = vmatprep.subr.mxu0 0.0
  %4291 = vmatpush1.msra.mxu0 0.0
  %4292 = vmatprep.subr.mxu0 0.0
  %4293 = vmatpush1.msra.mxu0 0.0
  %4294 = vmatprep.subr.mxu0 0.0
  %4295 = vmatpush1.msra.mxu0 0.0
  %4296 = vmatprep.subr.mxu0 0.0
  %4297 = vmatpush1.msra.mxu0 0.0
  %4298 = vmatprep.subr.mxu0 0.0
  %4299 = vmatpush1.msra.mxu0 0.0
  %4300 = vmatprep.subr.mxu0 0.0
  %4301 = vmatpush1.msra.mxu0 0.0
  %4302 = vmatprep.subr.mxu0 0.0
  %4303 = vmatpush1.msra.mxu0 %v4194
  %4304 = vmatprep.subr.mxu0 0.0
  %4305 = vmatpush2.msra.mxu0 0.0
  %4306 = vmatprep.subr.mxu0 0.0
  %4307 = vmatpush2.msra.mxu0 0.0
  %4308 = vmatprep.subr.mxu0 0.0
  %4309 = vmatpush2.msra.mxu0 0.0
  %4310 = vmatprep.subr.mxu0 0.0
  %4311 = vmatpush2.msra.mxu0 0.0
  %4312 = vmatprep.subr.mxu0 0.0
  %4313 = vmatpush2.msra.mxu0 0.0
  %4314 = vmatprep.subr.mxu0 0.0
  %4315 = vmatpush2.msra.mxu0 0.0
  %4316 = vmatprep.subr.mxu0 0.0
  %4317 = vmatpush2.msra.mxu0 0.0
  %4318 = vmatprep.subr.mxu0 0.0
  %4319 = vmatpush2.msra.mxu0 0.0
  %4320 = vmatprep.subr.mxu0 0.0
  %4321 = vmatpush2.msra.mxu0 0.0
  %4322 = vmatprep.subr.mxu0 0.0
  %4323 = vmatpush2.msra.mxu0 0.0
  %4324 = vmatprep.subr.mxu0 0.0
  %4325 = vmatpush2.msra.mxu0 0.0
  %4326 = vmatprep.subr.mxu0 0.0
  %4327 = vmatpush2.msra.mxu0 0.0
  %4328 = vmatprep.subr.mxu0 0.0
  %4329 = vmatpush2.msra.mxu0 0.0
  %4330 = vmatprep.subr.mxu0 0.0
  %4331 = vmatpush2.msra.mxu0 0.0
  %4332 = vmatprep.subr.mxu0 0.0
  %4333 = vmatpush2.msra.mxu0 0.0
  %4334 = vmatprep.subr.mxu0 0.0
  %4335 = vmatpush2.msra.mxu0 0.0
  %4336 = vmatprep.mubr.f32.mxu0 0.0
  %4337 = vmatmul.mubr.f32.gmra.mxu0 %v4270
  %v4338 = vpop.f32.mrf.mxu0
  %v4339 = vadd.f32 %v4266, %v4338
  %v4340 = vpop.f32.mrf.mxu0
  %4341 = vdwg.mxu0
  %v4342 = vld [vmem:[%s18] sm:$0xff]
  %v4344 = vsel %vm2933, %v4192, 0
  %4346 = vmatprep.subr.mxu0 0.0
  %4347 = vmatpush1.msra.mxu0 0.0
  %4348 = vmatprep.subr.mxu0 0.0
  %4349 = vmatpush1.msra.mxu0 0.0
  %4350 = vmatprep.subr.mxu0 0.0
  %4351 = vmatpush1.msra.mxu0 0.0
  %4352 = vmatprep.subr.mxu0 0.0
  %4353 = vmatpush1.msra.mxu0 0.0
  %4354 = vmatprep.subr.mxu0 0.0
  %4355 = vmatpush1.msra.mxu0 0.0
  %4356 = vmatprep.subr.mxu0 0.0
  %4357 = vmatpush1.msra.mxu0 0.0
  %4358 = vmatprep.subr.mxu0 0.0
  %4359 = vmatpush1.msra.mxu0 0.0
  %4360 = vmatprep.subr.mxu0 0.0
  %4361 = vmatpush1.msra.mxu0 0.0
  %4362 = vmatprep.subr.mxu0 0.0
  %4363 = vmatpush1.msra.mxu0 0.0
  %4364 = vmatprep.subr.mxu0 0.0
  %4365 = vmatpush1.msra.mxu0 0.0
  %4366 = vmatprep.subr.mxu0 0.0
  %4367 = vmatpush1.msra.mxu0 0.0
  %4368 = vmatprep.subr.mxu0 0.0
  %4369 = vmatpush1.msra.mxu0 0.0
  %4370 = vmatprep.subr.mxu0 0.0
  %4371 = vmatpush1.msra.mxu0 0.0
  %4372 = vmatprep.subr.mxu0 0.0
  %4373 = vmatpush1.msra.mxu0 0.0
  %4374 = vmatprep.subr.mxu0 0.0
  %4375 = vmatpush1.msra.mxu0 0.0
  %4376 = vmatprep.subr.mxu0 0.0
  %4377 = vmatpush1.msra.mxu0 %v4342
  %4378 = vmatprep.subr.mxu0 0.0
  %4379 = vmatpush2.msra.mxu0 0.0
  %4380 = vmatprep.subr.mxu0 0.0
  %4381 = vmatpush2.msra.mxu0 0.0
  %4382 = vmatprep.subr.mxu0 0.0
  %4383 = vmatpush2.msra.mxu0 0.0
  %4384 = vmatprep.subr.mxu0 0.0
  %4385 = vmatpush2.msra.mxu0 0.0
  %4386 = vmatprep.subr.mxu0 0.0
  %4387 = vmatpush2.msra.mxu0 0.0
  %4388 = vmatprep.subr.mxu0 0.0
  %4389 = vmatpush2.msra.mxu0 0.0
  %4390 = vmatprep.subr.mxu0 0.0
  %4391 = vmatpush2.msra.mxu0 0.0
  %4392 = vmatprep.subr.mxu0 0.0
  %4393 = vmatpush2.msra.mxu0 0.0
  %4394 = vmatprep.subr.mxu0 0.0
  %4395 = vmatpush2.msra.mxu0 0.0
  %4396 = vmatprep.subr.mxu0 0.0
  %4397 = vmatpush2.msra.mxu0 0.0
  %4398 = vmatprep.subr.mxu0 0.0
  %4399 = vmatpush2.msra.mxu0 0.0
  %4400 = vmatprep.subr.mxu0 0.0
  %4401 = vmatpush2.msra.mxu0 0.0
  %4402 = vmatprep.subr.mxu0 0.0
  %4403 = vmatpush2.msra.mxu0 0.0
  %4404 = vmatprep.subr.mxu0 0.0
  %4405 = vmatpush2.msra.mxu0 0.0
  %4406 = vmatprep.subr.mxu0 0.0
  %4407 = vmatpush2.msra.mxu0 0.0
  %4408 = vmatprep.subr.mxu0 0.0
  %4409 = vmatpush2.msra.mxu0 0.0
  %4410 = vmatprep.mubr.f32.mxu0 0.0
  %4411 = vmatmul.mubr.f32.gmra.mxu0 %v4344
  %v4412 = vpop.f32.mrf.mxu0
  %v4413 = vadd.f32 0.0, %v4412
  %v4414 = vpop.f32.mrf.mxu0
  %4415 = vdwg.mxu0
  %v4416 = vadd.f32 %v4339, %v4413
  %v4417 = vld [vmem:[%s19] sm:$0xff]
  %v4419 = vsel %vm2933, %v4193, 0
  %4421 = vmatprep.subr.mxu0 0.0
  %4422 = vmatpush1.msra.mxu0 0.0
  %4423 = vmatprep.subr.mxu0 0.0
  %4424 = vmatpush1.msra.mxu0 0.0
  %4425 = vmatprep.subr.mxu0 0.0
  %4426 = vmatpush1.msra.mxu0 0.0
  %4427 = vmatprep.subr.mxu0 0.0
  %4428 = vmatpush1.msra.mxu0 0.0
  %4429 = vmatprep.subr.mxu0 0.0
  %4430 = vmatpush1.msra.mxu0 0.0
  %4431 = vmatprep.subr.mxu0 0.0
  %4432 = vmatpush1.msra.mxu0 0.0
  %4433 = vmatprep.subr.mxu0 0.0
  %4434 = vmatpush1.msra.mxu0 0.0
  %4435 = vmatprep.subr.mxu0 0.0
  %4436 = vmatpush1.msra.mxu0 0.0
  %4437 = vmatprep.subr.mxu0 0.0
  %4438 = vmatpush1.msra.mxu0 0.0
  %4439 = vmatprep.subr.mxu0 0.0
  %4440 = vmatpush1.msra.mxu0 0.0
  %4441 = vmatprep.subr.mxu0 0.0
  %4442 = vmatpush1.msra.mxu0 0.0
  %4443 = vmatprep.subr.mxu0 0.0
  %4444 = vmatpush1.msra.mxu0 0.0
  %4445 = vmatprep.subr.mxu0 0.0
  %4446 = vmatpush1.msra.mxu0 0.0
  %4447 = vmatprep.subr.mxu0 0.0
  %4448 = vmatpush1.msra.mxu0 0.0
  %4449 = vmatprep.subr.mxu0 0.0
  %4450 = vmatpush1.msra.mxu0 0.0
  %4451 = vmatprep.subr.mxu0 0.0
  %4452 = vmatpush1.msra.mxu0 %v4417
  %4453 = vmatprep.subr.mxu0 0.0
  %4454 = vmatpush2.msra.mxu0 0.0
  %4455 = vmatprep.subr.mxu0 0.0
  %4456 = vmatpush2.msra.mxu0 0.0
  %4457 = vmatprep.subr.mxu0 0.0
  %4458 = vmatpush2.msra.mxu0 0.0
  %4459 = vmatprep.subr.mxu0 0.0
  %4460 = vmatpush2.msra.mxu0 0.0
  %4461 = vmatprep.subr.mxu0 0.0
  %4462 = vmatpush2.msra.mxu0 0.0
  %4463 = vmatprep.subr.mxu0 0.0
  %4464 = vmatpush2.msra.mxu0 0.0
  %4465 = vmatprep.subr.mxu0 0.0
  %4466 = vmatpush2.msra.mxu0 0.0
  %4467 = vmatprep.subr.mxu0 0.0
  %4468 = vmatpush2.msra.mxu0 0.0
  %4469 = vmatprep.subr.mxu0 0.0
  %4470 = vmatpush2.msra.mxu0 0.0
  %4471 = vmatprep.subr.mxu0 0.0
  %4472 = vmatpush2.msra.mxu0 0.0
  %4473 = vmatprep.subr.mxu0 0.0
  %4474 = vmatpush2.msra.mxu0 0.0
  %4475 = vmatprep.subr.mxu0 0.0
  %4476 = vmatpush2.msra.mxu0 0.0
  %4477 = vmatprep.subr.mxu0 0.0
  %4478 = vmatpush2.msra.mxu0 0.0
  %4479 = vmatprep.subr.mxu0 0.0
  %4480 = vmatpush2.msra.mxu0 0.0
  %4481 = vmatprep.subr.mxu0 0.0
  %4482 = vmatpush2.msra.mxu0 0.0
  %4483 = vmatprep.subr.mxu0 0.0
  %4484 = vmatpush2.msra.mxu0 0.0
  %4485 = vmatprep.mubr.f32.mxu0 0.0
  %4486 = vmatmul.mubr.f32.gmra.mxu0 %v4419
  %v4487 = vpop.f32.mrf.mxu0
  %v4488 = vadd.f32 0.0, %v4487
  %v4489 = vpop.f32.mrf.mxu0
  %4490 = vdwg.mxu0
  %v4491 = vadd.f32 %v4416, %v4488
  %v4492 = vld [vmem:[%s20] sm:$0x1]
  %v4494 = vlaneseq
  %v4495 = vshrl.u32 %v4494, 7
  %v4496 = vsub.s32 0, %v4495
  %v4497 = vrot.slane %v4492, %v4496
  %v4499 = vadd.f32 %v4491, %v4497
  %v4500 = vmax.f32 %v4499, 0.0
  %v4501 = vld [vmem:[%s21] sm:$0xff]
  %v4502 = vld [vmem:[%s22] sm:$0x1]
  %v4504 = vlaneseq
  %v4505 = vshrl.u32 %v4504, 7
  %v4506 = vsub.s32 0, %v4505
  %v4507 = vrot.slane %v4502, %v4506
  %v4510 = vsel %vm2933, %v4500, 0
  %4512 = vmatprep.subr.mxu0 0.0
  %4513 = vmatpush1.msra.mxu0 0.0
  %4514 = vmatprep.subr.mxu0 0.0
  %4515 = vmatpush1.msra.mxu0 0.0
  %4516 = vmatprep.subr.mxu0 0.0
  %4517 = vmatpush1.msra.mxu0 0.0
  %4518 = vmatprep.subr.mxu0 0.0
  %4519 = vmatpush1.msra.mxu0 0.0
  %4520 = vmatprep.subr.mxu0 0.0
  %4521 = vmatpush1.msra.mxu0 0.0
  %4522 = vmatprep.subr.mxu0 0.0
  %4523 = vmatpush1.msra.mxu0 0.0
  %4524 = vmatprep.subr.mxu0 0.0
  %4525 = vmatpush1.msra.mxu0 0.0
  %4526 = vmatprep.subr.mxu0 0.0
  %4527 = vmatpush1.msra.mxu0 0.0
  %4528 = vmatprep.subr.mxu0 0.0
  %4529 = vmatpush1.msra.mxu0 0.0
  %4530 = vmatprep.subr.mxu0 0.0
  %4531 = vmatpush1.msra.mxu0 0.0
  %4532 = vmatprep.subr.mxu0 0.0
  %4533 = vmatpush1.msra.mxu0 0.0
  %4534 = vmatprep.subr.mxu0 0.0
  %4535 = vmatpush1.msra.mxu0 0.0
  %4536 = vmatprep.subr.mxu0 0.0
  %4537 = vmatpush1.msra.mxu0 0.0
  %4538 = vmatprep.subr.mxu0 0.0
  %4539 = vmatpush1.msra.mxu0 0.0
  %4540 = vmatprep.subr.mxu0 0.0
  %4541 = vmatpush1.msra.mxu0 0.0
  %4542 = vmatprep.subr.mxu0 0.0
  %4543 = vmatpush1.msra.mxu0 %v4501
  %4544 = vmatprep.subr.mxu0 0.0
  %4545 = vmatpush2.msra.mxu0 0.0
  %4546 = vmatprep.subr.mxu0 0.0
  %4547 = vmatpush2.msra.mxu0 0.0
  %4548 = vmatprep.subr.mxu0 0.0
  %4549 = vmatpush2.msra.mxu0 0.0
  %4550 = vmatprep.subr.mxu0 0.0
  %4551 = vmatpush2.msra.mxu0 0.0
  %4552 = vmatprep.subr.mxu0 0.0
  %4553 = vmatpush2.msra.mxu0 0.0
  %4554 = vmatprep.subr.mxu0 0.0
  %4555 = vmatpush2.msra.mxu0 0.0
  %4556 = vmatprep.subr.mxu0 0.0
  %4557 = vmatpush2.msra.mxu0 0.0
  %4558 = vmatprep.subr.mxu0 0.0
  %4559 = vmatpush2.msra.mxu0 0.0
  %4560 = vmatprep.subr.mxu0 0.0
  %4561 = vmatpush2.msra.mxu0 0.0
  %4562 = vmatprep.subr.mxu0 0.0
  %4563 = vmatpush2.msra.mxu0 0.0
  %4564 = vmatprep.subr.mxu0 0.0
  %4565 = vmatpush2.msra.mxu0 0.0
  %4566 = vmatprep.subr.mxu0 0.0
  %4567 = vmatpush2.msra.mxu0 0.0
  %4568 = vmatprep.subr.mxu0 0.0
  %4569 = vmatpush2.msra.mxu0 0.0
  %4570 = vmatprep.subr.mxu0 0.0
  %4571 = vmatpush2.msra.mxu0 0.0
  %4572 = vmatprep.subr.mxu0 0.0
  %4573 = vmatpush2.msra.mxu0 0.0
  %4574 = vmatprep.subr.mxu0 0.0
  %4575 = vmatpush2.msra.mxu0 0.0
  %4576 = vmatprep.mubr.f32.mxu0 0.0
  %4577 = vmatmul.mubr.f32.gmra.mxu0 %v4510
  %v4578 = vpop.f32.mrf.mxu0
  %v4579 = vadd.f32 %v4507, %v4578
  %v4580 = vpop.f32.mrf.mxu0
  %4581 = vdwg.mxu0
  %v4582 = vmax.f32 %v4579, 0.0
  %v4583 = vld [vmem:[%s23] sm:$0xff]
  %v4584 = vld [vmem:[%s23 + $0x8] sm:$0xff]
  %v4585 = vld [vmem:[%s23 + $0x10] sm:$0xff]
  %v4586 = vld [vmem:[%s23 + $0x18] sm:$0xff]
  %v4587 = vld [vmem:[%s24] sm:$0x1]
  %v4589 = vlaneseq
  %v4590 = vshrl.u32 %v4589, 7
  %v4591 = vsub.s32 0, %v4590
  %v4592 = vrot.slane %v4587, %v4591
  %vm4594 = vcmask 261120
  %v4596 = vsel %vm4594, %v4582, 0
  %4598 = vmatprep.subr.mxu0 0.0
  %4599 = vmatpush1.msra.mxu0 0.0
  %4600 = vmatprep.subr.mxu0 0.0
  %4601 = vmatpush1.msra.mxu0 0.0
  %4602 = vmatprep.subr.mxu0 0.0
  %4603 = vmatpush1.msra.mxu0 0.0
  %4604 = vmatprep.subr.mxu0 0.0
  %4605 = vmatpush1.msra.mxu0 0.0
  %4606 = vmatprep.subr.mxu0 0.0
  %4607 = vmatpush1.msra.mxu0 0.0
  %4608 = vmatprep.subr.mxu0 0.0
  %4609 = vmatpush1.msra.mxu0 0.0
  %4610 = vmatprep.subr.mxu0 0.0
  %4611 = vmatpush1.msra.mxu0 0.0
  %4612 = vmatprep.subr.mxu0 0.0
  %4613 = vmatpush1.msra.mxu0 0.0
  %4614 = vmatprep.subr.mxu0 0.0
  %4615 = vmatpush1.msra.mxu0 0.0
  %4616 = vmatprep.subr.mxu0 0.0
  %4617 = vmatpush1.msra.mxu0 0.0
  %4618 = vmatprep.subr.mxu0 0.0
  %4619 = vmatpush1.msra.mxu0 0.0
  %4620 = vmatprep.subr.mxu0 0.0
  %4621 = vmatpush1.msra.mxu0 0.0
  %4622 = vmatprep.subr.mxu0 0.0
  %4623 = vmatpush1.msra.mxu0 %v4586
  %4624 = vmatprep.subr.mxu0 0.0
  %4625 = vmatpush1.msra.mxu0 %v4585
  %4626 = vmatprep.subr.mxu0 0.0
  %4627 = vmatpush1.msra.mxu0 %v4584
  %4628 = vmatprep.subr.mxu0 0.0
  %4629 = vmatpush1.msra.mxu0 %v4583
  %4630 = vmatprep.subr.mxu0 0.0
  %4631 = vmatpush2.msra.mxu0 0.0
  %4632 = vmatprep.subr.mxu0 0.0
  %4633 = vmatpush2.msra.mxu0 0.0
  %4634 = vmatprep.subr.mxu0 0.0
  %4635 = vmatpush2.msra.mxu0 0.0
  %4636 = vmatprep.subr.mxu0 0.0
  %4637 = vmatpush2.msra.mxu0 0.0
  %4638 = vmatprep.subr.mxu0 0.0
  %4639 = vmatpush2.msra.mxu0 0.0
  %4640 = vmatprep.subr.mxu0 0.0
  %4641 = vmatpush2.msra.mxu0 0.0
  %4642 = vmatprep.subr.mxu0 0.0
  %4643 = vmatpush2.msra.mxu0 0.0
  %4644 = vmatprep.subr.mxu0 0.0
  %4645 = vmatpush2.msra.mxu0 0.0
  %4646 = vmatprep.subr.mxu0 0.0
  %4647 = vmatpush2.msra.mxu0 0.0
  %4648 = vmatprep.subr.mxu0 0.0
  %4649 = vmatpush2.msra.mxu0 0.0
  %4650 = vmatprep.subr.mxu0 0.0
  %4651 = vmatpush2.msra.mxu0 0.0
  %4652 = vmatprep.subr.mxu0 0.0
  %4653 = vmatpush2.msra.mxu0 0.0
  %4654 = vmatprep.subr.mxu0 0.0
  %4655 = vmatpush2.msra.mxu0 0.0
  %4656 = vmatprep.subr.mxu0 0.0
  %4657 = vmatpush2.msra.mxu0 0.0
  %4658 = vmatprep.subr.mxu0 0.0
  %4659 = vmatpush2.msra.mxu0 0.0
  %4660 = vmatprep.subr.mxu0 0.0
  %4661 = vmatpush2.msra.mxu0 0.0
  %4662 = vmatprep.mubr.f32.mxu0 0.0
  %4663 = vmatmul.mubr.f32.gmra.mxu0 %v4596
  %v4664 = vpop.f32.mrf.mxu0
  %v4665 = vadd.f32 %v4592, %v4664
  %v4666 = vpop.f32.mrf.mxu0
  %4667 = vdwg.mxu0
  %v4668 = vmax.f32 %v4665, 0.0
  %v4669 = vld [vmem:[%s25] sm:$0xff]
  %v4670 = vld [vmem:[%s25 + $0x8] sm:$0xff]
  %v4671 = vld [vmem:[%s25 + $0x10] sm:$0xff]
  %v4672 = vld [vmem:[%s25 + $0x18] sm:$0xff]
  %v4673 = vld [vmem:[%s26] sm:$0x1]
  %v4675 = vlaneseq
  %v4676 = vshrl.u32 %v4675, 7
  %v4677 = vsub.s32 0, %v4676
  %v4678 = vrot.slane %v4673, %v4677
  %v4681 = vsel %vm4594, %v4668, 0
  %4683 = vmatprep.subr.mxu0 0.0
  %4684 = vmatpush1.msra.mxu0 0.0
  %4685 = vmatprep.subr.mxu0 0.0
  %4686 = vmatpush1.msra.mxu0 0.0
  %4687 = vmatprep.subr.mxu0 0.0
  %4688 = vmatpush1.msra.mxu0 0.0
  %4689 = vmatprep.subr.mxu0 0.0
  %4690 = vmatpush1.msra.mxu0 0.0
  %4691 = vmatprep.subr.mxu0 0.0
  %4692 = vmatpush1.msra.mxu0 0.0
  %4693 = vmatprep.subr.mxu0 0.0
  %4694 = vmatpush1.msra.mxu0 0.0
  %4695 = vmatprep.subr.mxu0 0.0
  %4696 = vmatpush1.msra.mxu0 0.0
  %4697 = vmatprep.subr.mxu0 0.0
  %4698 = vmatpush1.msra.mxu0 0.0
  %4699 = vmatprep.subr.mxu0 0.0
  %4700 = vmatpush1.msra.mxu0 0.0
  %4701 = vmatprep.subr.mxu0 0.0
  %4702 = vmatpush1.msra.mxu0 0.0
  %4703 = vmatprep.subr.mxu0 0.0
  %4704 = vmatpush1.msra.mxu0 0.0
  %4705 = vmatprep.subr.mxu0 0.0
  %4706 = vmatpush1.msra.mxu0 0.0
  %4707 = vmatprep.subr.mxu0 0.0
  %4708 = vmatpush1.msra.mxu0 %v4672
  %4709 = vmatprep.subr.mxu0 0.0
  %4710 = vmatpush1.msra.mxu0 %v4671
  %4711 = vmatprep.subr.mxu0 0.0
  %4712 = vmatpush1.msra.mxu0 %v4670
  %4713 = vmatprep.subr.mxu0 0.0
  %4714 = vmatpush1.msra.mxu0 %v4669
  %4715 = vmatprep.subr.mxu0 0.0
  %4716 = vmatpush2.msra.mxu0 0.0
  %4717 = vmatprep.subr.mxu0 0.0
  %4718 = vmatpush2.msra.mxu0 0.0
  %4719 = vmatprep.subr.mxu0 0.0
  %4720 = vmatpush2.msra.mxu0 0.0
  %4721 = vmatprep.subr.mxu0 0.0
  %4722 = vmatpush2.msra.mxu0 0.0
  %4723 = vmatprep.subr.mxu0 0.0
  %4724 = vmatpush2.msra.mxu0 0.0
  %4725 = vmatprep.subr.mxu0 0.0
  %4726 = vmatpush2.msra.mxu0 0.0
  %4727 = vmatprep.subr.mxu0 0.0
  %4728 = vmatpush2.msra.mxu0 0.0
  %4729 = vmatprep.subr.mxu0 0.0
  %4730 = vmatpush2.msra.mxu0 0.0
  %4731 = vmatprep.subr.mxu0 0.0
  %4732 = vmatpush2.msra.mxu0 0.0
  %4733 = vmatprep.subr.mxu0 0.0
  %4734 = vmatpush2.msra.mxu0 0.0
  %4735 = vmatprep.subr.mxu0 0.0
  %4736 = vmatpush2.msra.mxu0 0.0
  %4737 = vmatprep.subr.mxu0 0.0
  %4738 = vmatpush2.msra.mxu0 0.0
  %4739 = vmatprep.subr.mxu0 0.0
  %4740 = vmatpush2.msra.mxu0 0.0
  %4741 = vmatprep.subr.mxu0 0.0
  %4742 = vmatpush2.msra.mxu0 0.0
  %4743 = vmatprep.subr.mxu0 0.0
  %4744 = vmatpush2.msra.mxu0 0.0
  %4745 = vmatprep.subr.mxu0 0.0
  %4746 = vmatpush2.msra.mxu0 0.0
  %4747 = vmatprep.mubr.f32.mxu0 0.0
  %4748 = vmatmul.mubr.f32.gmra.mxu0 %v4681
  %v4749 = vpop.f32.mrf.mxu0
  %v4750 = vadd.f32 %v4678, %v4749
  %v4751 = vpop.f32.mrf.mxu0
  %4752 = vdwg.mxu0
  %vm4753 = vcmask 130048
  %4754 = vst.msk [vmem:[%s27] sm:$0xff] %vm4753, %v4750
  // Predicated region
  $region110: #{convnet_forward.1} parent=0 // pred_check
    _
  $region111: #{convnet_forward.1} parent=0 // pred_check_branch
    %4756 = sbr.rel (0) target = $region113
  $region112: #{convnet_forward.1} parent=0 // pred_region
    _
  $region113: #{convnet_forward.1} parent=0 // pred_fallthru
    _
  // Predicated region
  $region114: #{convnet_forward.1} parent=0 // pred_check
    _
  $region115: #{convnet_forward.1} parent=0 // pred_check_branch
    %4758 = sbr.rel (0) target = $region117
  $region116: #{convnet_forward.1} parent=0 // pred_region
    _
  $region117: #{convnet_forward.1} parent=0 // pred_fallthru
    _

</llo_original>
